<compile_context>
chip_gen: v7x
topology: tpu7x:2x2x1
jax: 0.10.0
libtpu: 0.0.40
codegen_flags: <defaults>
</compile_context>

<pallas_src>
import functools

import jax
import jax.numpy as jnp
from jax.experimental import pallas as pl
from jax.experimental.pallas import tpu as pltpu


# ---------------------------------------------------------------------------
# Conv1: 3x3 / stride-2 / pad-1, NHWC, bf16 MXU, fused BN-stats epilogue.
# ---------------------------------------------------------------------------
def _conv1_kernel(x_ref, w_ref, y_ref, s_ref, q_ref, *, ho, wo, cin, cout):
    # x_ref: [1, Ho+1, 2, Wo+1, 2*Cin] bf16 (parity-folded padded input)
    # w_ref: [9, Cin, Cout] bf16 (per-tap weight matrices)
    acc = jnp.zeros((ho * wo, cout), jnp.float32)
    for kh in range(3):
        qh, ph = kh // 2, kh % 2          # padded row = 2*out_row + kh
        for kw in range(3):
            qw, pw = kw // 2, kw % 2      # padded col = 2*out_col + kw
            a = x_ref[0, qh:qh + ho, ph, qw:qw + wo, pw * cin:(pw + 1) * cin]
            a = a.reshape(ho * wo, cin)                       # [M, Cin] bf16
            acc += jnp.dot(a, w_ref[kh * 3 + kw],
                           preferred_element_type=jnp.float32)
    y_ref[0] = acc.astype(y_ref.dtype)                        # bf16 writeback
    # BatchNorm statistics epilogue (exact, from the f32 accumulator).
    s_ref[0] = jnp.sum(acc, axis=0, keepdims=True)
    q_ref[0] = jnp.sum(acc * acc, axis=0, keepdims=True)


def conv1_s2_with_stats(x_nhwc, w_taps):
    N, H, W, Cin = x_nhwc.shape
    assert H % 2 == 0 and W % 2 == 0 and Cin % 128 == 0
    Ho, Wo = H // 2, W // 2
    Cout = w_taps.shape[-1]
    # pad-by-1 + bf16 cast (small halo copy), then a FREE bitcast reshape that
    # exposes the stride-2 parity structure.
    xp = jnp.pad(x_nhwc, ((0, 0), (1, 1), (1, 1), (0, 0))).astype(jnp.bfloat16)
    xr = xp.reshape(N, Ho + 1, 2, Wo + 1, 2 * Cin)

    kern = functools.partial(_conv1_kernel, ho=Ho, wo=Wo, cin=Cin, cout=Cout)
    y, ssum, ssq = pl.pallas_call(
        kern,
        out_shape=(
            jax.ShapeDtypeStruct((N, Ho * Wo, Cout), jnp.bfloat16),
            jax.ShapeDtypeStruct((N, 1, Cout), jnp.float32),
            jax.ShapeDtypeStruct((N, 1, Cout), jnp.float32),
        ),
        grid=(N,),
        in_specs=[
            pl.BlockSpec((1, Ho + 1, 2, Wo + 1, 2 * Cin),
                         lambda n: (n, 0, 0, 0, 0)),
            pl.BlockSpec((9, Cin, Cout), lambda n: (0, 0, 0)),
        ],
        out_specs=(
            pl.BlockSpec((1, Ho * Wo, Cout), lambda n: (n, 0, 0)),
            pl.BlockSpec((1, 1, Cout), lambda n: (n, 0, 0)),
            pl.BlockSpec((1, 1, Cout), lambda n: (n, 0, 0)),
        ),
        compiler_params=pltpu.CompilerParams(
            dimension_semantics=("parallel",)),
    )(xr, w_taps)
    return y, ssum, ssq, (N, Ho, Wo, Cout)


# ---------------------------------------------------------------------------
# Conv2: 3x3 / stride-1 / pad-1 with the BatchNorm affine + ReLU fused into
# the prologue. Padding is implicit via a zeroed VMEM scratch.
# ---------------------------------------------------------------------------
def _conv2_kernel(x_ref, sc_ref, sh_ref, w_ref, o_ref, a_ref,
                  *, hi, wi, c, cout):
    # x_ref : [1, Hi, Wi, C] bf16 (conv1 output, pre-BN)
    # sc/sh : [1, 1, C] f32   (folded BN scale / shift)
    # w_ref : [9, C, Cout] bf16
    # a_ref : [Hi+2, Wi+2, C] bf16 scratch (zero border == conv zero-padding)
    a_ref[...] = jnp.zeros_like(a_ref)
    x = x_ref[0].astype(jnp.float32)
    h = jnp.maximum(x * sc_ref[...] + sh_ref[...], 0.0)       # BN + ReLU (VPU)
    a_ref[1:1 + hi, 1:1 + wi, :] = h.astype(jnp.bfloat16)

    acc = jnp.zeros((hi * wi, cout), jnp.float32)
    for kh in range(3):
        for kw in range(3):
            a = a_ref[kh:kh + hi, kw:kw + wi, :].reshape(hi * wi, c)
            acc += jnp.dot(a, w_ref[kh * 3 + kw],
                           preferred_element_type=jnp.float32)
    o_ref[0] = acc.astype(o_ref.dtype)


def conv2_s1_bn_relu(y1, scale, shift, w_taps, dims):
    N, Hi, Wi, C = dims
    Cout = w_taps.shape[-1]
    y1r = y1.reshape(N, Hi, Wi, C)        # free reshape, stays channels-last

    kern = functools.partial(_conv2_kernel, hi=Hi, wi=Wi, c=C, cout=Cout)
    out = pl.pallas_call(
        kern,
        out_shape=jax.ShapeDtypeStruct((N, Hi * Wi, Cout), jnp.float32),
        grid=(N,),
        in_specs=[
            pl.BlockSpec((1, Hi, Wi, C), lambda n: (n, 0, 0, 0)),
            pl.BlockSpec((1, 1, C), lambda n: (0, 0, 0)),
            pl.BlockSpec((1, 1, C), lambda n: (0, 0, 0)),
            pl.BlockSpec((9, C, Cout), lambda n: (0, 0, 0)),
        ],
        out_specs=pl.BlockSpec((1, Hi * Wi, Cout), lambda n: (n, 0, 0)),
        scratch_shapes=[pltpu.VMEM((Hi + 2, Wi + 2, C), jnp.bfloat16)],
        compiler_params=pltpu.CompilerParams(
            dimension_semantics=("parallel",)),
    )(y1r, scale, shift, w_taps)
    return out


# ---------------------------------------------------------------------------
# Parameter repacking (done once, outside forward): OIHW -> per-tap [9,Cin,Cout]
# bf16 matrices, tap index = kh*3 + kw.
# ---------------------------------------------------------------------------
def prepare_params(params):
    def taps(w):
        cout, cin = w.shape[0], w.shape[1]
        return jnp.transpose(w, (2, 3, 1, 0)).reshape(9, cin, cout).astype(
            jnp.bfloat16)
    return {
        "w1_taps": taps(params["w1"]),
        "w2_taps": taps(params["w2"]),
        "gamma": params["gamma"].astype(jnp.float32),
        "beta": params["beta"].astype(jnp.float32),
    }


# ---------------------------------------------------------------------------
# Full module forward (NCHW public interface, NHWC internally).
# ---------------------------------------------------------------------------
def forward(x_nchw, prep, eps=1e-5):
    x_nhwc = jnp.transpose(x_nchw, (0, 2, 3, 1))          # single entry transpose

    # conv2d16 + fused per-channel sum / sum-of-squares epilogue
    y1, ssum, ssq, (N, H1, W1, C1) = conv1_s2_with_stats(x_nhwc,
                                                         prep["w1_taps"])
    # Finalize training-mode batch statistics (tiny: 2*[N,1,C] reduction).
    cnt = jnp.float32(N * H1 * W1)
    mean = jnp.sum(ssum, axis=0).reshape(C1) / cnt
    msq = jnp.sum(ssq, axis=0).reshape(C1) / cnt
    var = msq - mean * mean                               # biased, as PyTorch
    inv = jax.lax.rsqrt(var + eps)
    scale = (prep["gamma"] * inv).reshape(1, 1, C1)
    shift = (prep["beta"] - mean * prep["gamma"] * inv).reshape(1, 1, C1)
    # TODO(synk): BatchNorm running_mean/running_var (momentum) buffer updates
    # are a training side effect and are not part of the returned tensor.

    # conv2d17 with BN + ReLU fused into its prologue
    y2 = conv2_s1_bn_relu(y1, scale, shift, prep["w2_taps"], (N, H1, W1, C1))

    Cout = prep["w2_taps"].shape[-1]
    return jnp.transpose(y2.reshape(N, H1, W1, Cout), (0, 3, 1, 2))  # exit transpose


# ---------------------------------------------------------------------------
# Pure-JAX f32 reference for verification
# ---------------------------------------------------------------------------
def ref_forward(x, params):
    dn = jax.lax.conv_dimension_numbers(x.shape, params["w1"].shape,
                                        ("NCHW", "OIHW", "NCHW"))
    y1 = jax.lax.conv_general_dilated(x, params["w1"], (2, 2),
                                      ((1, 1), (1, 1)), dimension_numbers=dn)
    mean = jnp.mean(y1, axis=(0, 2, 3), keepdims=True)
    var = jnp.var(y1, axis=(0, 2, 3), keepdims=True)
    y2 = (y1 - mean) / jnp.sqrt(var + 1e-5)
    y2 = y2 * params["gamma"].reshape(1, -1, 1, 1) + \
        params["beta"].reshape(1, -1, 1, 1)
    y2 = jnp.maximum(y2, 0.0)
    dn2 = jax.lax.conv_dimension_numbers(y2.shape, params["w2"].shape,
                                         ("NCHW", "OIHW", "NCHW"))
    return jax.lax.conv_general_dilated(y2, params["w2"], (1, 1),
                                        ((1, 1), (1, 1)), dimension_numbers=dn2)


if __name__ == "__main__":
    key = jax.random.PRNGKey(0)
    kx, k1, k2, kg, kb = jax.random.split(key, 5)

    # Small shapes consistent with the module (channels fixed by the weights).
    N, Cin, H, W = 2, 128, 16, 16
    Cmid = 256

    x = jax.random.normal(kx, (N, Cin, H, W), jnp.float32)
    params = {
        "w1": jax.random.normal(k1, (Cmid, Cin, 3, 3), jnp.float32)
              * jnp.sqrt(2.0 / (Cin * 9)),
        "w2": jax.random.normal(k2, (Cmid, Cmid, 3, 3), jnp.float32)
              * jnp.sqrt(2.0 / (Cmid * 9)),
        "gamma": 1.0 + 0.1 * jax.random.normal(kg, (Cmid,), jnp.float32),
        "beta": 0.1 * jax.random.normal(kb, (Cmid,), jnp.float32),
    }

    prep = prepare_params(params)          # weight repacking hoisted out of forward
    fwd = jax.jit(forward)

    out = jax.block_until_ready(fwd(x, prep))
    ref = jax.block_until_ready(ref_forward(x, params))

    assert out.shape == (N, Cmid, H // 2, W // 2), out.shape
    max_err = float(jnp.max(jnp.abs(out - ref)))
    # bf16 MXU inputs (f32 accumulation): tolerance set accordingly.
    assert jnp.allclose(out, ref, rtol=2e-2, atol=2e-2), max_err

    print("KERNEL_OK")
</pallas_src>

<mosaic_0001>
module attributes {stable_mosaic.version = 11 : i64} {
  func.func @_conv1_kernel(%arg0: i32, %arg1: memref<1x9x2x9x256xbf16, #tpu.memory_space<vmem>>, %arg2: memref<9x128x256xbf16, #tpu.memory_space<vmem>>, %arg3: memref<1x64x256xbf16, #tpu.memory_space<vmem>>, %arg4: memref<1x1x256xf32, #tpu.memory_space<vmem>>, %arg5: memref<1x1x256xf32, #tpu.memory_space<vmem>>) attributes {dimension_semantics = [#tpu.dimension_semantics<parallel>], iteration_bounds = array<i64: 2>, scalar_prefetch = 0 : i64, scratch_operands = 0 : i64, tpu.core_type = #tpu.core_type<tc>, window_params = [{transform_indices = @transform_0, window_bounds = array<i64: 1, 9, 2, 9, 256>}, {pipeline_mode = #tpu.pipeline_mode<synchronous>, transform_indices = @transform_1, window_bounds = array<i64: 9, 128, 256>}, {transform_indices = @transform_2, window_bounds = array<i64: 1, 64, 256>}, {transform_indices = @transform_3, window_bounds = array<i64: 1, 1, 256>}, {transform_indices = @transform_4, window_bounds = array<i64: 1, 1, 256>}]} {
    %cst = arith.constant 0.000000e+00 : f32
    %0 = vector.broadcast %cst : f32 to vector<64x256xf32>
    %c0 = arith.constant 0 : index
    %c0_0 = arith.constant 0 : index
    %c0_1 = arith.constant 0 : index
    %c0_2 = arith.constant 0 : index
    %c0_3 = arith.constant 0 : index
    %1 = vector.load %arg1[%c0, %c0_0, %c0_1, %c0_2, %c0_3] : memref<1x9x2x9x256xbf16, #tpu.memory_space<vmem>>, vector<1x8x1x8x128xbf16>
    %2 = vector.shape_cast %1 : vector<1x8x1x8x128xbf16> to vector<8x8x128xbf16>
    %3 = vector.shape_cast %2 : vector<8x8x128xbf16> to vector<64x128xbf16>
    %c0_4 = arith.constant 0 : index
    %c0_5 = arith.constant 0 : index
    %c0_6 = arith.constant 0 : index
    %4 = vector.load %arg2[%c0_4, %c0_5, %c0_6] : memref<9x128x256xbf16, #tpu.memory_space<vmem>>, vector<1x128x256xbf16>
    %5 = vector.shape_cast %4 : vector<1x128x256xbf16> to vector<128x256xbf16>
    %cst_7 = arith.constant dense<0.000000e+00> : vector<64x256xf32>
    %6 = tpu.matmul %3, %5, %cst_7 {dimension_numbers = #tpu.dot_dimension_numbers<[1], [0], [0], [1], [0, 0, 1, 1], [], []>} : vector<64x128xbf16>, vector<128x256xbf16>, vector<64x256xf32> -> vector<64x256xf32>
    %7 = arith.addf %0, %6 : vector<64x256xf32>
    %c0_8 = arith.constant 0 : index
    %c0_9 = arith.constant 0 : index
    %c0_10 = arith.constant 0 : index
    %c0_11 = arith.constant 0 : index
    %c128 = arith.constant 128 : index
    %8 = vector.load %arg1[%c0_8, %c0_9, %c0_10, %c0_11, %c128] : memref<1x9x2x9x256xbf16, #tpu.memory_space<vmem>>, vector<1x8x1x8x128xbf16>
    %9 = vector.shape_cast %8 : vector<1x8x1x8x128xbf16> to vector<8x8x128xbf16>
    %10 = vector.shape_cast %9 : vector<8x8x128xbf16> to vector<64x128xbf16>
    %c1 = arith.constant 1 : index
    %c0_12 = arith.constant 0 : index
    %c0_13 = arith.constant 0 : index
    %11 = vector.load %arg2[%c1, %c0_12, %c0_13] : memref<9x128x256xbf16, #tpu.memory_space<vmem>>, vector<1x128x256xbf16>
    %12 = vector.shape_cast %11 : vector<1x128x256xbf16> to vector<128x256xbf16>
    %cst_14 = arith.constant dense<0.000000e+00> : vector<64x256xf32>
    %13 = tpu.matmul %10, %12, %cst_14 {dimension_numbers = #tpu.dot_dimension_numbers<[1], [0], [0], [1], [0, 0, 1, 1], [], []>} : vector<64x128xbf16>, vector<128x256xbf16>, vector<64x256xf32> -> vector<64x256xf32>
    %14 = arith.addf %7, %13 : vector<64x256xf32>
    %c0_15 = arith.constant 0 : index
    %c0_16 = arith.constant 0 : index
    %c0_17 = arith.constant 0 : index
    %c1_18 = arith.constant 1 : index
    %c0_19 = arith.constant 0 : index
    %15 = vector.load %arg1[%c0_15, %c0_16, %c0_17, %c1_18, %c0_19] : memref<1x9x2x9x256xbf16, #tpu.memory_space<vmem>>, vector<1x8x1x8x128xbf16>
    %16 = vector.shape_cast %15 : vector<1x8x1x8x128xbf16> to vector<8x8x128xbf16>
    %17 = vector.shape_cast %16 : vector<8x8x128xbf16> to vector<64x128xbf16>
    %c2 = arith.constant 2 : index
    %c0_20 = arith.constant 0 : index
    %c0_21 = arith.constant 0 : index
    %18 = vector.load %arg2[%c2, %c0_20, %c0_21] : memref<9x128x256xbf16, #tpu.memory_space<vmem>>, vector<1x128x256xbf16>
    %19 = vector.shape_cast %18 : vector<1x128x256xbf16> to vector<128x256xbf16>
    %cst_22 = arith.constant dense<0.000000e+00> : vector<64x256xf32>
    %20 = tpu.matmul %17, %19, %cst_22 {dimension_numbers = #tpu.dot_dimension_numbers<[1], [0], [0], [1], [0, 0, 1, 1], [], []>} : vector<64x128xbf16>, vector<128x256xbf16>, vector<64x256xf32> -> vector<64x256xf32>
    %21 = arith.addf %14, %20 : vector<64x256xf32>
    %c0_23 = arith.constant 0 : index
    %c0_24 = arith.constant 0 : index
    %c1_25 = arith.constant 1 : index
    %c0_26 = arith.constant 0 : index
    %c0_27 = arith.constant 0 : index
    %22 = vector.load %arg1[%c0_23, %c0_24, %c1_25, %c0_26, %c0_27] : memref<1x9x2x9x256xbf16, #tpu.memory_space<vmem>>, vector<1x8x1x8x128xbf16>
    %23 = vector.shape_cast %22 : vector<1x8x1x8x128xbf16> to vector<8x8x128xbf16>
    %24 = vector.shape_cast %23 : vector<8x8x128xbf16> to vector<64x128xbf16>
    %c3 = arith.constant 3 : index
    %c0_28 = arith.constant 0 : index
    %c0_29 = arith.constant 0 : index
    %25 = vector.load %arg2[%c3, %c0_28, %c0_29] : memref<9x128x256xbf16, #tpu.memory_space<vmem>>, vector<1x128x256xbf16>
    %26 = vector.shape_cast %25 : vector<1x128x256xbf16> to vector<128x256xbf16>
    %cst_30 = arith.constant dense<0.000000e+00> : vector<64x256xf32>
    %27 = tpu.matmul %24, %26, %cst_30 {dimension_numbers = #tpu.dot_dimension_numbers<[1], [0], [0], [1], [0, 0, 1, 1], [], []>} : vector<64x128xbf16>, vector<128x256xbf16>, vector<64x256xf32> -> vector<64x256xf32>
    %28 = arith.addf %21, %27 : vector<64x256xf32>
    %c0_31 = arith.constant 0 : index
    %c0_32 = arith.constant 0 : index
    %c1_33 = arith.constant 1 : index
    %c0_34 = arith.constant 0 : index
    %c128_35 = arith.constant 128 : index
    %29 = vector.load %arg1[%c0_31, %c0_32, %c1_33, %c0_34, %c128_35] : memref<1x9x2x9x256xbf16, #tpu.memory_space<vmem>>, vector<1x8x1x8x128xbf16>
    %30 = vector.shape_cast %29 : vector<1x8x1x8x128xbf16> to vector<8x8x128xbf16>
    %31 = vector.shape_cast %30 : vector<8x8x128xbf16> to vector<64x128xbf16>
    %c4 = arith.constant 4 : index
    %c0_36 = arith.constant 0 : index
    %c0_37 = arith.constant 0 : index
    %32 = vector.load %arg2[%c4, %c0_36, %c0_37] : memref<9x128x256xbf16, #tpu.memory_space<vmem>>, vector<1x128x256xbf16>
    %33 = vector.shape_cast %32 : vector<1x128x256xbf16> to vector<128x256xbf16>
    %cst_38 = arith.constant dense<0.000000e+00> : vector<64x256xf32>
    %34 = tpu.matmul %31, %33, %cst_38 {dimension_numbers = #tpu.dot_dimension_numbers<[1], [0], [0], [1], [0, 0, 1, 1], [], []>} : vector<64x128xbf16>, vector<128x256xbf16>, vector<64x256xf32> -> vector<64x256xf32>
    %35 = arith.addf %28, %34 : vector<64x256xf32>
    %c0_39 = arith.constant 0 : index
    %c0_40 = arith.constant 0 : index
    %c1_41 = arith.constant 1 : index
    %c1_42 = arith.constant 1 : index
    %c0_43 = arith.constant 0 : index
    %36 = vector.load %arg1[%c0_39, %c0_40, %c1_41, %c1_42, %c0_43] : memref<1x9x2x9x256xbf16, #tpu.memory_space<vmem>>, vector<1x8x1x8x128xbf16>
    %37 = vector.shape_cast %36 : vector<1x8x1x8x128xbf16> to vector<8x8x128xbf16>
    %38 = vector.shape_cast %37 : vector<8x8x128xbf16> to vector<64x128xbf16>
    %c5 = arith.constant 5 : index
    %c0_44 = arith.constant 0 : index
    %c0_45 = arith.constant 0 : index
    %39 = vector.load %arg2[%c5, %c0_44, %c0_45] : memref<9x128x256xbf16, #tpu.memory_space<vmem>>, vector<1x128x256xbf16>
    %40 = vector.shape_cast %39 : vector<1x128x256xbf16> to vector<128x256xbf16>
    %cst_46 = arith.constant dense<0.000000e+00> : vector<64x256xf32>
    %41 = tpu.matmul %38, %40, %cst_46 {dimension_numbers = #tpu.dot_dimension_numbers<[1], [0], [0], [1], [0, 0, 1, 1], [], []>} : vector<64x128xbf16>, vector<128x256xbf16>, vector<64x256xf32> -> vector<64x256xf32>
    %42 = arith.addf %35, %41 : vector<64x256xf32>
    %c0_47 = arith.constant 0 : index
    %c1_48 = arith.constant 1 : index
    %c0_49 = arith.constant 0 : index
    %c0_50 = arith.constant 0 : index
    %c0_51 = arith.constant 0 : index
    %43 = vector.load %arg1[%c0_47, %c1_48, %c0_49, %c0_50, %c0_51] : memref<1x9x2x9x256xbf16, #tpu.memory_space<vmem>>, vector<1x8x1x8x128xbf16>
    %44 = vector.shape_cast %43 : vector<1x8x1x8x128xbf16> to vector<8x8x128xbf16>
    %45 = vector.shape_cast %44 : vector<8x8x128xbf16> to vector<64x128xbf16>
    %c6 = arith.constant 6 : index
    %c0_52 = arith.constant 0 : index
    %c0_53 = arith.constant 0 : index
    %46 = vector.load %arg2[%c6, %c0_52, %c0_53] : memref<9x128x256xbf16, #tpu.memory_space<vmem>>, vector<1x128x256xbf16>
    %47 = vector.shape_cast %46 : vector<1x128x256xbf16> to vector<128x256xbf16>
    %cst_54 = arith.constant dense<0.000000e+00> : vector<64x256xf32>
    %48 = tpu.matmul %45, %47, %cst_54 {dimension_numbers = #tpu.dot_dimension_numbers<[1], [0], [0], [1], [0, 0, 1, 1], [], []>} : vector<64x128xbf16>, vector<128x256xbf16>, vector<64x256xf32> -> vector<64x256xf32>
    %49 = arith.addf %42, %48 : vector<64x256xf32>
    %c0_55 = arith.constant 0 : index
    %c1_56 = arith.constant 1 : index
    %c0_57 = arith.constant 0 : index
    %c0_58 = arith.constant 0 : index
    %c128_59 = arith.constant 128 : index
    %50 = vector.load %arg1[%c0_55, %c1_56, %c0_57, %c0_58, %c128_59] : memref<1x9x2x9x256xbf16, #tpu.memory_space<vmem>>, vector<1x8x1x8x128xbf16>
    %51 = vector.shape_cast %50 : vector<1x8x1x8x128xbf16> to vector<8x8x128xbf16>
    %52 = vector.shape_cast %51 : vector<8x8x128xbf16> to vector<64x128xbf16>
    %c7 = arith.constant 7 : index
    %c0_60 = arith.constant 0 : index
    %c0_61 = arith.constant 0 : index
    %53 = vector.load %arg2[%c7, %c0_60, %c0_61] : memref<9x128x256xbf16, #tpu.memory_space<vmem>>, vector<1x128x256xbf16>
    %54 = vector.shape_cast %53 : vector<1x128x256xbf16> to vector<128x256xbf16>
    %cst_62 = arith.constant dense<0.000000e+00> : vector<64x256xf32>
    %55 = tpu.matmul %52, %54, %cst_62 {dimension_numbers = #tpu.dot_dimension_numbers<[1], [0], [0], [1], [0, 0, 1, 1], [], []>} : vector<64x128xbf16>, vector<128x256xbf16>, vector<64x256xf32> -> vector<64x256xf32>
    %56 = arith.addf %49, %55 : vector<64x256xf32>
    %c0_63 = arith.constant 0 : index
    %c1_64 = arith.constant 1 : index
    %c0_65 = arith.constant 0 : index
    %c1_66 = arith.constant 1 : index
    %c0_67 = arith.constant 0 : index
    %57 = vector.load %arg1[%c0_63, %c1_64, %c0_65, %c1_66, %c0_67] : memref<1x9x2x9x256xbf16, #tpu.memory_space<vmem>>, vector<1x8x1x8x128xbf16>
    %58 = vector.shape_cast %57 : vector<1x8x1x8x128xbf16> to vector<8x8x128xbf16>
    %59 = vector.shape_cast %58 : vector<8x8x128xbf16> to vector<64x128xbf16>
    %c8 = arith.constant 8 : index
    %c0_68 = arith.constant 0 : index
    %c0_69 = arith.constant 0 : index
    %60 = vector.load %arg2[%c8, %c0_68, %c0_69] : memref<9x128x256xbf16, #tpu.memory_space<vmem>>, vector<1x128x256xbf16>
    %61 = vector.shape_cast %60 : vector<1x128x256xbf16> to vector<128x256xbf16>
    %cst_70 = arith.constant dense<0.000000e+00> : vector<64x256xf32>
    %62 = tpu.matmul %59, %61, %cst_70 {dimension_numbers = #tpu.dot_dimension_numbers<[1], [0], [0], [1], [0, 0, 1, 1], [], []>} : vector<64x128xbf16>, vector<128x256xbf16>, vector<64x256xf32> -> vector<64x256xf32>
    %63 = arith.addf %56, %62 : vector<64x256xf32>
    %64 = arith.truncf %63 : vector<64x256xf32> to vector<64x256xbf16>
    %c0_71 = arith.constant 0 : index
    %c0_72 = arith.constant 0 : index
    %c0_73 = arith.constant 0 : index
    %65 = vector.load %arg3[%c0_71, %c0_72, %c0_73] : memref<1x64x256xbf16, #tpu.memory_space<vmem>>, vector<1x64x256xbf16>
    %66 = vector.shape_cast %65 : vector<1x64x256xbf16> to vector<64x256xbf16>
    %67 = vector.shape_cast %64 : vector<64x256xbf16> to vector<1x64x256xbf16>
    tpu.vector_store %arg3[%c0_71, %c0_72, %c0_73], %67 {strides = array<i32>} : memref<1x64x256xbf16, #tpu.memory_space<vmem>>, vector<1x64x256xbf16>,
    %cst_74 = arith.constant dense<0.000000e+00> : vector<256xf32>
    %68 = vector.multi_reduction <add>, %63, %cst_74 [0] : vector<64x256xf32> to vector<256xf32>
    %69 = vector.shape_cast %68 : vector<256xf32> to vector<1x256xf32>
    %c0_75 = arith.constant 0 : index
    %c0_76 = arith.constant 0 : index
    %c0_77 = arith.constant 0 : index
    %70 = vector.load %arg4[%c0_75, %c0_76, %c0_77] : memref<1x1x256xf32, #tpu.memory_space<vmem>>, vector<1x1x256xf32>
    %71 = vector.shape_cast %70 : vector<1x1x256xf32> to vector<1x256xf32>
    %72 = vector.shape_cast %69 : vector<1x256xf32> to vector<1x1x256xf32>
    tpu.vector_store %arg4[%c0_75, %c0_76, %c0_77], %72 {strides = array<i32>} : memref<1x1x256xf32, #tpu.memory_space<vmem>>, vector<1x1x256xf32>,
    %73 = arith.mulf %63, %63 : vector<64x256xf32>
    %cst_78 = arith.constant dense<0.000000e+00> : vector<256xf32>
    %74 = vector.multi_reduction <add>, %73, %cst_78 [0] : vector<64x256xf32> to vector<256xf32>
    %75 = vector.shape_cast %74 : vector<256xf32> to vector<1x256xf32>
    %c0_79 = arith.constant 0 : index
    %c0_80 = arith.constant 0 : index
    %c0_81 = arith.constant 0 : index
    %76 = vector.load %arg5[%c0_79, %c0_80, %c0_81] : memref<1x1x256xf32, #tpu.memory_space<vmem>>, vector<1x1x256xf32>
    %77 = vector.shape_cast %76 : vector<1x1x256xf32> to vector<1x256xf32>
    %78 = vector.shape_cast %75 : vector<1x256xf32> to vector<1x1x256xf32>
    tpu.vector_store %arg5[%c0_79, %c0_80, %c0_81], %78 {strides = array<i32>} : memref<1x1x256xf32, #tpu.memory_space<vmem>>, vector<1x1x256xf32>,
    return
  }
  func.func @transform_0(%arg0: i32) -> (i32, i32, i32, i32, i32) {
    %c0_i32 = arith.constant 0 : i32
    %c0_i32_0 = arith.constant 0 : i32
    %c0_i32_1 = arith.constant 0 : i32
    %c0_i32_2 = arith.constant 0 : i32
    %c0_i32_3 = arith.constant 0 : i32
    return %arg0, %c0_i32, %c0_i32_0, %c0_i32_1, %c0_i32_2 : i32, i32, i32, i32, i32
  }
  func.func @transform_1(%arg0: i32) -> (i32, i32, i32) {
    %c0_i32 = arith.constant 0 : i32
    %c0_i32_0 = arith.constant 0 : i32
    %c0_i32_1 = arith.constant 0 : i32
    %c0_i32_2 = arith.constant 0 : i32
    return %c0_i32, %c0_i32_0, %c0_i32_1 : i32, i32, i32
  }
  func.func @transform_2(%arg0: i32) -> (i32, i32, i32) {
    %c0_i32 = arith.constant 0 : i32
    %c0_i32_0 = arith.constant 0 : i32
    %c0_i32_1 = arith.constant 0 : i32
    return %arg0, %c0_i32, %c0_i32_0 : i32, i32, i32
  }
  func.func @transform_3(%arg0: i32) -> (i32, i32, i32) {
    %c0_i32 = arith.constant 0 : i32
    %c0_i32_0 = arith.constant 0 : i32
    %c0_i32_1 = arith.constant 0 : i32
    return %arg0, %c0_i32, %c0_i32_0 : i32, i32, i32
  }
  func.func @transform_4(%arg0: i32) -> (i32, i32, i32) {
    %c0_i32 = arith.constant 0 : i32
    %c0_i32_0 = arith.constant 0 : i32
    %c0_i32_1 = arith.constant 0 : i32
    return %arg0, %c0_i32, %c0_i32_0 : i32, i32, i32
  }
}

module attributes {stable_mosaic.version = 11 : i64} {
  func.func @_conv2_kernel(%arg0: i32, %arg1: memref<1x8x8x256xbf16, #tpu.memory_space<vmem>>, %arg2: memref<1x1x256xf32, #tpu.memory_space<vmem>>, %arg3: memref<1x1x256xf32, #tpu.memory_space<vmem>>, %arg4: memref<9x256x256xbf16, #tpu.memory_space<vmem>>, %arg5: memref<1x64x256xf32, #tpu.memory_space<vmem>>, %arg6: memref<10x10x256xbf16, #tpu.memory_space<vmem>>) attributes {dimension_semantics = [#tpu.dimension_semantics<parallel>], iteration_bounds = array<i64: 2>, scalar_prefetch = 0 : i64, scratch_operands = 1 : i64, tpu.core_type = #tpu.core_type<tc>, window_params = [{transform_indices = @transform_0, window_bounds = array<i64: 1, 8, 8, 256>}, {pipeline_mode = #tpu.pipeline_mode<synchronous>, transform_indices = @transform_1, window_bounds = array<i64: 1, 1, 256>}, {pipeline_mode = #tpu.pipeline_mode<synchronous>, transform_indices = @transform_2, window_bounds = array<i64: 1, 1, 256>}, {pipeline_mode = #tpu.pipeline_mode<synchronous>, transform_indices = @transform_3, window_bounds = array<i64: 9, 256, 256>}, {transform_indices = @transform_4, window_bounds = array<i64: 1, 64, 256>}]} {
    %cst = arith.constant 0.000000e+00 : bf16
    %0 = vector.broadcast %cst : bf16 to vector<10x10x256xbf16>
    %c0 = arith.constant 0 : index
    %c0_0 = arith.constant 0 : index
    %c0_1 = arith.constant 0 : index
    %1 = vector.load %arg6[%c0, %c0_0, %c0_1] : memref<10x10x256xbf16, #tpu.memory_space<vmem>>, vector<10x10x256xbf16>
    tpu.vector_store %arg6[%c0, %c0_0, %c0_1], %0 {strides = array<i32>} : memref<10x10x256xbf16, #tpu.memory_space<vmem>>, vector<10x10x256xbf16>,
    %c0_2 = arith.constant 0 : index
    %c0_3 = arith.constant 0 : index
    %c0_4 = arith.constant 0 : index
    %c0_5 = arith.constant 0 : index
    %2 = vector.load %arg1[%c0_2, %c0_3, %c0_4, %c0_5] : memref<1x8x8x256xbf16, #tpu.memory_space<vmem>>, vector<1x8x8x256xbf16>
    %3 = vector.shape_cast %2 : vector<1x8x8x256xbf16> to vector<8x8x256xbf16>
    %4 = arith.extf %3 : vector<8x8x256xbf16> to vector<8x8x256xf32>
    %c0_6 = arith.constant 0 : index
    %c0_7 = arith.constant 0 : index
    %c0_8 = arith.constant 0 : index
    %5 = vector.load %arg2[%c0_6, %c0_7, %c0_8] : memref<1x1x256xf32, #tpu.memory_space<vmem>>, vector<1x1x256xf32>
    %6 = vector.broadcast %5 : vector<1x1x256xf32> to vector<8x8x256xf32>
    %7 = arith.mulf %4, %6 : vector<8x8x256xf32>
    %c0_9 = arith.constant 0 : index
    %c0_10 = arith.constant 0 : index
    %c0_11 = arith.constant 0 : index
    %8 = vector.load %arg3[%c0_9, %c0_10, %c0_11] : memref<1x1x256xf32, #tpu.memory_space<vmem>>, vector<1x1x256xf32>
    %9 = vector.broadcast %8 : vector<1x1x256xf32> to vector<8x8x256xf32>
    %10 = arith.addf %7, %9 : vector<8x8x256xf32>
    %cst_12 = arith.constant 0.000000e+00 : f32
    %11 = vector.broadcast %cst_12 : f32 to vector<8x8x256xf32>
    %12 = arith.maximumf %10, %11 : vector<8x8x256xf32>
    %13 = arith.truncf %12 : vector<8x8x256xf32> to vector<8x8x256xbf16>
    %c1 = arith.constant 1 : index
    %c1_13 = arith.constant 1 : index
    %c0_14 = arith.constant 0 : index
    %14 = vector.load %arg6[%c1, %c1_13, %c0_14] : memref<10x10x256xbf16, #tpu.memory_space<vmem>>, vector<8x8x256xbf16>
    tpu.vector_store %arg6[%c1, %c1_13, %c0_14], %13 {strides = array<i32>} : memref<10x10x256xbf16, #tpu.memory_space<vmem>>, vector<8x8x256xbf16>,
    %cst_15 = arith.constant 0.000000e+00 : f32
    %15 = vector.broadcast %cst_15 : f32 to vector<64x256xf32>
    %c0_16 = arith.constant 0 : index
    %c0_17 = arith.constant 0 : index
    %c0_18 = arith.constant 0 : index
    %16 = vector.load %arg6[%c0_16, %c0_17, %c0_18] : memref<10x10x256xbf16, #tpu.memory_space<vmem>>, vector<8x8x256xbf16>
    %17 = vector.shape_cast %16 : vector<8x8x256xbf16> to vector<64x256xbf16>
    %c0_19 = arith.constant 0 : index
    %c0_20 = arith.constant 0 : index
    %c0_21 = arith.constant 0 : index
    %18 = vector.load %arg4[%c0_19, %c0_20, %c0_21] : memref<9x256x256xbf16, #tpu.memory_space<vmem>>, vector<1x256x256xbf16>
    %19 = vector.shape_cast %18 : vector<1x256x256xbf16> to vector<256x256xbf16>
    %cst_22 = arith.constant dense<0.000000e+00> : vector<64x256xf32>
    %20 = tpu.matmul %17, %19, %cst_22 {dimension_numbers = #tpu.dot_dimension_numbers<[1], [0], [0], [1], [0, 0, 1, 1], [], []>} : vector<64x256xbf16>, vector<256x256xbf16>, vector<64x256xf32> -> vector<64x256xf32>
    %21 = arith.addf %15, %20 : vector<64x256xf32>
    %c0_23 = arith.constant 0 : index
    %c1_24 = arith.constant 1 : index
    %c0_25 = arith.constant 0 : index
    %22 = vector.load %arg6[%c0_23, %c1_24, %c0_25] : memref<10x10x256xbf16, #tpu.memory_space<vmem>>, vector<8x8x256xbf16>
    %23 = vector.shape_cast %22 : vector<8x8x256xbf16> to vector<64x256xbf16>
    %c1_26 = arith.constant 1 : index
    %c0_27 = arith.constant 0 : index
    %c0_28 = arith.constant 0 : index
    %24 = vector.load %arg4[%c1_26, %c0_27, %c0_28] : memref<9x256x256xbf16, #tpu.memory_space<vmem>>, vector<1x256x256xbf16>
    %25 = vector.shape_cast %24 : vector<1x256x256xbf16> to vector<256x256xbf16>
    %cst_29 = arith.constant dense<0.000000e+00> : vector<64x256xf32>
    %26 = tpu.matmul %23, %25, %cst_29 {dimension_numbers = #tpu.dot_dimension_numbers<[1], [0], [0], [1], [0, 0, 1, 1], [], []>} : vector<64x256xbf16>, vector<256x256xbf16>, vector<64x256xf32> -> vector<64x256xf32>
    %27 = arith.addf %21, %26 : vector<64x256xf32>
    %c0_30 = arith.constant 0 : index
    %c2 = arith.constant 2 : index
    %c0_31 = arith.constant 0 : index
    %28 = vector.load %arg6[%c0_30, %c2, %c0_31] : memref<10x10x256xbf16, #tpu.memory_space<vmem>>, vector<8x8x256xbf16>
    %29 = vector.shape_cast %28 : vector<8x8x256xbf16> to vector<64x256xbf16>
    %c2_32 = arith.constant 2 : index
    %c0_33 = arith.constant 0 : index
    %c0_34 = arith.constant 0 : index
    %30 = vector.load %arg4[%c2_32, %c0_33, %c0_34] : memref<9x256x256xbf16, #tpu.memory_space<vmem>>, vector<1x256x256xbf16>
    %31 = vector.shape_cast %30 : vector<1x256x256xbf16> to vector<256x256xbf16>
    %cst_35 = arith.constant dense<0.000000e+00> : vector<64x256xf32>
    %32 = tpu.matmul %29, %31, %cst_35 {dimension_numbers = #tpu.dot_dimension_numbers<[1], [0], [0], [1], [0, 0, 1, 1], [], []>} : vector<64x256xbf16>, vector<256x256xbf16>, vector<64x256xf32> -> vector<64x256xf32>
    %33 = arith.addf %27, %32 : vector<64x256xf32>
    %c1_36 = arith.constant 1 : index
    %c0_37 = arith.constant 0 : index
    %c0_38 = arith.constant 0 : index
    %34 = vector.load %arg6[%c1_36, %c0_37, %c0_38] : memref<10x10x256xbf16, #tpu.memory_space<vmem>>, vector<8x8x256xbf16>
    %35 = vector.shape_cast %34 : vector<8x8x256xbf16> to vector<64x256xbf16>
    %c3 = arith.constant 3 : index
    %c0_39 = arith.constant 0 : index
    %c0_40 = arith.constant 0 : index
    %36 = vector.load %arg4[%c3, %c0_39, %c0_40] : memref<9x256x256xbf16, #tpu.memory_space<vmem>>, vector<1x256x256xbf16>
    %37 = vector.shape_cast %36 : vector<1x256x256xbf16> to vector<256x256xbf16>
    %cst_41 = arith.constant dense<0.000000e+00> : vector<64x256xf32>
    %38 = tpu.matmul %35, %37, %cst_41 {dimension_numbers = #tpu.dot_dimension_numbers<[1], [0], [0], [1], [0, 0, 1, 1], [], []>} : vector<64x256xbf16>, vector<256x256xbf16>, vector<64x256xf32> -> vector<64x256xf32>
    %39 = arith.addf %33, %38 : vector<64x256xf32>
    %c1_42 = arith.constant 1 : index
    %c1_43 = arith.constant 1 : index
    %c0_44 = arith.constant 0 : index
    %40 = vector.load %arg6[%c1_42, %c1_43, %c0_44] : memref<10x10x256xbf16, #tpu.memory_space<vmem>>, vector<8x8x256xbf16>
    %41 = vector.shape_cast %40 : vector<8x8x256xbf16> to vector<64x256xbf16>
    %c4 = arith.constant 4 : index
    %c0_45 = arith.constant 0 : index
    %c0_46 = arith.constant 0 : index
    %42 = vector.load %arg4[%c4, %c0_45, %c0_46] : memref<9x256x256xbf16, #tpu.memory_space<vmem>>, vector<1x256x256xbf16>
    %43 = vector.shape_cast %42 : vector<1x256x256xbf16> to vector<256x256xbf16>
    %cst_47 = arith.constant dense<0.000000e+00> : vector<64x256xf32>
    %44 = tpu.matmul %41, %43, %cst_47 {dimension_numbers = #tpu.dot_dimension_numbers<[1], [0], [0], [1], [0, 0, 1, 1], [], []>} : vector<64x256xbf16>, vector<256x256xbf16>, vector<64x256xf32> -> vector<64x256xf32>
    %45 = arith.addf %39, %44 : vector<64x256xf32>
    %c1_48 = arith.constant 1 : index
    %c2_49 = arith.constant 2 : index
    %c0_50 = arith.constant 0 : index
    %46 = vector.load %arg6[%c1_48, %c2_49, %c0_50] : memref<10x10x256xbf16, #tpu.memory_space<vmem>>, vector<8x8x256xbf16>
    %47 = vector.shape_cast %46 : vector<8x8x256xbf16> to vector<64x256xbf16>
    %c5 = arith.constant 5 : index
    %c0_51 = arith.constant 0 : index
    %c0_52 = arith.constant 0 : index
    %48 = vector.load %arg4[%c5, %c0_51, %c0_52] : memref<9x256x256xbf16, #tpu.memory_space<vmem>>, vector<1x256x256xbf16>
    %49 = vector.shape_cast %48 : vector<1x256x256xbf16> to vector<256x256xbf16>
    %cst_53 = arith.constant dense<0.000000e+00> : vector<64x256xf32>
    %50 = tpu.matmul %47, %49, %cst_53 {dimension_numbers = #tpu.dot_dimension_numbers<[1], [0], [0], [1], [0, 0, 1, 1], [], []>} : vector<64x256xbf16>, vector<256x256xbf16>, vector<64x256xf32> -> vector<64x256xf32>
    %51 = arith.addf %45, %50 : vector<64x256xf32>
    %c2_54 = arith.constant 2 : index
    %c0_55 = arith.constant 0 : index
    %c0_56 = arith.constant 0 : index
    %52 = vector.load %arg6[%c2_54, %c0_55, %c0_56] : memref<10x10x256xbf16, #tpu.memory_space<vmem>>, vector<8x8x256xbf16>
    %53 = vector.shape_cast %52 : vector<8x8x256xbf16> to vector<64x256xbf16>
    %c6 = arith.constant 6 : index
    %c0_57 = arith.constant 0 : index
    %c0_58 = arith.constant 0 : index
    %54 = vector.load %arg4[%c6, %c0_57, %c0_58] : memref<9x256x256xbf16, #tpu.memory_space<vmem>>, vector<1x256x256xbf16>
    %55 = vector.shape_cast %54 : vector<1x256x256xbf16> to vector<256x256xbf16>
    %cst_59 = arith.constant dense<0.000000e+00> : vector<64x256xf32>
    %56 = tpu.matmul %53, %55, %cst_59 {dimension_numbers = #tpu.dot_dimension_numbers<[1], [0], [0], [1], [0, 0, 1, 1], [], []>} : vector<64x256xbf16>, vector<256x256xbf16>, vector<64x256xf32> -> vector<64x256xf32>
    %57 = arith.addf %51, %56 : vector<64x256xf32>
    %c2_60 = arith.constant 2 : index
    %c1_61 = arith.constant 1 : index
    %c0_62 = arith.constant 0 : index
    %58 = vector.load %arg6[%c2_60, %c1_61, %c0_62] : memref<10x10x256xbf16, #tpu.memory_space<vmem>>, vector<8x8x256xbf16>
    %59 = vector.shape_cast %58 : vector<8x8x256xbf16> to vector<64x256xbf16>
    %c7 = arith.constant 7 : index
    %c0_63 = arith.constant 0 : index
    %c0_64 = arith.constant 0 : index
    %60 = vector.load %arg4[%c7, %c0_63, %c0_64] : memref<9x256x256xbf16, #tpu.memory_space<vmem>>, vector<1x256x256xbf16>
    %61 = vector.shape_cast %60 : vector<1x256x256xbf16> to vector<256x256xbf16>
    %cst_65 = arith.constant dense<0.000000e+00> : vector<64x256xf32>
    %62 = tpu.matmul %59, %61, %cst_65 {dimension_numbers = #tpu.dot_dimension_numbers<[1], [0], [0], [1], [0, 0, 1, 1], [], []>} : vector<64x256xbf16>, vector<256x256xbf16>, vector<64x256xf32> -> vector<64x256xf32>
    %63 = arith.addf %57, %62 : vector<64x256xf32>
    %c2_66 = arith.constant 2 : index
    %c2_67 = arith.constant 2 : index
    %c0_68 = arith.constant 0 : index
    %64 = vector.load %arg6[%c2_66, %c2_67, %c0_68] : memref<10x10x256xbf16, #tpu.memory_space<vmem>>, vector<8x8x256xbf16>
    %65 = vector.shape_cast %64 : vector<8x8x256xbf16> to vector<64x256xbf16>
    %c8 = arith.constant 8 : index
    %c0_69 = arith.constant 0 : index
    %c0_70 = arith.constant 0 : index
    %66 = vector.load %arg4[%c8, %c0_69, %c0_70] : memref<9x256x256xbf16, #tpu.memory_space<vmem>>, vector<1x256x256xbf16>
    %67 = vector.shape_cast %66 : vector<1x256x256xbf16> to vector<256x256xbf16>
    %cst_71 = arith.constant dense<0.000000e+00> : vector<64x256xf32>
    %68 = tpu.matmul %65, %67, %cst_71 {dimension_numbers = #tpu.dot_dimension_numbers<[1], [0], [0], [1], [0, 0, 1, 1], [], []>} : vector<64x256xbf16>, vector<256x256xbf16>, vector<64x256xf32> -> vector<64x256xf32>
    %69 = arith.addf %63, %68 : vector<64x256xf32>
    %c0_72 = arith.constant 0 : index
    %c0_73 = arith.constant 0 : index
    %c0_74 = arith.constant 0 : index
    %70 = vector.load %arg5[%c0_72, %c0_73, %c0_74] : memref<1x64x256xf32, #tpu.memory_space<vmem>>, vector<1x64x256xf32>
    %71 = vector.shape_cast %70 : vector<1x64x256xf32> to vector<64x256xf32>
    %72 = vector.shape_cast %69 : vector<64x256xf32> to vector<1x64x256xf32>
    tpu.vector_store %arg5[%c0_72, %c0_73, %c0_74], %72 {strides = array<i32>} : memref<1x64x256xf32, #tpu.memory_space<vmem>>, vector<1x64x256xf32>,
    return
  }
  func.func @transform_0(%arg0: i32) -> (i32, i32, i32, i32) {
    %c0_i32 = arith.constant 0 : i32
    %c0_i32_0 = arith.constant 0 : i32
    %c0_i32_1 = arith.constant 0 : i32
    %c0_i32_2 = arith.constant 0 : i32
    return %arg0, %c0_i32, %c0_i32_0, %c0_i32_1 : i32, i32, i32, i32
  }
  func.func @transform_1(%arg0: i32) -> (i32, i32, i32) {
    %c0_i32 = arith.constant 0 : i32
    %c0_i32_0 = arith.constant 0 : i32
    %c0_i32_1 = arith.constant 0 : i32
    %c0_i32_2 = arith.constant 0 : i32
    return %c0_i32, %c0_i32_0, %c0_i32_1 : i32, i32, i32
  }
  func.func @transform_2(%arg0: i32) -> (i32, i32, i32) {
    %c0_i32 = arith.constant 0 : i32
    %c0_i32_0 = arith.constant 0 : i32
    %c0_i32_1 = arith.constant 0 : i32
    %c0_i32_2 = arith.constant 0 : i32
    return %c0_i32, %c0_i32_0, %c0_i32_1 : i32, i32, i32
  }
  func.func @transform_3(%arg0: i32) -> (i32, i32, i32) {
    %c0_i32 = arith.constant 0 : i32
    %c0_i32_0 = arith.constant 0 : i32
    %c0_i32_1 = arith.constant 0 : i32
    %c0_i32_2 = arith.constant 0 : i32
    return %c0_i32, %c0_i32_0, %c0_i32_1 : i32, i32, i32
  }
  func.func @transform_4(%arg0: i32) -> (i32, i32, i32) {
    %c0_i32 = arith.constant 0 : i32
    %c0_i32_0 = arith.constant 0 : i32
    %c0_i32_1 = arith.constant 0 : i32
    return %arg0, %c0_i32, %c0_i32_0 : i32, i32, i32
  }
}

</mosaic_0001>

<llo_original>
// kernel: forward.2
$region0: #{forward.2}
  #allocation0 [shape = 'u32[]', space=smem, size = 0x4, offset = 0x4, fixed_abs, tag = 'smem constant byte address 0x4 - core index']
  #allocation1 [shape = 'u32[144,128]{1,0:T(1,128)}', space=vmem, size = 0x12000, scoped, tag = 'internal scratch']
  %s0 = inlined_call_operand.vmem [shape: bf16[2,9,2,9,256], index: 0, kind: input, shape index: {}]
  %s1 = inlined_call_operand.hbm [shape: bf16[9,128,256], index: 1, kind: input, shape index: {}]
  %s2 = inlined_call_operand.vmem [shape: bf16[2,64,256], index: 2, kind: output, shape index: {0}]
  %s3 = inlined_call_operand.vmem [shape: f32[2,1,256], index: 3, kind: output, shape index: {1}]
  %s4 = inlined_call_operand.vmem [shape: f32[2,1,256], index: 4, kind: output, shape index: {2}]
  %5 = xla_tuple %s2, %s3, %s4
  %s6 = sld [smem:[#allocation0]]
  $region61: #{forward.2} parent=0
    _
  %s8 = ssub.s32 1, %s6
  %s9 = scalar_select 0, %s8, %s6
  $region1: #{forward.2} parent=0
    #allocation2 [shape = 'u8[589824]{0}', space=vmem, size = 0x90000, scoped, tag = 'input window, operand 1, single buffered']
    #allocation3 [shape = 's32[2]{0}', space=sflag, size = 0x8, scoped, tag = 'scoped memory for forward.2']
    %10 = vsyncpa [#allocation3], 0
    loop: start=0, step=1, limit=4
    $region2: #{forward.2} parent=1 // loop_pre_header
      _
    $region3: #{forward.2} parent=1 // loop_header
      %s12 = sphi 0, %s16
      %p13 = scmp.ge.s32.totalorder %s12, 4
      %s22 = sphi 0, %s24
      %s25 = sphi 0, %s22
      %s26 = sphi 0, %s25
      %s42 = sphi 0, %s26
      %s46 = sphi 0, %s46
      %s48 = sphi 0, %s46
      %s49 = sphi 0, %s48
      %s63 = sphi 0, %s49
      %s69 = sphi 0, %s71
      %s72 = sphi 0, %s69
      %s73 = sphi 0, %s72
      %s89 = sphi 0, %s73
      %s95 = sphi 0, %s97
      %s98 = sphi 0, %s95
      %s99 = sphi 0, %s98
      %s115 = sphi 0, %s99
      %s121 = sphi 0, %s123
      %s124 = sphi 0, %s121
      %s125 = sphi 0, %s124
      %s141 = sphi 0, %s125
    $region4: #{forward.2} parent=1 // loop_header_branch
      %15 = sbr.rel (%p13) target = $region8
    $region5: #{forward.2} parent=1 // loop_body
      %s17 = ssub.s32 %s12, 1
      %s18 = ssub.s32 %s12, 2
      %s19 = sadd.s32 %s12, 1
      %s20 = ssub.s32 %s12, %s19
      %p21 = scmp.eq.s32.totalorder %s20, 0
      %s23 = sadd.s32 %s22, 1
      %s24 = scalar_select %p21, %s22, %s23
      %p27 = pneg %p21
      %p28 = scmp.eq.s32.totalorder %s12, 1
      %p29 = por %p27, %p28
      %p30 = scmp.ne.s32.totalorder %s22, %s25
      %p31 = scmp.eq.s32.totalorder %s12, 0
      %p32 = por %p30, %p31
      %p33 = scmp.ne.s32.totalorder %s22, %s25
      %p34 = scmp.eq.s32.totalorder %s17, 1
      %p35 = por %p33, %p34
      %p36 = scmp.ne.s32.totalorder %s25, %s26
      %p37 = scmp.eq.s32.totalorder %s17, 0
      %p38 = por %p36, %p37
      %p39 = scmp.ne.s32.totalorder %s25, %s26
      %p40 = scmp.eq.s32.totalorder %s18, 1
      %p41 = por %p39, %p40
      %p43 = scmp.ne.s32.totalorder %s26, %s42
      %p44 = scmp.eq.s32.totalorder %s18, 0
      %p45 = por %p43, %p44
      %s47 = sadd.s32 %s46, 1
      %p50 = scmp.eq.s32.totalorder %s12, 1
      %p51 = scmp.ne.s32.totalorder %s46, %s48
      %p52 = scmp.eq.s32.totalorder %s12, 0
      %p53 = por %p51, %p52
      %p54 = scmp.ne.s32.totalorder %s46, %s48
      %p55 = scmp.eq.s32.totalorder %s17, 1
      %p56 = por %p54, %p55
      %p57 = scmp.ne.s32.totalorder %s48, %s49
      %p58 = scmp.eq.s32.totalorder %s17, 0
      %p59 = por %p57, %p58
      %p60 = scmp.ne.s32.totalorder %s48, %s49
      %p61 = scmp.eq.s32.totalorder %s18, 1
      %p62 = por %p60, %p61
      %p64 = scmp.ne.s32.totalorder %s49, %s63
      %p65 = scmp.eq.s32.totalorder %s18, 0
      %p66 = por %p64, %p65
      %s67 = ssub.s32 %s12, %s19
      %p68 = scmp.eq.s32.totalorder %s67, 0
      %s70 = sadd.s32 %s69, 1
      %s71 = scalar_select %p68, %s69, %s70
      %p74 = pneg %p68
      %p75 = scmp.eq.s32.totalorder %s12, 1
      %p76 = por %p74, %p75
      %p77 = scmp.ne.s32.totalorder %s69, %s72
      %p78 = scmp.eq.s32.totalorder %s12, 0
      %p79 = por %p77, %p78
      %p80 = scmp.ne.s32.totalorder %s69, %s72
      %p81 = scmp.eq.s32.totalorder %s17, 1
      %p82 = por %p80, %p81
      %p83 = scmp.ne.s32.totalorder %s72, %s73
      %p84 = scmp.eq.s32.totalorder %s17, 0
      %p85 = por %p83, %p84
      %p86 = scmp.ne.s32.totalorder %s72, %s73
      %p87 = scmp.eq.s32.totalorder %s18, 1
      %p88 = por %p86, %p87
      %p90 = scmp.ne.s32.totalorder %s73, %s89
      %p91 = scmp.eq.s32.totalorder %s18, 0
      %p92 = por %p90, %p91
      %s93 = ssub.s32 %s12, %s19
      %p94 = scmp.eq.s32.totalorder %s93, 0
      %s96 = sadd.s32 %s95, 1
      %s97 = scalar_select %p94, %s95, %s96
      %p100 = pneg %p94
      %p101 = scmp.eq.s32.totalorder %s12, 1
      %p102 = por %p100, %p101
      %p103 = scmp.ne.s32.totalorder %s95, %s98
      %p104 = scmp.eq.s32.totalorder %s12, 0
      %p105 = por %p103, %p104
      %p106 = scmp.ne.s32.totalorder %s95, %s98
      %p107 = scmp.eq.s32.totalorder %s17, 1
      %p108 = por %p106, %p107
      %p109 = scmp.ne.s32.totalorder %s98, %s99
      %p110 = scmp.eq.s32.totalorder %s17, 0
      %p111 = por %p109, %p110
      %p112 = scmp.ne.s32.totalorder %s98, %s99
      %p113 = scmp.eq.s32.totalorder %s18, 1
      %p114 = por %p112, %p113
      %p116 = scmp.ne.s32.totalorder %s99, %s115
      %p117 = scmp.eq.s32.totalorder %s18, 0
      %p118 = por %p116, %p117
      %s119 = ssub.s32 %s12, %s19
      %p120 = scmp.eq.s32.totalorder %s119, 0
      %s122 = sadd.s32 %s121, 1
      %s123 = scalar_select %p120, %s121, %s122
      %p126 = pneg %p120
      %p127 = scmp.eq.s32.totalorder %s12, 1
      %p128 = por %p126, %p127
      %p129 = scmp.ne.s32.totalorder %s121, %s124
      %p130 = scmp.eq.s32.totalorder %s12, 0
      %p131 = por %p129, %p130
      %p132 = scmp.ne.s32.totalorder %s121, %s124
      %p133 = scmp.eq.s32.totalorder %s17, 1
      %p134 = por %p132, %p133
      %p135 = scmp.ne.s32.totalorder %s124, %s125
      %p136 = scmp.eq.s32.totalorder %s17, 0
      %p137 = por %p135, %p136
      %p138 = scmp.ne.s32.totalorder %s124, %s125
      %p139 = scmp.eq.s32.totalorder %s18, 1
      %p140 = por %p138, %p139
      %p142 = scmp.ne.s32.totalorder %s125, %s141
      %p143 = scmp.eq.s32.totalorder %s18, 0
      %p144 = por %p142, %p143
      %p145 = scmp.le.s32.totalorder 1, %s12
      %p146 = scmp.lt.s32.totalorder %s12, 3
      %p147 = pnand %p145, %p146
      %p148 = pneg %p147
      // Predicated region
      $region9: #{forward.2} parent=5 // pred_check
        _
      $region10: #{forward.2} parent=5 // pred_check_branch
        %150 = sbr.rel (%p147) target = $region12
      $region11: #{forward.2} parent=5 // pred_region
        %s151 = ssub.s32 %s12, 1
        // Predicated region
        $region13: #{forward.2} parent=11 // pred_check
          %p152 = pneg %p59
        $region14: #{forward.2} parent=11 // pred_check_branch
          %154 = sbr.rel (%p152) target = $region16
        $region15: #{forward.2} parent=11 // pred_region
          %s156 = ssub.s32 18432, 18432
          %157 = vsyncadd [#allocation3], %s156
          %s158 = sshll.u32 [#allocation2], 4
          %s159 = int_to_ptr.vmem [resolvable:$true] %s158
          %164 = dma.hbm_to_vmem [thread:$0]  %s1, 18432, %s159, [#allocation3], 128, 128, 8
        $region16: #{forward.2} parent=11 // pred_fallthru
          _
      $region12: #{forward.2} parent=5 // pred_fallthru
        _
      %p165 = scmp.lt.s32.totalorder %s12, 2
      // Predicated region
      $region17: #{forward.2} parent=5 // pred_check
        %p166 = pneg %p165
      $region18: #{forward.2} parent=5 // pred_check_branch
        %168 = sbr.rel (%p166) target = $region20
      $region19: #{forward.2} parent=5 // pred_region
        // Predicated region
        $region21: #{forward.2} parent=19 // pred_check
          %p169 = pneg %p32
        $region22: #{forward.2} parent=19 // pred_check_branch
          %171 = sbr.rel (%p169) target = $region24
        $region23: #{forward.2} parent=19 // pred_region
          %p172 = scmp.lt.s32.totalorder %s12, 1
          %s173 = scalar_select %p172, %s12, 1
          %s174 = smul.addr %s173, 72
          %s175 = smul.addr %s174, 4
          %s176 = scalar_lea.vmem %s0, %s175
        $region24: #{forward.2} parent=19 // pred_fallthru
          _
      $region20: #{forward.2} parent=5 // pred_fallthru
        _
      %p177 = scmp.le.s32.totalorder 1, %s12
      %p178 = scmp.lt.s32.totalorder %s12, 3
      %p179 = pnand %p177, %p178
      %p180 = pneg %p179
      // Predicated region
      $region25: #{forward.2} parent=5 // pred_check
        _
      $region26: #{forward.2} parent=5 // pred_check_branch
        %182 = sbr.rel (%p179) target = $region28
      $region27: #{forward.2} parent=5 // pred_region
        %s183 = ssub.s32 %s12, 1
        // Predicated region
        $region29: #{forward.2} parent=27 // pred_check
          %p184 = pneg %p59
        $region30: #{forward.2} parent=27 // pred_check_branch
          %186 = sbr.rel (%p184) target = $region32
        $region31: #{forward.2} parent=27 // pred_region
          %187 = dma.done [#allocation3], 18432
        $region32: #{forward.2} parent=27 // pred_fallthru
          _
        %p188 = scmp.lt.s32.totalorder %s17, 1
        %s189 = scalar_select %p188, %s17, 1
        %s190 = smul.addr %s189, 72
        %s191 = smul.addr %s190, 4
        %s192 = scalar_lea.vmem %s0, %s191
        %p193 = pneg %p38
        %p194 = pneg %p35
        %p195 = pneg %p59
        %p196 = pneg %p56
        %p197 = pneg %p85
        %p198 = pneg %p82
        %p199 = scmp.lt.s32.totalorder %s17, 1
        %s200 = scalar_select %p199, %s17, 1
        %s201 = smul.addr %s200, 16
        %s202 = smul.addr %s201, 4
        %s203 = scalar_lea.vmem %s2, %s202
        %p204 = pneg %p111
        %p205 = pneg %p108
        %p206 = scmp.lt.s32.totalorder %s17, 1
        %s207 = scalar_select %p206, %s17, 1
        %s208 = smul.addr %s207, 2
        %s209 = scalar_lea.vmem %s3, %s208
        %p210 = pneg %p137
        %p211 = pneg %p134
        %p212 = scmp.lt.s32.totalorder %s17, 1
        %s213 = scalar_select %p212, %s17, 1
        %s214 = smul.addr %s213, 2
        %s215 = scalar_lea.vmem %s4, %s214
        %p216 = scmp.lt.s32.totalorder %s17, 1
        %s217 = scalar_select %p216, %s17, 1
        %s218 = smul.addr %s217, 72
        %s219 = smul.addr %s218, 4
        %s220 = scalar_lea.vmem %s0, %s219
        %p221 = scmp.lt.s32.totalorder %s17, 1
        %s222 = scalar_select %p221, %s17, 1
        %s223 = smul.addr %s222, 16
        %s224 = smul.addr %s223, 4
        %s225 = scalar_lea.vmem %s2, %s224
        %p226 = scmp.lt.s32.totalorder %s17, 1
        %s227 = scalar_select %p226, %s17, 1
        %s228 = smul.addr %s227, 2
        %s229 = scalar_lea.vmem %s3, %s228
        %p230 = scmp.lt.s32.totalorder %s17, 1
        %s231 = scalar_select %p230, %s17, 1
        %s232 = smul.addr %s231, 2
        %s233 = scalar_lea.vmem %s4, %s232
        %v235 = vld [vmem:[%s220] sm:$0xf]
        %v236 = vld [vmem:[%s220 + $0x20] sm:$0xf]
        %v237 = vld [vmem:[%s220 + $0x40] sm:$0xf]
        %v238 = vld [vmem:[%s220 + $0x60] sm:$0xf]
        %v239 = vld [vmem:[%s220 + $0x80] sm:$0xf]
        %v240 = vld [vmem:[%s220 + $0xa0] sm:$0xf]
        %v241 = vld [vmem:[%s220 + $0xc0] sm:$0xf]
        %v242 = vld [vmem:[%s220 + $0xe0] sm:$0xf]
        %v243 = vld [vmem:[#allocation2] sm:$0xff]
        %v244 = vld [vmem:[#allocation2 + $0x8] sm:$0xff]
        %v245 = vld [vmem:[#allocation2 + $0x10] sm:$0xff]
        %v246 = vld [vmem:[#allocation2 + $0x18] sm:$0xff]
        %v247 = vld [vmem:[#allocation2 + $0x20] sm:$0xff]
        %v248 = vld [vmem:[#allocation2 + $0x28] sm:$0xff]
        %v249 = vld [vmem:[#allocation2 + $0x30] sm:$0xff]
        %v250 = vld [vmem:[#allocation2 + $0x38] sm:$0xff]
        %v251 = vld [vmem:[#allocation2 + $0x40] sm:$0xff]
        %v252 = vld [vmem:[#allocation2 + $0x48] sm:$0xff]
        %v253 = vld [vmem:[#allocation2 + $0x50] sm:$0xff]
        %v254 = vld [vmem:[#allocation2 + $0x58] sm:$0xff]
        %v255 = vld [vmem:[#allocation2 + $0x60] sm:$0xff]
        %v256 = vld [vmem:[#allocation2 + $0x68] sm:$0xff]
        %v257 = vld [vmem:[#allocation2 + $0x70] sm:$0xff]
        %v258 = vld [vmem:[#allocation2 + $0x78] sm:$0xff]
        %v259 = vld [vmem:[%s220 + $0x4] sm:$0xf]
        %v260 = vld [vmem:[%s220 + $0x24] sm:$0xf]
        %v261 = vld [vmem:[%s220 + $0x44] sm:$0xf]
        %v262 = vld [vmem:[%s220 + $0x64] sm:$0xf]
        %v263 = vld [vmem:[%s220 + $0x84] sm:$0xf]
        %v264 = vld [vmem:[%s220 + $0xa4] sm:$0xf]
        %v265 = vld [vmem:[%s220 + $0xc4] sm:$0xf]
        %v266 = vld [vmem:[%s220 + $0xe4] sm:$0xf]
        %s267 = scalar_lea.vmem [#allocation2], 128
        %v268 = vld [vmem:[%s267] sm:$0xff]
        %v269 = vld [vmem:[%s267 + $0x8] sm:$0xff]
        %v270 = vld [vmem:[%s267 + $0x10] sm:$0xff]
        %v271 = vld [vmem:[%s267 + $0x18] sm:$0xff]
        %v272 = vld [vmem:[%s267 + $0x20] sm:$0xff]
        %v273 = vld [vmem:[%s267 + $0x28] sm:$0xff]
        %v274 = vld [vmem:[%s267 + $0x30] sm:$0xff]
        %v275 = vld [vmem:[%s267 + $0x38] sm:$0xff]
        %v276 = vld [vmem:[%s267 + $0x40] sm:$0xff]
        %v277 = vld [vmem:[%s267 + $0x48] sm:$0xff]
        %v278 = vld [vmem:[%s267 + $0x50] sm:$0xff]
        %v279 = vld [vmem:[%s267 + $0x58] sm:$0xff]
        %v280 = vld [vmem:[%s267 + $0x60] sm:$0xff]
        %v281 = vld [vmem:[%s267 + $0x68] sm:$0xff]
        %v282 = vld [vmem:[%s267 + $0x70] sm:$0xff]
        %v283 = vld [vmem:[%s267 + $0x78] sm:$0xff]
        %v292 = vunpack.c.l.b16 %v259
        %v293 = vunpack.c.l.b16 %v260
        %v294 = vunpack.c.l.b16 %v261
        %v295 = vunpack.c.l.b16 %v262
        %v296 = vunpack.c.l.b16 %v263
        %v297 = vunpack.c.l.b16 %v264
        %v298 = vunpack.c.l.b16 %v265
        %v299 = vunpack.c.l.b16 %v266
        %v300 = vpack.c.b16 %v293, %v292
        %v301 = vpack.c.b16 %v295, %v294
        %v302 = vpack.c.b16 %v297, %v296
        %v303 = vpack.c.b16 %v299, %v298
        %v324 = vunpack.c.l.b16 %v268
        %v325 = vunpack.c.h.b16 %v268
        %v326 = vunpack.c.l.b16 %v269
        %v327 = vunpack.c.h.b16 %v269
        %v328 = vunpack.c.l.b16 %v270
        %v329 = vunpack.c.h.b16 %v270
        %v330 = vunpack.c.l.b16 %v271
        %v331 = vunpack.c.h.b16 %v271
        %v332 = vunpack.c.l.b16 %v272
        %v333 = vunpack.c.h.b16 %v272
        %v334 = vunpack.c.l.b16 %v273
        %v335 = vunpack.c.h.b16 %v273
        %v336 = vunpack.c.l.b16 %v274
        %v337 = vunpack.c.h.b16 %v274
        %v338 = vunpack.c.l.b16 %v275
        %v339 = vunpack.c.h.b16 %v275
        %v340 = vunpack.c.l.b16 %v276
        %v341 = vunpack.c.h.b16 %v276
        %v342 = vunpack.c.l.b16 %v277
        %v343 = vunpack.c.h.b16 %v277
        %v344 = vunpack.c.l.b16 %v278
        %v345 = vunpack.c.h.b16 %v278
        %v346 = vunpack.c.l.b16 %v279
        %v347 = vunpack.c.h.b16 %v279
        %v348 = vunpack.c.l.b16 %v280
        %v349 = vunpack.c.h.b16 %v280
        %v350 = vunpack.c.l.b16 %v281
        %v351 = vunpack.c.h.b16 %v281
        %v352 = vunpack.c.l.b16 %v282
        %v353 = vunpack.c.h.b16 %v282
        %v354 = vunpack.c.l.b16 %v283
        %v355 = vunpack.c.h.b16 %v283
        %v356 = vpack.c.b16 %v326, %v324
        %v357 = vpack.c.b16 %v327, %v325
        %v358 = vpack.c.b16 %v330, %v328
        %v359 = vpack.c.b16 %v331, %v329
        %v360 = vpack.c.b16 %v334, %v332
        %v361 = vpack.c.b16 %v335, %v333
        %v362 = vpack.c.b16 %v338, %v336
        %v363 = vpack.c.b16 %v339, %v337
        %v364 = vpack.c.b16 %v342, %v340
        %v365 = vpack.c.b16 %v343, %v341
        %v366 = vpack.c.b16 %v346, %v344
        %v367 = vpack.c.b16 %v347, %v345
        %v368 = vpack.c.b16 %v350, %v348
        %v369 = vpack.c.b16 %v351, %v349
        %v370 = vpack.c.b16 %v354, %v352
        %v371 = vpack.c.b16 %v355, %v353
        %388 = vmatprep.subr.bf16.mxu0 %v357
        %389 = vmatpush1.bf16.msra.mxu0 %v356
        %390 = vmatprep.subr.bf16.mxu0 %v359
        %391 = vmatpush1.bf16.msra.mxu0 %v358
        %392 = vmatprep.subr.bf16.mxu0 %v361
        %393 = vmatpush1.bf16.msra.mxu0 %v360
        %394 = vmatprep.subr.bf16.mxu0 %v363
        %395 = vmatpush1.bf16.msra.mxu0 %v362
        %396 = vmatprep.subr.bf16.mxu0 %v365
        %397 = vmatpush1.bf16.msra.mxu0 %v364
        %398 = vmatprep.subr.bf16.mxu0 %v367
        %399 = vmatpush1.bf16.msra.mxu0 %v366
        %400 = vmatprep.subr.bf16.mxu0 %v369
        %401 = vmatpush1.bf16.msra.mxu0 %v368
        %402 = vmatprep.subr.bf16.mxu0 %v371
        %403 = vmatpush1.bf16.msra.mxu0 %v370
        %404 = vmatprep.subr.bf16.mxu0 0
        %405 = vmatpush1.bf16.msra.mxu0 0
        %406 = vmatprep.subr.bf16.mxu0 0
        %407 = vmatpush1.bf16.msra.mxu0 0
        %408 = vmatprep.subr.bf16.mxu0 0
        %409 = vmatpush1.bf16.msra.mxu0 0
        %410 = vmatprep.subr.bf16.mxu0 0
        %411 = vmatpush1.bf16.msra.mxu0 0
        %412 = vmatprep.subr.bf16.mxu0 0
        %413 = vmatpush1.bf16.msra.mxu0 0
        %414 = vmatprep.subr.bf16.mxu0 0
        %415 = vmatpush1.bf16.msra.mxu0 0
        %416 = vmatprep.subr.bf16.mxu0 0
        %417 = vmatpush1.bf16.msra.mxu0 0
        %418 = vmatprep.subr.bf16.mxu0 0
        %419 = vmatpush1.bf16.msra.mxu0 0
        %420 = vmatprep.mubr.bf16.mxu0 0
        %421 = vmatmul.mubr.bf16.gmra.mrb[0].mxu0 %v300
        %v422 = vpop.f32.mrb[0].mxu0
        %v423 = vadd.f32 0.0, %v422
        %v424 = vpop.f32.mrb[0].mxu0
        %v425 = vadd.f32 0.0, %v424
        %v426 = vpop.f32.mrb[0].mxu0
        %v427 = vadd.f32 0.0, %v426
        %v428 = vpop.f32.mrb[0].mxu0
        %v429 = vadd.f32 0.0, %v428
        %430 = vmatprep.mubr.bf16.mxu0 0
        %431 = vmatmul.mubr.bf16.gmra.mrb[0].mxu0 %v301
        %v432 = vpop.f32.mrb[0].mxu0
        %v433 = vadd.f32 0.0, %v432
        %v434 = vpop.f32.mrb[0].mxu0
        %v435 = vadd.f32 0.0, %v434
        %v436 = vpop.f32.mrb[0].mxu0
        %v437 = vadd.f32 0.0, %v436
        %v438 = vpop.f32.mrb[0].mxu0
        %v439 = vadd.f32 0.0, %v438
        %440 = vmatprep.mubr.bf16.mxu0 0
        %441 = vmatmul.mubr.bf16.gmra.mrb[0].mxu0 %v302
        %v442 = vpop.f32.mrb[0].mxu0
        %v443 = vadd.f32 0.0, %v442
        %v444 = vpop.f32.mrb[0].mxu0
        %v445 = vadd.f32 0.0, %v444
        %v446 = vpop.f32.mrb[0].mxu0
        %v447 = vadd.f32 0.0, %v446
        %v448 = vpop.f32.mrb[0].mxu0
        %v449 = vadd.f32 0.0, %v448
        %450 = vmatprep.mubr.bf16.mxu0 0
        %451 = vmatmul.mubr.bf16.gmra.mrb[0].mxu0 %v303
        %v452 = vpop.f32.mrb[0].mxu0
        %v453 = vadd.f32 0.0, %v452
        %v454 = vpop.f32.mrb[0].mxu0
        %v455 = vadd.f32 0.0, %v454
        %v456 = vpop.f32.mrb[0].mxu0
        %v457 = vadd.f32 0.0, %v456
        %v458 = vpop.f32.mrb[0].mxu0
        %v459 = vadd.f32 0.0, %v458
        %460 = vdwg.mxu0
        %v469 = vunpack.c.l.b16 %v235
        %v470 = vunpack.c.l.b16 %v236
        %v471 = vunpack.c.l.b16 %v237
        %v472 = vunpack.c.l.b16 %v238
        %v473 = vunpack.c.l.b16 %v239
        %v474 = vunpack.c.l.b16 %v240
        %v475 = vunpack.c.l.b16 %v241
        %v476 = vunpack.c.l.b16 %v242
        %v477 = vpack.c.b16 %v470, %v469
        %v478 = vpack.c.b16 %v472, %v471
        %v479 = vpack.c.b16 %v474, %v473
        %v480 = vpack.c.b16 %v476, %v475
        %v501 = vunpack.c.l.b16 %v243
        %v502 = vunpack.c.h.b16 %v243
        %v503 = vunpack.c.l.b16 %v244
        %v504 = vunpack.c.h.b16 %v244
        %v505 = vunpack.c.l.b16 %v245
        %v506 = vunpack.c.h.b16 %v245
        %v507 = vunpack.c.l.b16 %v246
        %v508 = vunpack.c.h.b16 %v246
        %v509 = vunpack.c.l.b16 %v247
        %v510 = vunpack.c.h.b16 %v247
        %v511 = vunpack.c.l.b16 %v248
        %v512 = vunpack.c.h.b16 %v248
        %v513 = vunpack.c.l.b16 %v249
        %v514 = vunpack.c.h.b16 %v249
        %v515 = vunpack.c.l.b16 %v250
        %v516 = vunpack.c.h.b16 %v250
        %v517 = vunpack.c.l.b16 %v251
        %v518 = vunpack.c.h.b16 %v251
        %v519 = vunpack.c.l.b16 %v252
        %v520 = vunpack.c.h.b16 %v252
        %v521 = vunpack.c.l.b16 %v253
        %v522 = vunpack.c.h.b16 %v253
        %v523 = vunpack.c.l.b16 %v254
        %v524 = vunpack.c.h.b16 %v254
        %v525 = vunpack.c.l.b16 %v255
        %v526 = vunpack.c.h.b16 %v255
        %v527 = vunpack.c.l.b16 %v256
        %v528 = vunpack.c.h.b16 %v256
        %v529 = vunpack.c.l.b16 %v257
        %v530 = vunpack.c.h.b16 %v257
        %v531 = vunpack.c.l.b16 %v258
        %v532 = vunpack.c.h.b16 %v258
        %v533 = vpack.c.b16 %v503, %v501
        %v534 = vpack.c.b16 %v504, %v502
        %v535 = vpack.c.b16 %v507, %v505
        %v536 = vpack.c.b16 %v508, %v506
        %v537 = vpack.c.b16 %v511, %v509
        %v538 = vpack.c.b16 %v512, %v510
        %v539 = vpack.c.b16 %v515, %v513
        %v540 = vpack.c.b16 %v516, %v514
        %v541 = vpack.c.b16 %v519, %v517
        %v542 = vpack.c.b16 %v520, %v518
        %v543 = vpack.c.b16 %v523, %v521
        %v544 = vpack.c.b16 %v524, %v522
        %v545 = vpack.c.b16 %v527, %v525
        %v546 = vpack.c.b16 %v528, %v526
        %v547 = vpack.c.b16 %v531, %v529
        %v548 = vpack.c.b16 %v532, %v530
        %565 = vmatprep.subr.bf16.mxu0 %v534
        %566 = vmatpush1.bf16.msra.mxu0 %v533
        %567 = vmatprep.subr.bf16.mxu0 %v536
        %568 = vmatpush1.bf16.msra.mxu0 %v535
        %569 = vmatprep.subr.bf16.mxu0 %v538
        %570 = vmatpush1.bf16.msra.mxu0 %v537
        %571 = vmatprep.subr.bf16.mxu0 %v540
        %572 = vmatpush1.bf16.msra.mxu0 %v539
        %573 = vmatprep.subr.bf16.mxu0 %v542
        %574 = vmatpush1.bf16.msra.mxu0 %v541
        %575 = vmatprep.subr.bf16.mxu0 %v544
        %576 = vmatpush1.bf16.msra.mxu0 %v543
        %577 = vmatprep.subr.bf16.mxu0 %v546
        %578 = vmatpush1.bf16.msra.mxu0 %v545
        %579 = vmatprep.subr.bf16.mxu0 %v548
        %580 = vmatpush1.bf16.msra.mxu0 %v547
        %581 = vmatprep.subr.bf16.mxu0 0
        %582 = vmatpush1.bf16.msra.mxu0 0
        %583 = vmatprep.subr.bf16.mxu0 0
        %584 = vmatpush1.bf16.msra.mxu0 0
        %585 = vmatprep.subr.bf16.mxu0 0
        %586 = vmatpush1.bf16.msra.mxu0 0
        %587 = vmatprep.subr.bf16.mxu0 0
        %588 = vmatpush1.bf16.msra.mxu0 0
        %589 = vmatprep.subr.bf16.mxu0 0
        %590 = vmatpush1.bf16.msra.mxu0 0
        %591 = vmatprep.subr.bf16.mxu0 0
        %592 = vmatpush1.bf16.msra.mxu0 0
        %593 = vmatprep.subr.bf16.mxu0 0
        %594 = vmatpush1.bf16.msra.mxu0 0
        %595 = vmatprep.subr.bf16.mxu0 0
        %596 = vmatpush1.bf16.msra.mxu0 0
        %597 = vmatprep.mubr.bf16.mxu0 0
        %598 = vmatmul.mubr.bf16.gmra.mrb[0].mxu0 %v477
        %v599 = vpop.f32.mrb[0].mxu0
        %v600 = vadd.f32 %v423, %v599
        %v601 = vpop.f32.mrb[0].mxu0
        %v602 = vadd.f32 %v425, %v601
        %v603 = vpop.f32.mrb[0].mxu0
        %v604 = vadd.f32 %v427, %v603
        %v605 = vpop.f32.mrb[0].mxu0
        %v606 = vadd.f32 %v429, %v605
        %607 = vmatprep.mubr.bf16.mxu0 0
        %608 = vmatmul.mubr.bf16.gmra.mrb[0].mxu0 %v478
        %v609 = vpop.f32.mrb[0].mxu0
        %v610 = vadd.f32 %v433, %v609
        %v611 = vpop.f32.mrb[0].mxu0
        %v612 = vadd.f32 %v435, %v611
        %v613 = vpop.f32.mrb[0].mxu0
        %v614 = vadd.f32 %v437, %v613
        %v615 = vpop.f32.mrb[0].mxu0
        %v616 = vadd.f32 %v439, %v615
        %617 = vmatprep.mubr.bf16.mxu0 0
        %618 = vmatmul.mubr.bf16.gmra.mrb[0].mxu0 %v479
        %v619 = vpop.f32.mrb[0].mxu0
        %v620 = vadd.f32 %v443, %v619
        %v621 = vpop.f32.mrb[0].mxu0
        %v622 = vadd.f32 %v445, %v621
        %v623 = vpop.f32.mrb[0].mxu0
        %v624 = vadd.f32 %v447, %v623
        %v625 = vpop.f32.mrb[0].mxu0
        %v626 = vadd.f32 %v449, %v625
        %627 = vmatprep.mubr.bf16.mxu0 0
        %628 = vmatmul.mubr.bf16.gmra.mrb[0].mxu0 %v480
        %v629 = vpop.f32.mrb[0].mxu0
        %v630 = vadd.f32 %v453, %v629
        %v631 = vpop.f32.mrb[0].mxu0
        %v632 = vadd.f32 %v455, %v631
        %v633 = vpop.f32.mrb[0].mxu0
        %v634 = vadd.f32 %v457, %v633
        %v635 = vpop.f32.mrb[0].mxu0
        %v636 = vadd.f32 %v459, %v635
        %637 = vdwg.mxu0
        %v638 = vld [vmem:[%s220] sm:$0xf]
        %v639 = vld [vmem:[%s220 + $0x8] sm:$0x1]
        %v640 = vld [vmem:[%s220 + $0x20] sm:$0xf]
        %v641 = vld [vmem:[%s220 + $0x28] sm:$0x1]
        %v642 = vld [vmem:[%s220 + $0x40] sm:$0xf]
        %v643 = vld [vmem:[%s220 + $0x48] sm:$0x1]
        %v644 = vld [vmem:[%s220 + $0x60] sm:$0xf]
        %v645 = vld [vmem:[%s220 + $0x68] sm:$0x1]
        %v646 = vld [vmem:[%s220 + $0x80] sm:$0xf]
        %v647 = vld [vmem:[%s220 + $0x88] sm:$0x1]
        %v648 = vld [vmem:[%s220 + $0xa0] sm:$0xf]
        %v649 = vld [vmem:[%s220 + $0xa8] sm:$0x1]
        %v650 = vld [vmem:[%s220 + $0xc0] sm:$0xf]
        %v651 = vld [vmem:[%s220 + $0xc8] sm:$0x1]
        %v652 = vld [vmem:[%s220 + $0xe0] sm:$0xf]
        %v653 = vld [vmem:[%s220 + $0xe8] sm:$0x1]
        %vm654 = vsmask.f32 3328
        %vm655 = vsmask.f32 7440
        %vm656 = vmor %vm654, %vm655
        %v658 = vshrl.u32 %v638, 16
        %v660 = vrot.slane %v658, 4
        %v661 = vshll.u32 %v638, 16
        %v663 = vrot.slane %v661, 5
        %v664 = vor.u32 %v660, %v663
        %v665 = vrot.slane %v664, 4
        %v667 = vshll.u32 %v639, 16
        %v669 = vrot.slane %v667, 5
        %v670 = vsel %vm656, %v665, %v669
        %v672 = vshrl.u32 %v640, 16
        %v674 = vrot.slane %v672, 4
        %v675 = vshll.u32 %v640, 16
        %v677 = vrot.slane %v675, 5
        %v678 = vor.u32 %v674, %v677
        %v679 = vrot.slane %v678, 4
        %v681 = vshll.u32 %v641, 16
        %v683 = vrot.slane %v681, 5
        %v684 = vsel %vm656, %v679, %v683
        %v686 = vshrl.u32 %v642, 16
        %v688 = vrot.slane %v686, 4
        %v689 = vshll.u32 %v642, 16
        %v691 = vrot.slane %v689, 5
        %v692 = vor.u32 %v688, %v691
        %v693 = vrot.slane %v692, 4
        %v695 = vshll.u32 %v643, 16
        %v697 = vrot.slane %v695, 5
        %v698 = vsel %vm656, %v693, %v697
        %v700 = vshrl.u32 %v644, 16
        %v702 = vrot.slane %v700, 4
        %v703 = vshll.u32 %v644, 16
        %v705 = vrot.slane %v703, 5
        %v706 = vor.u32 %v702, %v705
        %v707 = vrot.slane %v706, 4
        %v709 = vshll.u32 %v645, 16
        %v711 = vrot.slane %v709, 5
        %v712 = vsel %vm656, %v707, %v711
        %v714 = vshrl.u32 %v646, 16
        %v716 = vrot.slane %v714, 4
        %v717 = vshll.u32 %v646, 16
        %v719 = vrot.slane %v717, 5
        %v720 = vor.u32 %v716, %v719
        %v721 = vrot.slane %v720, 4
        %v723 = vshll.u32 %v647, 16
        %v725 = vrot.slane %v723, 5
        %v726 = vsel %vm656, %v721, %v725
        %v728 = vshrl.u32 %v648, 16
        %v730 = vrot.slane %v728, 4
        %v731 = vshll.u32 %v648, 16
        %v733 = vrot.slane %v731, 5
        %v734 = vor.u32 %v730, %v733
        %v735 = vrot.slane %v734, 4
        %v737 = vshll.u32 %v649, 16
        %v739 = vrot.slane %v737, 5
        %v740 = vsel %vm656, %v735, %v739
        %v742 = vshrl.u32 %v650, 16
        %v744 = vrot.slane %v742, 4
        %v745 = vshll.u32 %v650, 16
        %v747 = vrot.slane %v745, 5
        %v748 = vor.u32 %v744, %v747
        %v749 = vrot.slane %v748, 4
        %v751 = vshll.u32 %v651, 16
        %v753 = vrot.slane %v751, 5
        %v754 = vsel %vm656, %v749, %v753
        %v756 = vshrl.u32 %v652, 16
        %v758 = vrot.slane %v756, 4
        %v759 = vshll.u32 %v652, 16
        %v761 = vrot.slane %v759, 5
        %v762 = vor.u32 %v758, %v761
        %v763 = vrot.slane %v762, 4
        %v765 = vshll.u32 %v653, 16
        %v767 = vrot.slane %v765, 5
        %v768 = vsel %vm656, %v763, %v767
        %s769 = scalar_lea.vmem [#allocation2], 256
        %v770 = vld [vmem:[%s769] sm:$0xff]
        %v771 = vld [vmem:[%s769 + $0x8] sm:$0xff]
        %v772 = vld [vmem:[%s769 + $0x10] sm:$0xff]
        %v773 = vld [vmem:[%s769 + $0x18] sm:$0xff]
        %v774 = vld [vmem:[%s769 + $0x20] sm:$0xff]
        %v775 = vld [vmem:[%s769 + $0x28] sm:$0xff]
        %v776 = vld [vmem:[%s769 + $0x30] sm:$0xff]
        %v777 = vld [vmem:[%s769 + $0x38] sm:$0xff]
        %v778 = vld [vmem:[%s769 + $0x40] sm:$0xff]
        %v779 = vld [vmem:[%s769 + $0x48] sm:$0xff]
        %v780 = vld [vmem:[%s769 + $0x50] sm:$0xff]
        %v781 = vld [vmem:[%s769 + $0x58] sm:$0xff]
        %v782 = vld [vmem:[%s769 + $0x60] sm:$0xff]
        %v783 = vld [vmem:[%s769 + $0x68] sm:$0xff]
        %v784 = vld [vmem:[%s769 + $0x70] sm:$0xff]
        %v785 = vld [vmem:[%s769 + $0x78] sm:$0xff]
        %v786 = vunpack.c.l.b16 %v670
        %v787 = vunpack.c.l.b16 %v684
        %v788 = vunpack.c.l.b16 %v698
        %v789 = vunpack.c.l.b16 %v712
        %v790 = vunpack.c.l.b16 %v726
        %v791 = vunpack.c.l.b16 %v740
        %v792 = vunpack.c.l.b16 %v754
        %v793 = vunpack.c.l.b16 %v768
        %v794 = vpack.c.b16 %v787, %v786
        %v795 = vpack.c.b16 %v789, %v788
        %v796 = vpack.c.b16 %v791, %v790
        %v797 = vpack.c.b16 %v793, %v792
        %v818 = vunpack.c.l.b16 %v770
        %v819 = vunpack.c.h.b16 %v770
        %v820 = vunpack.c.l.b16 %v771
        %v821 = vunpack.c.h.b16 %v771
        %v822 = vunpack.c.l.b16 %v772
        %v823 = vunpack.c.h.b16 %v772
        %v824 = vunpack.c.l.b16 %v773
        %v825 = vunpack.c.h.b16 %v773
        %v826 = vunpack.c.l.b16 %v774
        %v827 = vunpack.c.h.b16 %v774
        %v828 = vunpack.c.l.b16 %v775
        %v829 = vunpack.c.h.b16 %v775
        %v830 = vunpack.c.l.b16 %v776
        %v831 = vunpack.c.h.b16 %v776
        %v832 = vunpack.c.l.b16 %v777
        %v833 = vunpack.c.h.b16 %v777
        %v834 = vunpack.c.l.b16 %v778
        %v835 = vunpack.c.h.b16 %v778
        %v836 = vunpack.c.l.b16 %v779
        %v837 = vunpack.c.h.b16 %v779
        %v838 = vunpack.c.l.b16 %v780
        %v839 = vunpack.c.h.b16 %v780
        %v840 = vunpack.c.l.b16 %v781
        %v841 = vunpack.c.h.b16 %v781
        %v842 = vunpack.c.l.b16 %v782
        %v843 = vunpack.c.h.b16 %v782
        %v844 = vunpack.c.l.b16 %v783
        %v845 = vunpack.c.h.b16 %v783
        %v846 = vunpack.c.l.b16 %v784
        %v847 = vunpack.c.h.b16 %v784
        %v848 = vunpack.c.l.b16 %v785
        %v849 = vunpack.c.h.b16 %v785
        %v850 = vpack.c.b16 %v820, %v818
        %v851 = vpack.c.b16 %v821, %v819
        %v852 = vpack.c.b16 %v824, %v822
        %v853 = vpack.c.b16 %v825, %v823
        %v854 = vpack.c.b16 %v828, %v826
        %v855 = vpack.c.b16 %v829, %v827
        %v856 = vpack.c.b16 %v832, %v830
        %v857 = vpack.c.b16 %v833, %v831
        %v858 = vpack.c.b16 %v836, %v834
        %v859 = vpack.c.b16 %v837, %v835
        %v860 = vpack.c.b16 %v840, %v838
        %v861 = vpack.c.b16 %v841, %v839
        %v862 = vpack.c.b16 %v844, %v842
        %v863 = vpack.c.b16 %v845, %v843
        %v864 = vpack.c.b16 %v848, %v846
        %v865 = vpack.c.b16 %v849, %v847
        %882 = vmatprep.subr.bf16.mxu0 %v851
        %883 = vmatpush1.bf16.msra.mxu0 %v850
        %884 = vmatprep.subr.bf16.mxu0 %v853
        %885 = vmatpush1.bf16.msra.mxu0 %v852
        %886 = vmatprep.subr.bf16.mxu0 %v855
        %887 = vmatpush1.bf16.msra.mxu0 %v854
        %888 = vmatprep.subr.bf16.mxu0 %v857
        %889 = vmatpush1.bf16.msra.mxu0 %v856
        %890 = vmatprep.subr.bf16.mxu0 %v859
        %891 = vmatpush1.bf16.msra.mxu0 %v858
        %892 = vmatprep.subr.bf16.mxu0 %v861
        %893 = vmatpush1.bf16.msra.mxu0 %v860
        %894 = vmatprep.subr.bf16.mxu0 %v863
        %895 = vmatpush1.bf16.msra.mxu0 %v862
        %896 = vmatprep.subr.bf16.mxu0 %v865
        %897 = vmatpush1.bf16.msra.mxu0 %v864
        %898 = vmatprep.subr.bf16.mxu0 0
        %899 = vmatpush1.bf16.msra.mxu0 0
        %900 = vmatprep.subr.bf16.mxu0 0
        %901 = vmatpush1.bf16.msra.mxu0 0
        %902 = vmatprep.subr.bf16.mxu0 0
        %903 = vmatpush1.bf16.msra.mxu0 0
        %904 = vmatprep.subr.bf16.mxu0 0
        %905 = vmatpush1.bf16.msra.mxu0 0
        %906 = vmatprep.subr.bf16.mxu0 0
        %907 = vmatpush1.bf16.msra.mxu0 0
        %908 = vmatprep.subr.bf16.mxu0 0
        %909 = vmatpush1.bf16.msra.mxu0 0
        %910 = vmatprep.subr.bf16.mxu0 0
        %911 = vmatpush1.bf16.msra.mxu0 0
        %912 = vmatprep.subr.bf16.mxu0 0
        %913 = vmatpush1.bf16.msra.mxu0 0
        %914 = vmatprep.mubr.bf16.mxu0 0
        %915 = vmatmul.mubr.bf16.gmra.mrb[0].mxu0 %v794
        %v916 = vpop.f32.mrb[0].mxu0
        %v917 = vadd.f32 0.0, %v916
        %v918 = vpop.f32.mrb[0].mxu0
        %v919 = vadd.f32 0.0, %v918
        %v920 = vpop.f32.mrb[0].mxu0
        %v921 = vadd.f32 0.0, %v920
        %v922 = vpop.f32.mrb[0].mxu0
        %v923 = vadd.f32 0.0, %v922
        %924 = vmatprep.mubr.bf16.mxu0 0
        %925 = vmatmul.mubr.bf16.gmra.mrb[0].mxu0 %v795
        %v926 = vpop.f32.mrb[0].mxu0
        %v927 = vadd.f32 0.0, %v926
        %v928 = vpop.f32.mrb[0].mxu0
        %v929 = vadd.f32 0.0, %v928
        %v930 = vpop.f32.mrb[0].mxu0
        %v931 = vadd.f32 0.0, %v930
        %v932 = vpop.f32.mrb[0].mxu0
        %v933 = vadd.f32 0.0, %v932
        %934 = vmatprep.mubr.bf16.mxu0 0
        %935 = vmatmul.mubr.bf16.gmra.mrb[0].mxu0 %v796
        %v936 = vpop.f32.mrb[0].mxu0
        %v937 = vadd.f32 0.0, %v936
        %v938 = vpop.f32.mrb[0].mxu0
        %v939 = vadd.f32 0.0, %v938
        %v940 = vpop.f32.mrb[0].mxu0
        %v941 = vadd.f32 0.0, %v940
        %v942 = vpop.f32.mrb[0].mxu0
        %v943 = vadd.f32 0.0, %v942
        %944 = vmatprep.mubr.bf16.mxu0 0
        %945 = vmatmul.mubr.bf16.gmra.mrb[0].mxu0 %v797
        %v946 = vpop.f32.mrb[0].mxu0
        %v947 = vadd.f32 0.0, %v946
        %v948 = vpop.f32.mrb[0].mxu0
        %v949 = vadd.f32 0.0, %v948
        %v950 = vpop.f32.mrb[0].mxu0
        %v951 = vadd.f32 0.0, %v950
        %v952 = vpop.f32.mrb[0].mxu0
        %v953 = vadd.f32 0.0, %v952
        %954 = vdwg.mxu0
        %v955 = vadd.f32 %v600, %v917
        %v956 = vadd.f32 %v602, %v919
        %v957 = vadd.f32 %v604, %v921
        %v958 = vadd.f32 %v606, %v923
        %v959 = vadd.f32 %v610, %v927
        %v960 = vadd.f32 %v612, %v929
        %v961 = vadd.f32 %v614, %v931
        %v962 = vadd.f32 %v616, %v933
        %v963 = vadd.f32 %v620, %v937
        %v964 = vadd.f32 %v622, %v939
        %v965 = vadd.f32 %v624, %v941
        %v966 = vadd.f32 %v626, %v943
        %v967 = vadd.f32 %v630, %v947
        %v968 = vadd.f32 %v632, %v949
        %v969 = vadd.f32 %v634, %v951
        %v970 = vadd.f32 %v636, %v953
        %s971 = scalar_lea.vmem %s220, 16
        %v972 = vld [vmem:[%s971] sm:$0xf]
        %v973 = vld [vmem:[%s971 + $0x20] sm:$0xf]
        %v974 = vld [vmem:[%s971 + $0x40] sm:$0xf]
        %v975 = vld [vmem:[%s971 + $0x60] sm:$0xf]
        %v976 = vld [vmem:[%s971 + $0x80] sm:$0xf]
        %v977 = vld [vmem:[%s971 + $0xa0] sm:$0xf]
        %v978 = vld [vmem:[%s971 + $0xc0] sm:$0xf]
        %v979 = vld [vmem:[%s971 + $0xe0] sm:$0xf]
        %s980 = scalar_lea.vmem [#allocation2], 384
        %v981 = vld [vmem:[%s980] sm:$0xff]
        %v982 = vld [vmem:[%s980 + $0x8] sm:$0xff]
        %v983 = vld [vmem:[%s980 + $0x10] sm:$0xff]
        %v984 = vld [vmem:[%s980 + $0x18] sm:$0xff]
        %v985 = vld [vmem:[%s980 + $0x20] sm:$0xff]
        %v986 = vld [vmem:[%s980 + $0x28] sm:$0xff]
        %v987 = vld [vmem:[%s980 + $0x30] sm:$0xff]
        %v988 = vld [vmem:[%s980 + $0x38] sm:$0xff]
        %v989 = vld [vmem:[%s980 + $0x40] sm:$0xff]
        %v990 = vld [vmem:[%s980 + $0x48] sm:$0xff]
        %v991 = vld [vmem:[%s980 + $0x50] sm:$0xff]
        %v992 = vld [vmem:[%s980 + $0x58] sm:$0xff]
        %v993 = vld [vmem:[%s980 + $0x60] sm:$0xff]
        %v994 = vld [vmem:[%s980 + $0x68] sm:$0xff]
        %v995 = vld [vmem:[%s980 + $0x70] sm:$0xff]
        %v996 = vld [vmem:[%s980 + $0x78] sm:$0xff]
        %v1005 = vunpack.c.l.b16 %v972
        %v1006 = vunpack.c.l.b16 %v973
        %v1007 = vunpack.c.l.b16 %v974
        %v1008 = vunpack.c.l.b16 %v975
        %v1009 = vunpack.c.l.b16 %v976
        %v1010 = vunpack.c.l.b16 %v977
        %v1011 = vunpack.c.l.b16 %v978
        %v1012 = vunpack.c.l.b16 %v979
        %v1013 = vpack.c.b16 %v1006, %v1005
        %v1014 = vpack.c.b16 %v1008, %v1007
        %v1015 = vpack.c.b16 %v1010, %v1009
        %v1016 = vpack.c.b16 %v1012, %v1011
        %v1037 = vunpack.c.l.b16 %v981
        %v1038 = vunpack.c.h.b16 %v981
        %v1039 = vunpack.c.l.b16 %v982
        %v1040 = vunpack.c.h.b16 %v982
        %v1041 = vunpack.c.l.b16 %v983
        %v1042 = vunpack.c.h.b16 %v983
        %v1043 = vunpack.c.l.b16 %v984
        %v1044 = vunpack.c.h.b16 %v984
        %v1045 = vunpack.c.l.b16 %v985
        %v1046 = vunpack.c.h.b16 %v985
        %v1047 = vunpack.c.l.b16 %v986
        %v1048 = vunpack.c.h.b16 %v986
        %v1049 = vunpack.c.l.b16 %v987
        %v1050 = vunpack.c.h.b16 %v987
        %v1051 = vunpack.c.l.b16 %v988
        %v1052 = vunpack.c.h.b16 %v988
        %v1053 = vunpack.c.l.b16 %v989
        %v1054 = vunpack.c.h.b16 %v989
        %v1055 = vunpack.c.l.b16 %v990
        %v1056 = vunpack.c.h.b16 %v990
        %v1057 = vunpack.c.l.b16 %v991
        %v1058 = vunpack.c.h.b16 %v991
        %v1059 = vunpack.c.l.b16 %v992
        %v1060 = vunpack.c.h.b16 %v992
        %v1061 = vunpack.c.l.b16 %v993
        %v1062 = vunpack.c.h.b16 %v993
        %v1063 = vunpack.c.l.b16 %v994
        %v1064 = vunpack.c.h.b16 %v994
        %v1065 = vunpack.c.l.b16 %v995
        %v1066 = vunpack.c.h.b16 %v995
        %v1067 = vunpack.c.l.b16 %v996
        %v1068 = vunpack.c.h.b16 %v996
        %v1069 = vpack.c.b16 %v1039, %v1037
        %v1070 = vpack.c.b16 %v1040, %v1038
        %v1071 = vpack.c.b16 %v1043, %v1041
        %v1072 = vpack.c.b16 %v1044, %v1042
        %v1073 = vpack.c.b16 %v1047, %v1045
        %v1074 = vpack.c.b16 %v1048, %v1046
        %v1075 = vpack.c.b16 %v1051, %v1049
        %v1076 = vpack.c.b16 %v1052, %v1050
        %v1077 = vpack.c.b16 %v1055, %v1053
        %v1078 = vpack.c.b16 %v1056, %v1054
        %v1079 = vpack.c.b16 %v1059, %v1057
        %v1080 = vpack.c.b16 %v1060, %v1058
        %v1081 = vpack.c.b16 %v1063, %v1061
        %v1082 = vpack.c.b16 %v1064, %v1062
        %v1083 = vpack.c.b16 %v1067, %v1065
        %v1084 = vpack.c.b16 %v1068, %v1066
        %1101 = vmatprep.subr.bf16.mxu0 %v1070
        %1102 = vmatpush1.bf16.msra.mxu0 %v1069
        %1103 = vmatprep.subr.bf16.mxu0 %v1072
        %1104 = vmatpush1.bf16.msra.mxu0 %v1071
        %1105 = vmatprep.subr.bf16.mxu0 %v1074
        %1106 = vmatpush1.bf16.msra.mxu0 %v1073
        %1107 = vmatprep.subr.bf16.mxu0 %v1076
        %1108 = vmatpush1.bf16.msra.mxu0 %v1075
        %1109 = vmatprep.subr.bf16.mxu0 %v1078
        %1110 = vmatpush1.bf16.msra.mxu0 %v1077
        %1111 = vmatprep.subr.bf16.mxu0 %v1080
        %1112 = vmatpush1.bf16.msra.mxu0 %v1079
        %1113 = vmatprep.subr.bf16.mxu0 %v1082
        %1114 = vmatpush1.bf16.msra.mxu0 %v1081
        %1115 = vmatprep.subr.bf16.mxu0 %v1084
        %1116 = vmatpush1.bf16.msra.mxu0 %v1083
        %1117 = vmatprep.subr.bf16.mxu0 0
        %1118 = vmatpush1.bf16.msra.mxu0 0
        %1119 = vmatprep.subr.bf16.mxu0 0
        %1120 = vmatpush1.bf16.msra.mxu0 0
        %1121 = vmatprep.subr.bf16.mxu0 0
        %1122 = vmatpush1.bf16.msra.mxu0 0
        %1123 = vmatprep.subr.bf16.mxu0 0
        %1124 = vmatpush1.bf16.msra.mxu0 0
        %1125 = vmatprep.subr.bf16.mxu0 0
        %1126 = vmatpush1.bf16.msra.mxu0 0
        %1127 = vmatprep.subr.bf16.mxu0 0
        %1128 = vmatpush1.bf16.msra.mxu0 0
        %1129 = vmatprep.subr.bf16.mxu0 0
        %1130 = vmatpush1.bf16.msra.mxu0 0
        %1131 = vmatprep.subr.bf16.mxu0 0
        %1132 = vmatpush1.bf16.msra.mxu0 0
        %1133 = vmatprep.mubr.bf16.mxu0 0
        %1134 = vmatmul.mubr.bf16.gmra.mrb[0].mxu0 %v1013
        %v1135 = vpop.f32.mrb[0].mxu0
        %v1136 = vadd.f32 0.0, %v1135
        %v1137 = vpop.f32.mrb[0].mxu0
        %v1138 = vadd.f32 0.0, %v1137
        %v1139 = vpop.f32.mrb[0].mxu0
        %v1140 = vadd.f32 0.0, %v1139
        %v1141 = vpop.f32.mrb[0].mxu0
        %v1142 = vadd.f32 0.0, %v1141
        %1143 = vmatprep.mubr.bf16.mxu0 0
        %1144 = vmatmul.mubr.bf16.gmra.mrb[0].mxu0 %v1014
        %v1145 = vpop.f32.mrb[0].mxu0
        %v1146 = vadd.f32 0.0, %v1145
        %v1147 = vpop.f32.mrb[0].mxu0
        %v1148 = vadd.f32 0.0, %v1147
        %v1149 = vpop.f32.mrb[0].mxu0
        %v1150 = vadd.f32 0.0, %v1149
        %v1151 = vpop.f32.mrb[0].mxu0
        %v1152 = vadd.f32 0.0, %v1151
        %1153 = vmatprep.mubr.bf16.mxu0 0
        %1154 = vmatmul.mubr.bf16.gmra.mrb[0].mxu0 %v1015
        %v1155 = vpop.f32.mrb[0].mxu0
        %v1156 = vadd.f32 0.0, %v1155
        %v1157 = vpop.f32.mrb[0].mxu0
        %v1158 = vadd.f32 0.0, %v1157
        %v1159 = vpop.f32.mrb[0].mxu0
        %v1160 = vadd.f32 0.0, %v1159
        %v1161 = vpop.f32.mrb[0].mxu0
        %v1162 = vadd.f32 0.0, %v1161
        %1163 = vmatprep.mubr.bf16.mxu0 0
        %1164 = vmatmul.mubr.bf16.gmra.mrb[0].mxu0 %v1016
        %v1165 = vpop.f32.mrb[0].mxu0
        %v1166 = vadd.f32 0.0, %v1165
        %v1167 = vpop.f32.mrb[0].mxu0
        %v1168 = vadd.f32 0.0, %v1167
        %v1169 = vpop.f32.mrb[0].mxu0
        %v1170 = vadd.f32 0.0, %v1169
        %v1171 = vpop.f32.mrb[0].mxu0
        %v1172 = vadd.f32 0.0, %v1171
        %1173 = vdwg.mxu0
        %v1174 = vadd.f32 %v955, %v1136
        %v1175 = vadd.f32 %v956, %v1138
        %v1176 = vadd.f32 %v957, %v1140
        %v1177 = vadd.f32 %v958, %v1142
        %v1178 = vadd.f32 %v959, %v1146
        %v1179 = vadd.f32 %v960, %v1148
        %v1180 = vadd.f32 %v961, %v1150
        %v1181 = vadd.f32 %v962, %v1152
        %v1182 = vadd.f32 %v963, %v1156
        %v1183 = vadd.f32 %v964, %v1158
        %v1184 = vadd.f32 %v965, %v1160
        %v1185 = vadd.f32 %v966, %v1162
        %v1186 = vadd.f32 %v967, %v1166
        %v1187 = vadd.f32 %v968, %v1168
        %v1188 = vadd.f32 %v969, %v1170
        %v1189 = vadd.f32 %v970, %v1172
        %v1190 = vld [vmem:[%s971 + $0x4] sm:$0xf]
        %v1191 = vld [vmem:[%s971 + $0x24] sm:$0xf]
        %v1192 = vld [vmem:[%s971 + $0x44] sm:$0xf]
        %v1193 = vld [vmem:[%s971 + $0x64] sm:$0xf]
        %v1194 = vld [vmem:[%s971 + $0x84] sm:$0xf]
        %v1195 = vld [vmem:[%s971 + $0xa4] sm:$0xf]
        %v1196 = vld [vmem:[%s971 + $0xc4] sm:$0xf]
        %v1197 = vld [vmem:[%s971 + $0xe4] sm:$0xf]
        %s1198 = scalar_lea.vmem [#allocation2], 512
        %v1199 = vld [vmem:[%s1198] sm:$0xff]
        %v1200 = vld [vmem:[%s1198 + $0x8] sm:$0xff]
        %v1201 = vld [vmem:[%s1198 + $0x10] sm:$0xff]
        %v1202 = vld [vmem:[%s1198 + $0x18] sm:$0xff]
        %v1203 = vld [vmem:[%s1198 + $0x20] sm:$0xff]
        %v1204 = vld [vmem:[%s1198 + $0x28] sm:$0xff]
        %v1205 = vld [vmem:[%s1198 + $0x30] sm:$0xff]
        %v1206 = vld [vmem:[%s1198 + $0x38] sm:$0xff]
        %v1207 = vld [vmem:[%s1198 + $0x40] sm:$0xff]
        %v1208 = vld [vmem:[%s1198 + $0x48] sm:$0xff]
        %v1209 = vld [vmem:[%s1198 + $0x50] sm:$0xff]
        %v1210 = vld [vmem:[%s1198 + $0x58] sm:$0xff]
        %v1211 = vld [vmem:[%s1198 + $0x60] sm:$0xff]
        %v1212 = vld [vmem:[%s1198 + $0x68] sm:$0xff]
        %v1213 = vld [vmem:[%s1198 + $0x70] sm:$0xff]
        %v1214 = vld [vmem:[%s1198 + $0x78] sm:$0xff]
        %v1223 = vunpack.c.l.b16 %v1190
        %v1224 = vunpack.c.l.b16 %v1191
        %v1225 = vunpack.c.l.b16 %v1192
        %v1226 = vunpack.c.l.b16 %v1193
        %v1227 = vunpack.c.l.b16 %v1194
        %v1228 = vunpack.c.l.b16 %v1195
        %v1229 = vunpack.c.l.b16 %v1196
        %v1230 = vunpack.c.l.b16 %v1197
        %v1231 = vpack.c.b16 %v1224, %v1223
        %v1232 = vpack.c.b16 %v1226, %v1225
        %v1233 = vpack.c.b16 %v1228, %v1227
        %v1234 = vpack.c.b16 %v1230, %v1229
        %v1255 = vunpack.c.l.b16 %v1199
        %v1256 = vunpack.c.h.b16 %v1199
        %v1257 = vunpack.c.l.b16 %v1200
        %v1258 = vunpack.c.h.b16 %v1200
        %v1259 = vunpack.c.l.b16 %v1201
        %v1260 = vunpack.c.h.b16 %v1201
        %v1261 = vunpack.c.l.b16 %v1202
        %v1262 = vunpack.c.h.b16 %v1202
        %v1263 = vunpack.c.l.b16 %v1203
        %v1264 = vunpack.c.h.b16 %v1203
        %v1265 = vunpack.c.l.b16 %v1204
        %v1266 = vunpack.c.h.b16 %v1204
        %v1267 = vunpack.c.l.b16 %v1205
        %v1268 = vunpack.c.h.b16 %v1205
        %v1269 = vunpack.c.l.b16 %v1206
        %v1270 = vunpack.c.h.b16 %v1206
        %v1271 = vunpack.c.l.b16 %v1207
        %v1272 = vunpack.c.h.b16 %v1207
        %v1273 = vunpack.c.l.b16 %v1208
        %v1274 = vunpack.c.h.b16 %v1208
        %v1275 = vunpack.c.l.b16 %v1209
        %v1276 = vunpack.c.h.b16 %v1209
        %v1277 = vunpack.c.l.b16 %v1210
        %v1278 = vunpack.c.h.b16 %v1210
        %v1279 = vunpack.c.l.b16 %v1211
        %v1280 = vunpack.c.h.b16 %v1211
        %v1281 = vunpack.c.l.b16 %v1212
        %v1282 = vunpack.c.h.b16 %v1212
        %v1283 = vunpack.c.l.b16 %v1213
        %v1284 = vunpack.c.h.b16 %v1213
        %v1285 = vunpack.c.l.b16 %v1214
        %v1286 = vunpack.c.h.b16 %v1214
        %v1287 = vpack.c.b16 %v1257, %v1255
        %v1288 = vpack.c.b16 %v1258, %v1256
        %v1289 = vpack.c.b16 %v1261, %v1259
        %v1290 = vpack.c.b16 %v1262, %v1260
        %v1291 = vpack.c.b16 %v1265, %v1263
        %v1292 = vpack.c.b16 %v1266, %v1264
        %v1293 = vpack.c.b16 %v1269, %v1267
        %v1294 = vpack.c.b16 %v1270, %v1268
        %v1295 = vpack.c.b16 %v1273, %v1271
        %v1296 = vpack.c.b16 %v1274, %v1272
        %v1297 = vpack.c.b16 %v1277, %v1275
        %v1298 = vpack.c.b16 %v1278, %v1276
        %v1299 = vpack.c.b16 %v1281, %v1279
        %v1300 = vpack.c.b16 %v1282, %v1280
        %v1301 = vpack.c.b16 %v1285, %v1283
        %v1302 = vpack.c.b16 %v1286, %v1284
        %1319 = vmatprep.subr.bf16.mxu0 %v1288
        %1320 = vmatpush1.bf16.msra.mxu0 %v1287
        %1321 = vmatprep.subr.bf16.mxu0 %v1290
        %1322 = vmatpush1.bf16.msra.mxu0 %v1289
        %1323 = vmatprep.subr.bf16.mxu0 %v1292
        %1324 = vmatpush1.bf16.msra.mxu0 %v1291
        %1325 = vmatprep.subr.bf16.mxu0 %v1294
        %1326 = vmatpush1.bf16.msra.mxu0 %v1293
        %1327 = vmatprep.subr.bf16.mxu0 %v1296
        %1328 = vmatpush1.bf16.msra.mxu0 %v1295
        %1329 = vmatprep.subr.bf16.mxu0 %v1298
        %1330 = vmatpush1.bf16.msra.mxu0 %v1297
        %1331 = vmatprep.subr.bf16.mxu0 %v1300
        %1332 = vmatpush1.bf16.msra.mxu0 %v1299
        %1333 = vmatprep.subr.bf16.mxu0 %v1302
        %1334 = vmatpush1.bf16.msra.mxu0 %v1301
        %1335 = vmatprep.subr.bf16.mxu0 0
        %1336 = vmatpush1.bf16.msra.mxu0 0
        %1337 = vmatprep.subr.bf16.mxu0 0
        %1338 = vmatpush1.bf16.msra.mxu0 0
        %1339 = vmatprep.subr.bf16.mxu0 0
        %1340 = vmatpush1.bf16.msra.mxu0 0
        %1341 = vmatprep.subr.bf16.mxu0 0
        %1342 = vmatpush1.bf16.msra.mxu0 0
        %1343 = vmatprep.subr.bf16.mxu0 0
        %1344 = vmatpush1.bf16.msra.mxu0 0
        %1345 = vmatprep.subr.bf16.mxu0 0
        %1346 = vmatpush1.bf16.msra.mxu0 0
        %1347 = vmatprep.subr.bf16.mxu0 0
        %1348 = vmatpush1.bf16.msra.mxu0 0
        %1349 = vmatprep.subr.bf16.mxu0 0
        %1350 = vmatpush1.bf16.msra.mxu0 0
        %1351 = vmatprep.mubr.bf16.mxu0 0
        %1352 = vmatmul.mubr.bf16.gmra.mrb[0].mxu0 %v1231
        %v1353 = vpop.f32.mrb[0].mxu0
        %v1354 = vadd.f32 0.0, %v1353
        %v1355 = vpop.f32.mrb[0].mxu0
        %v1356 = vadd.f32 0.0, %v1355
        %v1357 = vpop.f32.mrb[0].mxu0
        %v1358 = vadd.f32 0.0, %v1357
        %v1359 = vpop.f32.mrb[0].mxu0
        %v1360 = vadd.f32 0.0, %v1359
        %1361 = vmatprep.mubr.bf16.mxu0 0
        %1362 = vmatmul.mubr.bf16.gmra.mrb[0].mxu0 %v1232
        %v1363 = vpop.f32.mrb[0].mxu0
        %v1364 = vadd.f32 0.0, %v1363
        %v1365 = vpop.f32.mrb[0].mxu0
        %v1366 = vadd.f32 0.0, %v1365
        %v1367 = vpop.f32.mrb[0].mxu0
        %v1368 = vadd.f32 0.0, %v1367
        %v1369 = vpop.f32.mrb[0].mxu0
        %v1370 = vadd.f32 0.0, %v1369
        %1371 = vmatprep.mubr.bf16.mxu0 0
        %1372 = vmatmul.mubr.bf16.gmra.mrb[0].mxu0 %v1233
        %v1373 = vpop.f32.mrb[0].mxu0
        %v1374 = vadd.f32 0.0, %v1373
        %v1375 = vpop.f32.mrb[0].mxu0
        %v1376 = vadd.f32 0.0, %v1375
        %v1377 = vpop.f32.mrb[0].mxu0
        %v1378 = vadd.f32 0.0, %v1377
        %v1379 = vpop.f32.mrb[0].mxu0
        %v1380 = vadd.f32 0.0, %v1379
        %1381 = vmatprep.mubr.bf16.mxu0 0
        %1382 = vmatmul.mubr.bf16.gmra.mrb[0].mxu0 %v1234
        %v1383 = vpop.f32.mrb[0].mxu0
        %v1384 = vadd.f32 0.0, %v1383
        %v1385 = vpop.f32.mrb[0].mxu0
        %v1386 = vadd.f32 0.0, %v1385
        %v1387 = vpop.f32.mrb[0].mxu0
        %v1388 = vadd.f32 0.0, %v1387
        %v1389 = vpop.f32.mrb[0].mxu0
        %v1390 = vadd.f32 0.0, %v1389
        %1391 = vdwg.mxu0
        %v1392 = vadd.f32 %v1174, %v1354
        %v1393 = vadd.f32 %v1175, %v1356
        %v1394 = vadd.f32 %v1176, %v1358
        %v1395 = vadd.f32 %v1177, %v1360
        %v1396 = vadd.f32 %v1178, %v1364
        %v1397 = vadd.f32 %v1179, %v1366
        %v1398 = vadd.f32 %v1180, %v1368
        %v1399 = vadd.f32 %v1181, %v1370
        %v1400 = vadd.f32 %v1182, %v1374
        %v1401 = vadd.f32 %v1183, %v1376
        %v1402 = vadd.f32 %v1184, %v1378
        %v1403 = vadd.f32 %v1185, %v1380
        %v1404 = vadd.f32 %v1186, %v1384
        %v1405 = vadd.f32 %v1187, %v1386
        %v1406 = vadd.f32 %v1188, %v1388
        %v1407 = vadd.f32 %v1189, %v1390
        %v1408 = vld [vmem:[%s971] sm:$0xf]
        %v1409 = vld [vmem:[%s971 + $0x8] sm:$0x1]
        %v1410 = vld [vmem:[%s971 + $0x20] sm:$0xf]
        %v1411 = vld [vmem:[%s971 + $0x28] sm:$0x1]
        %v1412 = vld [vmem:[%s971 + $0x40] sm:$0xf]
        %v1413 = vld [vmem:[%s971 + $0x48] sm:$0x1]
        %v1414 = vld [vmem:[%s971 + $0x60] sm:$0xf]
        %v1415 = vld [vmem:[%s971 + $0x68] sm:$0x1]
        %v1416 = vld [vmem:[%s971 + $0x80] sm:$0xf]
        %v1417 = vld [vmem:[%s971 + $0x88] sm:$0x1]
        %v1418 = vld [vmem:[%s971 + $0xa0] sm:$0xf]
        %v1419 = vld [vmem:[%s971 + $0xa8] sm:$0x1]
        %v1420 = vld [vmem:[%s971 + $0xc0] sm:$0xf]
        %v1421 = vld [vmem:[%s971 + $0xc8] sm:$0x1]
        %v1422 = vld [vmem:[%s971 + $0xe0] sm:$0xf]
        %v1423 = vld [vmem:[%s971 + $0xe8] sm:$0x1]
        %v1425 = vshrl.u32 %v1408, 16
        %v1427 = vrot.slane %v1425, 4
        %v1428 = vshll.u32 %v1408, 16
        %v1430 = vrot.slane %v1428, 5
        %v1431 = vor.u32 %v1427, %v1430
        %v1432 = vrot.slane %v1431, 4
        %v1434 = vshll.u32 %v1409, 16
        %v1436 = vrot.slane %v1434, 5
        %v1437 = vsel %vm656, %v1432, %v1436
        %v1439 = vshrl.u32 %v1410, 16
        %v1441 = vrot.slane %v1439, 4
        %v1442 = vshll.u32 %v1410, 16
        %v1444 = vrot.slane %v1442, 5
        %v1445 = vor.u32 %v1441, %v1444
        %v1446 = vrot.slane %v1445, 4
        %v1448 = vshll.u32 %v1411, 16
        %v1450 = vrot.slane %v1448, 5
        %v1451 = vsel %vm656, %v1446, %v1450
        %v1453 = vshrl.u32 %v1412, 16
        %v1455 = vrot.slane %v1453, 4
        %v1456 = vshll.u32 %v1412, 16
        %v1458 = vrot.slane %v1456, 5
        %v1459 = vor.u32 %v1455, %v1458
        %v1460 = vrot.slane %v1459, 4
        %v1462 = vshll.u32 %v1413, 16
        %v1464 = vrot.slane %v1462, 5
        %v1465 = vsel %vm656, %v1460, %v1464
        %v1467 = vshrl.u32 %v1414, 16
        %v1469 = vrot.slane %v1467, 4
        %v1470 = vshll.u32 %v1414, 16
        %v1472 = vrot.slane %v1470, 5
        %v1473 = vor.u32 %v1469, %v1472
        %v1474 = vrot.slane %v1473, 4
        %v1476 = vshll.u32 %v1415, 16
        %v1478 = vrot.slane %v1476, 5
        %v1479 = vsel %vm656, %v1474, %v1478
        %v1481 = vshrl.u32 %v1416, 16
        %v1483 = vrot.slane %v1481, 4
        %v1484 = vshll.u32 %v1416, 16
        %v1486 = vrot.slane %v1484, 5
        %v1487 = vor.u32 %v1483, %v1486
        %v1488 = vrot.slane %v1487, 4
        %v1490 = vshll.u32 %v1417, 16
        %v1492 = vrot.slane %v1490, 5
        %v1493 = vsel %vm656, %v1488, %v1492
        %v1495 = vshrl.u32 %v1418, 16
        %v1497 = vrot.slane %v1495, 4
        %v1498 = vshll.u32 %v1418, 16
        %v1500 = vrot.slane %v1498, 5
        %v1501 = vor.u32 %v1497, %v1500
        %v1502 = vrot.slane %v1501, 4
        %v1504 = vshll.u32 %v1419, 16
        %v1506 = vrot.slane %v1504, 5
        %v1507 = vsel %vm656, %v1502, %v1506
        %v1509 = vshrl.u32 %v1420, 16
        %v1511 = vrot.slane %v1509, 4
        %v1512 = vshll.u32 %v1420, 16
        %v1514 = vrot.slane %v1512, 5
        %v1515 = vor.u32 %v1511, %v1514
        %v1516 = vrot.slane %v1515, 4
        %v1518 = vshll.u32 %v1421, 16
        %v1520 = vrot.slane %v1518, 5
        %v1521 = vsel %vm656, %v1516, %v1520
        %v1523 = vshrl.u32 %v1422, 16
        %v1525 = vrot.slane %v1523, 4
        %v1526 = vshll.u32 %v1422, 16
        %v1528 = vrot.slane %v1526, 5
        %v1529 = vor.u32 %v1525, %v1528
        %v1530 = vrot.slane %v1529, 4
        %v1532 = vshll.u32 %v1423, 16
        %v1534 = vrot.slane %v1532, 5
        %v1535 = vsel %vm656, %v1530, %v1534
        %s1536 = scalar_lea.vmem [#allocation2], 640
        %v1537 = vld [vmem:[%s1536] sm:$0xff]
        %v1538 = vld [vmem:[%s1536 + $0x8] sm:$0xff]
        %v1539 = vld [vmem:[%s1536 + $0x10] sm:$0xff]
        %v1540 = vld [vmem:[%s1536 + $0x18] sm:$0xff]
        %v1541 = vld [vmem:[%s1536 + $0x20] sm:$0xff]
        %v1542 = vld [vmem:[%s1536 + $0x28] sm:$0xff]
        %v1543 = vld [vmem:[%s1536 + $0x30] sm:$0xff]
        %v1544 = vld [vmem:[%s1536 + $0x38] sm:$0xff]
        %v1545 = vld [vmem:[%s1536 + $0x40] sm:$0xff]
        %v1546 = vld [vmem:[%s1536 + $0x48] sm:$0xff]
        %v1547 = vld [vmem:[%s1536 + $0x50] sm:$0xff]
        %v1548 = vld [vmem:[%s1536 + $0x58] sm:$0xff]
        %v1549 = vld [vmem:[%s1536 + $0x60] sm:$0xff]
        %v1550 = vld [vmem:[%s1536 + $0x68] sm:$0xff]
        %v1551 = vld [vmem:[%s1536 + $0x70] sm:$0xff]
        %v1552 = vld [vmem:[%s1536 + $0x78] sm:$0xff]
        %v1553 = vunpack.c.l.b16 %v1437
        %v1554 = vunpack.c.l.b16 %v1451
        %v1555 = vunpack.c.l.b16 %v1465
        %v1556 = vunpack.c.l.b16 %v1479
        %v1557 = vunpack.c.l.b16 %v1493
        %v1558 = vunpack.c.l.b16 %v1507
        %v1559 = vunpack.c.l.b16 %v1521
        %v1560 = vunpack.c.l.b16 %v1535
        %v1561 = vpack.c.b16 %v1554, %v1553
        %v1562 = vpack.c.b16 %v1556, %v1555
        %v1563 = vpack.c.b16 %v1558, %v1557
        %v1564 = vpack.c.b16 %v1560, %v1559
        %v1585 = vunpack.c.l.b16 %v1537
        %v1586 = vunpack.c.h.b16 %v1537
        %v1587 = vunpack.c.l.b16 %v1538
        %v1588 = vunpack.c.h.b16 %v1538
        %v1589 = vunpack.c.l.b16 %v1539
        %v1590 = vunpack.c.h.b16 %v1539
        %v1591 = vunpack.c.l.b16 %v1540
        %v1592 = vunpack.c.h.b16 %v1540
        %v1593 = vunpack.c.l.b16 %v1541
        %v1594 = vunpack.c.h.b16 %v1541
        %v1595 = vunpack.c.l.b16 %v1542
        %v1596 = vunpack.c.h.b16 %v1542
        %v1597 = vunpack.c.l.b16 %v1543
        %v1598 = vunpack.c.h.b16 %v1543
        %v1599 = vunpack.c.l.b16 %v1544
        %v1600 = vunpack.c.h.b16 %v1544
        %v1601 = vunpack.c.l.b16 %v1545
        %v1602 = vunpack.c.h.b16 %v1545
        %v1603 = vunpack.c.l.b16 %v1546
        %v1604 = vunpack.c.h.b16 %v1546
        %v1605 = vunpack.c.l.b16 %v1547
        %v1606 = vunpack.c.h.b16 %v1547
        %v1607 = vunpack.c.l.b16 %v1548
        %v1608 = vunpack.c.h.b16 %v1548
        %v1609 = vunpack.c.l.b16 %v1549
        %v1610 = vunpack.c.h.b16 %v1549
        %v1611 = vunpack.c.l.b16 %v1550
        %v1612 = vunpack.c.h.b16 %v1550
        %v1613 = vunpack.c.l.b16 %v1551
        %v1614 = vunpack.c.h.b16 %v1551
        %v1615 = vunpack.c.l.b16 %v1552
        %v1616 = vunpack.c.h.b16 %v1552
        %v1617 = vpack.c.b16 %v1587, %v1585
        %v1618 = vpack.c.b16 %v1588, %v1586
        %v1619 = vpack.c.b16 %v1591, %v1589
        %v1620 = vpack.c.b16 %v1592, %v1590
        %v1621 = vpack.c.b16 %v1595, %v1593
        %v1622 = vpack.c.b16 %v1596, %v1594
        %v1623 = vpack.c.b16 %v1599, %v1597
        %v1624 = vpack.c.b16 %v1600, %v1598
        %v1625 = vpack.c.b16 %v1603, %v1601
        %v1626 = vpack.c.b16 %v1604, %v1602
        %v1627 = vpack.c.b16 %v1607, %v1605
        %v1628 = vpack.c.b16 %v1608, %v1606
        %v1629 = vpack.c.b16 %v1611, %v1609
        %v1630 = vpack.c.b16 %v1612, %v1610
        %v1631 = vpack.c.b16 %v1615, %v1613
        %v1632 = vpack.c.b16 %v1616, %v1614
        %1649 = vmatprep.subr.bf16.mxu0 %v1618
        %1650 = vmatpush1.bf16.msra.mxu0 %v1617
        %1651 = vmatprep.subr.bf16.mxu0 %v1620
        %1652 = vmatpush1.bf16.msra.mxu0 %v1619
        %1653 = vmatprep.subr.bf16.mxu0 %v1622
        %1654 = vmatpush1.bf16.msra.mxu0 %v1621
        %1655 = vmatprep.subr.bf16.mxu0 %v1624
        %1656 = vmatpush1.bf16.msra.mxu0 %v1623
        %1657 = vmatprep.subr.bf16.mxu0 %v1626
        %1658 = vmatpush1.bf16.msra.mxu0 %v1625
        %1659 = vmatprep.subr.bf16.mxu0 %v1628
        %1660 = vmatpush1.bf16.msra.mxu0 %v1627
        %1661 = vmatprep.subr.bf16.mxu0 %v1630
        %1662 = vmatpush1.bf16.msra.mxu0 %v1629
        %1663 = vmatprep.subr.bf16.mxu0 %v1632
        %1664 = vmatpush1.bf16.msra.mxu0 %v1631
        %1665 = vmatprep.subr.bf16.mxu0 0
        %1666 = vmatpush1.bf16.msra.mxu0 0
        %1667 = vmatprep.subr.bf16.mxu0 0
        %1668 = vmatpush1.bf16.msra.mxu0 0
        %1669 = vmatprep.subr.bf16.mxu0 0
        %1670 = vmatpush1.bf16.msra.mxu0 0
        %1671 = vmatprep.subr.bf16.mxu0 0
        %1672 = vmatpush1.bf16.msra.mxu0 0
        %1673 = vmatprep.subr.bf16.mxu0 0
        %1674 = vmatpush1.bf16.msra.mxu0 0
        %1675 = vmatprep.subr.bf16.mxu0 0
        %1676 = vmatpush1.bf16.msra.mxu0 0
        %1677 = vmatprep.subr.bf16.mxu0 0
        %1678 = vmatpush1.bf16.msra.mxu0 0
        %1679 = vmatprep.subr.bf16.mxu0 0
        %1680 = vmatpush1.bf16.msra.mxu0 0
        %1681 = vmatprep.mubr.bf16.mxu0 0
        %1682 = vmatmul.mubr.bf16.gmra.mrb[0].mxu0 %v1561
        %v1683 = vpop.f32.mrb[0].mxu0
        %v1684 = vadd.f32 0.0, %v1683
        %v1685 = vpop.f32.mrb[0].mxu0
        %v1686 = vadd.f32 0.0, %v1685
        %v1687 = vpop.f32.mrb[0].mxu0
        %v1688 = vadd.f32 0.0, %v1687
        %v1689 = vpop.f32.mrb[0].mxu0
        %v1690 = vadd.f32 0.0, %v1689
        %1691 = vmatprep.mubr.bf16.mxu0 0
        %1692 = vmatmul.mubr.bf16.gmra.mrb[0].mxu0 %v1562
        %v1693 = vpop.f32.mrb[0].mxu0
        %v1694 = vadd.f32 0.0, %v1693
        %v1695 = vpop.f32.mrb[0].mxu0
        %v1696 = vadd.f32 0.0, %v1695
        %v1697 = vpop.f32.mrb[0].mxu0
        %v1698 = vadd.f32 0.0, %v1697
        %v1699 = vpop.f32.mrb[0].mxu0
        %v1700 = vadd.f32 0.0, %v1699
        %1701 = vmatprep.mubr.bf16.mxu0 0
        %1702 = vmatmul.mubr.bf16.gmra.mrb[0].mxu0 %v1563
        %v1703 = vpop.f32.mrb[0].mxu0
        %v1704 = vadd.f32 0.0, %v1703
        %v1705 = vpop.f32.mrb[0].mxu0
        %v1706 = vadd.f32 0.0, %v1705
        %v1707 = vpop.f32.mrb[0].mxu0
        %v1708 = vadd.f32 0.0, %v1707
        %v1709 = vpop.f32.mrb[0].mxu0
        %v1710 = vadd.f32 0.0, %v1709
        %1711 = vmatprep.mubr.bf16.mxu0 0
        %1712 = vmatmul.mubr.bf16.gmra.mrb[0].mxu0 %v1564
        %v1713 = vpop.f32.mrb[0].mxu0
        %v1714 = vadd.f32 0.0, %v1713
        %v1715 = vpop.f32.mrb[0].mxu0
        %v1716 = vadd.f32 0.0, %v1715
        %v1717 = vpop.f32.mrb[0].mxu0
        %v1718 = vadd.f32 0.0, %v1717
        %v1719 = vpop.f32.mrb[0].mxu0
        %v1720 = vadd.f32 0.0, %v1719
        %1721 = vdwg.mxu0
        %v1722 = vadd.f32 %v1392, %v1684
        %v1723 = vadd.f32 %v1393, %v1686
        %v1724 = vadd.f32 %v1394, %v1688
        %v1725 = vadd.f32 %v1395, %v1690
        %v1726 = vadd.f32 %v1396, %v1694
        %v1727 = vadd.f32 %v1397, %v1696
        %v1728 = vadd.f32 %v1398, %v1698
        %v1729 = vadd.f32 %v1399, %v1700
        %v1730 = vadd.f32 %v1400, %v1704
        %v1731 = vadd.f32 %v1401, %v1706
        %v1732 = vadd.f32 %v1402, %v1708
        %v1733 = vadd.f32 %v1403, %v1710
        %v1734 = vadd.f32 %v1404, %v1714
        %v1735 = vadd.f32 %v1405, %v1716
        %v1736 = vadd.f32 %v1406, %v1718
        %v1737 = vadd.f32 %v1407, %v1720
        %s1738 = scalar_lea.vmem %s220, 32
        %v1739 = vld [vmem:[%s1738] sm:$0xf]
        %v1740 = vld [vmem:[%s1738 + $0x20] sm:$0xf]
        %v1741 = vld [vmem:[%s1738 + $0x40] sm:$0xf]
        %v1742 = vld [vmem:[%s1738 + $0x60] sm:$0xf]
        %v1743 = vld [vmem:[%s1738 + $0x80] sm:$0xf]
        %v1744 = vld [vmem:[%s1738 + $0xa0] sm:$0xf]
        %v1745 = vld [vmem:[%s1738 + $0xc0] sm:$0xf]
        %v1746 = vld [vmem:[%s1738 + $0xe0] sm:$0xf]
        %s1747 = scalar_lea.vmem [#allocation2], 768
        %v1748 = vld [vmem:[%s1747] sm:$0xff]
        %v1749 = vld [vmem:[%s1747 + $0x8] sm:$0xff]
        %v1750 = vld [vmem:[%s1747 + $0x10] sm:$0xff]
        %v1751 = vld [vmem:[%s1747 + $0x18] sm:$0xff]
        %v1752 = vld [vmem:[%s1747 + $0x20] sm:$0xff]
        %v1753 = vld [vmem:[%s1747 + $0x28] sm:$0xff]
        %v1754 = vld [vmem:[%s1747 + $0x30] sm:$0xff]
        %v1755 = vld [vmem:[%s1747 + $0x38] sm:$0xff]
        %v1756 = vld [vmem:[%s1747 + $0x40] sm:$0xff]
        %v1757 = vld [vmem:[%s1747 + $0x48] sm:$0xff]
        %v1758 = vld [vmem:[%s1747 + $0x50] sm:$0xff]
        %v1759 = vld [vmem:[%s1747 + $0x58] sm:$0xff]
        %v1760 = vld [vmem:[%s1747 + $0x60] sm:$0xff]
        %v1761 = vld [vmem:[%s1747 + $0x68] sm:$0xff]
        %v1762 = vld [vmem:[%s1747 + $0x70] sm:$0xff]
        %v1763 = vld [vmem:[%s1747 + $0x78] sm:$0xff]
        %v1772 = vunpack.c.l.b16 %v1739
        %v1773 = vunpack.c.l.b16 %v1740
        %v1774 = vunpack.c.l.b16 %v1741
        %v1775 = vunpack.c.l.b16 %v1742
        %v1776 = vunpack.c.l.b16 %v1743
        %v1777 = vunpack.c.l.b16 %v1744
        %v1778 = vunpack.c.l.b16 %v1745
        %v1779 = vunpack.c.l.b16 %v1746
        %v1780 = vpack.c.b16 %v1773, %v1772
        %v1781 = vpack.c.b16 %v1775, %v1774
        %v1782 = vpack.c.b16 %v1777, %v1776
        %v1783 = vpack.c.b16 %v1779, %v1778
        %v1804 = vunpack.c.l.b16 %v1748
        %v1805 = vunpack.c.h.b16 %v1748
        %v1806 = vunpack.c.l.b16 %v1749
        %v1807 = vunpack.c.h.b16 %v1749
        %v1808 = vunpack.c.l.b16 %v1750
        %v1809 = vunpack.c.h.b16 %v1750
        %v1810 = vunpack.c.l.b16 %v1751
        %v1811 = vunpack.c.h.b16 %v1751
        %v1812 = vunpack.c.l.b16 %v1752
        %v1813 = vunpack.c.h.b16 %v1752
        %v1814 = vunpack.c.l.b16 %v1753
        %v1815 = vunpack.c.h.b16 %v1753
        %v1816 = vunpack.c.l.b16 %v1754
        %v1817 = vunpack.c.h.b16 %v1754
        %v1818 = vunpack.c.l.b16 %v1755
        %v1819 = vunpack.c.h.b16 %v1755
        %v1820 = vunpack.c.l.b16 %v1756
        %v1821 = vunpack.c.h.b16 %v1756
        %v1822 = vunpack.c.l.b16 %v1757
        %v1823 = vunpack.c.h.b16 %v1757
        %v1824 = vunpack.c.l.b16 %v1758
        %v1825 = vunpack.c.h.b16 %v1758
        %v1826 = vunpack.c.l.b16 %v1759
        %v1827 = vunpack.c.h.b16 %v1759
        %v1828 = vunpack.c.l.b16 %v1760
        %v1829 = vunpack.c.h.b16 %v1760
        %v1830 = vunpack.c.l.b16 %v1761
        %v1831 = vunpack.c.h.b16 %v1761
        %v1832 = vunpack.c.l.b16 %v1762
        %v1833 = vunpack.c.h.b16 %v1762
        %v1834 = vunpack.c.l.b16 %v1763
        %v1835 = vunpack.c.h.b16 %v1763
        %v1836 = vpack.c.b16 %v1806, %v1804
        %v1837 = vpack.c.b16 %v1807, %v1805
        %v1838 = vpack.c.b16 %v1810, %v1808
        %v1839 = vpack.c.b16 %v1811, %v1809
        %v1840 = vpack.c.b16 %v1814, %v1812
        %v1841 = vpack.c.b16 %v1815, %v1813
        %v1842 = vpack.c.b16 %v1818, %v1816
        %v1843 = vpack.c.b16 %v1819, %v1817
        %v1844 = vpack.c.b16 %v1822, %v1820
        %v1845 = vpack.c.b16 %v1823, %v1821
        %v1846 = vpack.c.b16 %v1826, %v1824
        %v1847 = vpack.c.b16 %v1827, %v1825
        %v1848 = vpack.c.b16 %v1830, %v1828
        %v1849 = vpack.c.b16 %v1831, %v1829
        %v1850 = vpack.c.b16 %v1834, %v1832
        %v1851 = vpack.c.b16 %v1835, %v1833
        %1868 = vmatprep.subr.bf16.mxu0 %v1837
        %1869 = vmatpush1.bf16.msra.mxu0 %v1836
        %1870 = vmatprep.subr.bf16.mxu0 %v1839
        %1871 = vmatpush1.bf16.msra.mxu0 %v1838
        %1872 = vmatprep.subr.bf16.mxu0 %v1841
        %1873 = vmatpush1.bf16.msra.mxu0 %v1840
        %1874 = vmatprep.subr.bf16.mxu0 %v1843
        %1875 = vmatpush1.bf16.msra.mxu0 %v1842
        %1876 = vmatprep.subr.bf16.mxu0 %v1845
        %1877 = vmatpush1.bf16.msra.mxu0 %v1844
        %1878 = vmatprep.subr.bf16.mxu0 %v1847
        %1879 = vmatpush1.bf16.msra.mxu0 %v1846
        %1880 = vmatprep.subr.bf16.mxu0 %v1849
        %1881 = vmatpush1.bf16.msra.mxu0 %v1848
        %1882 = vmatprep.subr.bf16.mxu0 %v1851
        %1883 = vmatpush1.bf16.msra.mxu0 %v1850
        %1884 = vmatprep.subr.bf16.mxu0 0
        %1885 = vmatpush1.bf16.msra.mxu0 0
        %1886 = vmatprep.subr.bf16.mxu0 0
        %1887 = vmatpush1.bf16.msra.mxu0 0
        %1888 = vmatprep.subr.bf16.mxu0 0
        %1889 = vmatpush1.bf16.msra.mxu0 0
        %1890 = vmatprep.subr.bf16.mxu0 0
        %1891 = vmatpush1.bf16.msra.mxu0 0
        %1892 = vmatprep.subr.bf16.mxu0 0
        %1893 = vmatpush1.bf16.msra.mxu0 0
        %1894 = vmatprep.subr.bf16.mxu0 0
        %1895 = vmatpush1.bf16.msra.mxu0 0
        %1896 = vmatprep.subr.bf16.mxu0 0
        %1897 = vmatpush1.bf16.msra.mxu0 0
        %1898 = vmatprep.subr.bf16.mxu0 0
        %1899 = vmatpush1.bf16.msra.mxu0 0
        %1900 = vmatprep.mubr.bf16.mxu0 0
        %1901 = vmatmul.mubr.bf16.gmra.mrb[0].mxu0 %v1780
        %v1902 = vpop.f32.mrb[0].mxu0
        %v1903 = vadd.f32 0.0, %v1902
        %v1904 = vpop.f32.mrb[0].mxu0
        %v1905 = vadd.f32 0.0, %v1904
        %v1906 = vpop.f32.mrb[0].mxu0
        %v1907 = vadd.f32 0.0, %v1906
        %v1908 = vpop.f32.mrb[0].mxu0
        %v1909 = vadd.f32 0.0, %v1908
        %1910 = vmatprep.mubr.bf16.mxu0 0
        %1911 = vmatmul.mubr.bf16.gmra.mrb[0].mxu0 %v1781
        %v1912 = vpop.f32.mrb[0].mxu0
        %v1913 = vadd.f32 0.0, %v1912
        %v1914 = vpop.f32.mrb[0].mxu0
        %v1915 = vadd.f32 0.0, %v1914
        %v1916 = vpop.f32.mrb[0].mxu0
        %v1917 = vadd.f32 0.0, %v1916
        %v1918 = vpop.f32.mrb[0].mxu0
        %v1919 = vadd.f32 0.0, %v1918
        %1920 = vmatprep.mubr.bf16.mxu0 0
        %1921 = vmatmul.mubr.bf16.gmra.mrb[0].mxu0 %v1782
        %v1922 = vpop.f32.mrb[0].mxu0
        %v1923 = vadd.f32 0.0, %v1922
        %v1924 = vpop.f32.mrb[0].mxu0
        %v1925 = vadd.f32 0.0, %v1924
        %v1926 = vpop.f32.mrb[0].mxu0
        %v1927 = vadd.f32 0.0, %v1926
        %v1928 = vpop.f32.mrb[0].mxu0
        %v1929 = vadd.f32 0.0, %v1928
        %1930 = vmatprep.mubr.bf16.mxu0 0
        %1931 = vmatmul.mubr.bf16.gmra.mrb[0].mxu0 %v1783
        %v1932 = vpop.f32.mrb[0].mxu0
        %v1933 = vadd.f32 0.0, %v1932
        %v1934 = vpop.f32.mrb[0].mxu0
        %v1935 = vadd.f32 0.0, %v1934
        %v1936 = vpop.f32.mrb[0].mxu0
        %v1937 = vadd.f32 0.0, %v1936
        %v1938 = vpop.f32.mrb[0].mxu0
        %v1939 = vadd.f32 0.0, %v1938
        %1940 = vdwg.mxu0
        %v1941 = vadd.f32 %v1722, %v1903
        %v1942 = vadd.f32 %v1723, %v1905
        %v1943 = vadd.f32 %v1724, %v1907
        %v1944 = vadd.f32 %v1725, %v1909
        %v1945 = vadd.f32 %v1726, %v1913
        %v1946 = vadd.f32 %v1727, %v1915
        %v1947 = vadd.f32 %v1728, %v1917
        %v1948 = vadd.f32 %v1729, %v1919
        %v1949 = vadd.f32 %v1730, %v1923
        %v1950 = vadd.f32 %v1731, %v1925
        %v1951 = vadd.f32 %v1732, %v1927
        %v1952 = vadd.f32 %v1733, %v1929
        %v1953 = vadd.f32 %v1734, %v1933
        %v1954 = vadd.f32 %v1735, %v1935
        %v1955 = vadd.f32 %v1736, %v1937
        %v1956 = vadd.f32 %v1737, %v1939
        %v1957 = vld [vmem:[%s1738 + $0x4] sm:$0xf]
        %v1958 = vld [vmem:[%s1738 + $0x24] sm:$0xf]
        %v1959 = vld [vmem:[%s1738 + $0x44] sm:$0xf]
        %v1960 = vld [vmem:[%s1738 + $0x64] sm:$0xf]
        %v1961 = vld [vmem:[%s1738 + $0x84] sm:$0xf]
        %v1962 = vld [vmem:[%s1738 + $0xa4] sm:$0xf]
        %v1963 = vld [vmem:[%s1738 + $0xc4] sm:$0xf]
        %v1964 = vld [vmem:[%s1738 + $0xe4] sm:$0xf]
        %s1965 = scalar_lea.vmem [#allocation2], 896
        %v1966 = vld [vmem:[%s1965] sm:$0xff]
        %v1967 = vld [vmem:[%s1965 + $0x8] sm:$0xff]
        %v1968 = vld [vmem:[%s1965 + $0x10] sm:$0xff]
        %v1969 = vld [vmem:[%s1965 + $0x18] sm:$0xff]
        %v1970 = vld [vmem:[%s1965 + $0x20] sm:$0xff]
        %v1971 = vld [vmem:[%s1965 + $0x28] sm:$0xff]
        %v1972 = vld [vmem:[%s1965 + $0x30] sm:$0xff]
        %v1973 = vld [vmem:[%s1965 + $0x38] sm:$0xff]
        %v1974 = vld [vmem:[%s1965 + $0x40] sm:$0xff]
        %v1975 = vld [vmem:[%s1965 + $0x48] sm:$0xff]
        %v1976 = vld [vmem:[%s1965 + $0x50] sm:$0xff]
        %v1977 = vld [vmem:[%s1965 + $0x58] sm:$0xff]
        %v1978 = vld [vmem:[%s1965 + $0x60] sm:$0xff]
        %v1979 = vld [vmem:[%s1965 + $0x68] sm:$0xff]
        %v1980 = vld [vmem:[%s1965 + $0x70] sm:$0xff]
        %v1981 = vld [vmem:[%s1965 + $0x78] sm:$0xff]
        %v1990 = vunpack.c.l.b16 %v1957
        %v1991 = vunpack.c.l.b16 %v1958
        %v1992 = vunpack.c.l.b16 %v1959
        %v1993 = vunpack.c.l.b16 %v1960
        %v1994 = vunpack.c.l.b16 %v1961
        %v1995 = vunpack.c.l.b16 %v1962
        %v1996 = vunpack.c.l.b16 %v1963
        %v1997 = vunpack.c.l.b16 %v1964
        %v1998 = vpack.c.b16 %v1991, %v1990
        %v1999 = vpack.c.b16 %v1993, %v1992
        %v2000 = vpack.c.b16 %v1995, %v1994
        %v2001 = vpack.c.b16 %v1997, %v1996
        %v2022 = vunpack.c.l.b16 %v1966
        %v2023 = vunpack.c.h.b16 %v1966
        %v2024 = vunpack.c.l.b16 %v1967
        %v2025 = vunpack.c.h.b16 %v1967
        %v2026 = vunpack.c.l.b16 %v1968
        %v2027 = vunpack.c.h.b16 %v1968
        %v2028 = vunpack.c.l.b16 %v1969
        %v2029 = vunpack.c.h.b16 %v1969
        %v2030 = vunpack.c.l.b16 %v1970
        %v2031 = vunpack.c.h.b16 %v1970
        %v2032 = vunpack.c.l.b16 %v1971
        %v2033 = vunpack.c.h.b16 %v1971
        %v2034 = vunpack.c.l.b16 %v1972
        %v2035 = vunpack.c.h.b16 %v1972
        %v2036 = vunpack.c.l.b16 %v1973
        %v2037 = vunpack.c.h.b16 %v1973
        %v2038 = vunpack.c.l.b16 %v1974
        %v2039 = vunpack.c.h.b16 %v1974
        %v2040 = vunpack.c.l.b16 %v1975
        %v2041 = vunpack.c.h.b16 %v1975
        %v2042 = vunpack.c.l.b16 %v1976
        %v2043 = vunpack.c.h.b16 %v1976
        %v2044 = vunpack.c.l.b16 %v1977
        %v2045 = vunpack.c.h.b16 %v1977
        %v2046 = vunpack.c.l.b16 %v1978
        %v2047 = vunpack.c.h.b16 %v1978
        %v2048 = vunpack.c.l.b16 %v1979
        %v2049 = vunpack.c.h.b16 %v1979
        %v2050 = vunpack.c.l.b16 %v1980
        %v2051 = vunpack.c.h.b16 %v1980
        %v2052 = vunpack.c.l.b16 %v1981
        %v2053 = vunpack.c.h.b16 %v1981
        %v2054 = vpack.c.b16 %v2024, %v2022
        %v2055 = vpack.c.b16 %v2025, %v2023
        %v2056 = vpack.c.b16 %v2028, %v2026
        %v2057 = vpack.c.b16 %v2029, %v2027
        %v2058 = vpack.c.b16 %v2032, %v2030
        %v2059 = vpack.c.b16 %v2033, %v2031
        %v2060 = vpack.c.b16 %v2036, %v2034
        %v2061 = vpack.c.b16 %v2037, %v2035
        %v2062 = vpack.c.b16 %v2040, %v2038
        %v2063 = vpack.c.b16 %v2041, %v2039
        %v2064 = vpack.c.b16 %v2044, %v2042
        %v2065 = vpack.c.b16 %v2045, %v2043
        %v2066 = vpack.c.b16 %v2048, %v2046
        %v2067 = vpack.c.b16 %v2049, %v2047
        %v2068 = vpack.c.b16 %v2052, %v2050
        %v2069 = vpack.c.b16 %v2053, %v2051
        %2086 = vmatprep.subr.bf16.mxu0 %v2055
        %2087 = vmatpush1.bf16.msra.mxu0 %v2054
        %2088 = vmatprep.subr.bf16.mxu0 %v2057
        %2089 = vmatpush1.bf16.msra.mxu0 %v2056
        %2090 = vmatprep.subr.bf16.mxu0 %v2059
        %2091 = vmatpush1.bf16.msra.mxu0 %v2058
        %2092 = vmatprep.subr.bf16.mxu0 %v2061
        %2093 = vmatpush1.bf16.msra.mxu0 %v2060
        %2094 = vmatprep.subr.bf16.mxu0 %v2063
        %2095 = vmatpush1.bf16.msra.mxu0 %v2062
        %2096 = vmatprep.subr.bf16.mxu0 %v2065
        %2097 = vmatpush1.bf16.msra.mxu0 %v2064
        %2098 = vmatprep.subr.bf16.mxu0 %v2067
        %2099 = vmatpush1.bf16.msra.mxu0 %v2066
        %2100 = vmatprep.subr.bf16.mxu0 %v2069
        %2101 = vmatpush1.bf16.msra.mxu0 %v2068
        %2102 = vmatprep.subr.bf16.mxu0 0
        %2103 = vmatpush1.bf16.msra.mxu0 0
        %2104 = vmatprep.subr.bf16.mxu0 0
        %2105 = vmatpush1.bf16.msra.mxu0 0
        %2106 = vmatprep.subr.bf16.mxu0 0
        %2107 = vmatpush1.bf16.msra.mxu0 0
        %2108 = vmatprep.subr.bf16.mxu0 0
        %2109 = vmatpush1.bf16.msra.mxu0 0
        %2110 = vmatprep.subr.bf16.mxu0 0
        %2111 = vmatpush1.bf16.msra.mxu0 0
        %2112 = vmatprep.subr.bf16.mxu0 0
        %2113 = vmatpush1.bf16.msra.mxu0 0
        %2114 = vmatprep.subr.bf16.mxu0 0
        %2115 = vmatpush1.bf16.msra.mxu0 0
        %2116 = vmatprep.subr.bf16.mxu0 0
        %2117 = vmatpush1.bf16.msra.mxu0 0
        %2118 = vmatprep.mubr.bf16.mxu0 0
        %2119 = vmatmul.mubr.bf16.gmra.mrb[0].mxu0 %v1998
        %v2120 = vpop.f32.mrb[0].mxu0
        %v2121 = vadd.f32 0.0, %v2120
        %v2122 = vpop.f32.mrb[0].mxu0
        %v2123 = vadd.f32 0.0, %v2122
        %v2124 = vpop.f32.mrb[0].mxu0
        %v2125 = vadd.f32 0.0, %v2124
        %v2126 = vpop.f32.mrb[0].mxu0
        %v2127 = vadd.f32 0.0, %v2126
        %2128 = vmatprep.mubr.bf16.mxu0 0
        %2129 = vmatmul.mubr.bf16.gmra.mrb[0].mxu0 %v1999
        %v2130 = vpop.f32.mrb[0].mxu0
        %v2131 = vadd.f32 0.0, %v2130
        %v2132 = vpop.f32.mrb[0].mxu0
        %v2133 = vadd.f32 0.0, %v2132
        %v2134 = vpop.f32.mrb[0].mxu0
        %v2135 = vadd.f32 0.0, %v2134
        %v2136 = vpop.f32.mrb[0].mxu0
        %v2137 = vadd.f32 0.0, %v2136
        %2138 = vmatprep.mubr.bf16.mxu0 0
        %2139 = vmatmul.mubr.bf16.gmra.mrb[0].mxu0 %v2000
        %v2140 = vpop.f32.mrb[0].mxu0
        %v2141 = vadd.f32 0.0, %v2140
        %v2142 = vpop.f32.mrb[0].mxu0
        %v2143 = vadd.f32 0.0, %v2142
        %v2144 = vpop.f32.mrb[0].mxu0
        %v2145 = vadd.f32 0.0, %v2144
        %v2146 = vpop.f32.mrb[0].mxu0
        %v2147 = vadd.f32 0.0, %v2146
        %2148 = vmatprep.mubr.bf16.mxu0 0
        %2149 = vmatmul.mubr.bf16.gmra.mrb[0].mxu0 %v2001
        %v2150 = vpop.f32.mrb[0].mxu0
        %v2151 = vadd.f32 0.0, %v2150
        %v2152 = vpop.f32.mrb[0].mxu0
        %v2153 = vadd.f32 0.0, %v2152
        %v2154 = vpop.f32.mrb[0].mxu0
        %v2155 = vadd.f32 0.0, %v2154
        %v2156 = vpop.f32.mrb[0].mxu0
        %v2157 = vadd.f32 0.0, %v2156
        %2158 = vdwg.mxu0
        %v2159 = vadd.f32 %v1941, %v2121
        %v2160 = vadd.f32 %v1942, %v2123
        %v2161 = vadd.f32 %v1943, %v2125
        %v2162 = vadd.f32 %v1944, %v2127
        %v2163 = vadd.f32 %v1945, %v2131
        %v2164 = vadd.f32 %v1946, %v2133
        %v2165 = vadd.f32 %v1947, %v2135
        %v2166 = vadd.f32 %v1948, %v2137
        %v2167 = vadd.f32 %v1949, %v2141
        %v2168 = vadd.f32 %v1950, %v2143
        %v2169 = vadd.f32 %v1951, %v2145
        %v2170 = vadd.f32 %v1952, %v2147
        %v2171 = vadd.f32 %v1953, %v2151
        %v2172 = vadd.f32 %v1954, %v2153
        %v2173 = vadd.f32 %v1955, %v2155
        %v2174 = vadd.f32 %v1956, %v2157
        %v2175 = vld [vmem:[%s1738] sm:$0xf]
        %v2176 = vld [vmem:[%s1738 + $0x8] sm:$0x1]
        %v2177 = vld [vmem:[%s1738 + $0x20] sm:$0xf]
        %v2178 = vld [vmem:[%s1738 + $0x28] sm:$0x1]
        %v2179 = vld [vmem:[%s1738 + $0x40] sm:$0xf]
        %v2180 = vld [vmem:[%s1738 + $0x48] sm:$0x1]
        %v2181 = vld [vmem:[%s1738 + $0x60] sm:$0xf]
        %v2182 = vld [vmem:[%s1738 + $0x68] sm:$0x1]
        %v2183 = vld [vmem:[%s1738 + $0x80] sm:$0xf]
        %v2184 = vld [vmem:[%s1738 + $0x88] sm:$0x1]
        %v2185 = vld [vmem:[%s1738 + $0xa0] sm:$0xf]
        %v2186 = vld [vmem:[%s1738 + $0xa8] sm:$0x1]
        %v2187 = vld [vmem:[%s1738 + $0xc0] sm:$0xf]
        %v2188 = vld [vmem:[%s1738 + $0xc8] sm:$0x1]
        %v2189 = vld [vmem:[%s1738 + $0xe0] sm:$0xf]
        %v2190 = vld [vmem:[%s1738 + $0xe8] sm:$0x1]
        %v2192 = vshrl.u32 %v2175, 16
        %v2194 = vrot.slane %v2192, 4
        %v2195 = vshll.u32 %v2175, 16
        %v2197 = vrot.slane %v2195, 5
        %v2198 = vor.u32 %v2194, %v2197
        %v2199 = vrot.slane %v2198, 4
        %v2201 = vshll.u32 %v2176, 16
        %v2203 = vrot.slane %v2201, 5
        %v2204 = vsel %vm656, %v2199, %v2203
        %v2206 = vshrl.u32 %v2177, 16
        %v2208 = vrot.slane %v2206, 4
        %v2209 = vshll.u32 %v2177, 16
        %v2211 = vrot.slane %v2209, 5
        %v2212 = vor.u32 %v2208, %v2211
        %v2213 = vrot.slane %v2212, 4
        %v2215 = vshll.u32 %v2178, 16
        %v2217 = vrot.slane %v2215, 5
        %v2218 = vsel %vm656, %v2213, %v2217
        %v2220 = vshrl.u32 %v2179, 16
        %v2222 = vrot.slane %v2220, 4
        %v2223 = vshll.u32 %v2179, 16
        %v2225 = vrot.slane %v2223, 5
        %v2226 = vor.u32 %v2222, %v2225
        %v2227 = vrot.slane %v2226, 4
        %v2229 = vshll.u32 %v2180, 16
        %v2231 = vrot.slane %v2229, 5
        %v2232 = vsel %vm656, %v2227, %v2231
        %v2234 = vshrl.u32 %v2181, 16
        %v2236 = vrot.slane %v2234, 4
        %v2237 = vshll.u32 %v2181, 16
        %v2239 = vrot.slane %v2237, 5
        %v2240 = vor.u32 %v2236, %v2239
        %v2241 = vrot.slane %v2240, 4
        %v2243 = vshll.u32 %v2182, 16
        %v2245 = vrot.slane %v2243, 5
        %v2246 = vsel %vm656, %v2241, %v2245
        %v2248 = vshrl.u32 %v2183, 16
        %v2250 = vrot.slane %v2248, 4
        %v2251 = vshll.u32 %v2183, 16
        %v2253 = vrot.slane %v2251, 5
        %v2254 = vor.u32 %v2250, %v2253
        %v2255 = vrot.slane %v2254, 4
        %v2257 = vshll.u32 %v2184, 16
        %v2259 = vrot.slane %v2257, 5
        %v2260 = vsel %vm656, %v2255, %v2259
        %v2262 = vshrl.u32 %v2185, 16
        %v2264 = vrot.slane %v2262, 4
        %v2265 = vshll.u32 %v2185, 16
        %v2267 = vrot.slane %v2265, 5
        %v2268 = vor.u32 %v2264, %v2267
        %v2269 = vrot.slane %v2268, 4
        %v2271 = vshll.u32 %v2186, 16
        %v2273 = vrot.slane %v2271, 5
        %v2274 = vsel %vm656, %v2269, %v2273
        %v2276 = vshrl.u32 %v2187, 16
        %v2278 = vrot.slane %v2276, 4
        %v2279 = vshll.u32 %v2187, 16
        %v2281 = vrot.slane %v2279, 5
        %v2282 = vor.u32 %v2278, %v2281
        %v2283 = vrot.slane %v2282, 4
        %v2285 = vshll.u32 %v2188, 16
        %v2287 = vrot.slane %v2285, 5
        %v2288 = vsel %vm656, %v2283, %v2287
        %v2290 = vshrl.u32 %v2189, 16
        %v2292 = vrot.slane %v2290, 4
        %v2293 = vshll.u32 %v2189, 16
        %v2295 = vrot.slane %v2293, 5
        %v2296 = vor.u32 %v2292, %v2295
        %v2297 = vrot.slane %v2296, 4
        %v2299 = vshll.u32 %v2190, 16
        %v2301 = vrot.slane %v2299, 5
        %v2302 = vsel %vm656, %v2297, %v2301
        %s2303 = scalar_lea.vmem [#allocation2], 1024
        %v2304 = vld [vmem:[%s2303] sm:$0xff]
        %v2305 = vld [vmem:[%s2303 + $0x8] sm:$0xff]
        %v2306 = vld [vmem:[%s2303 + $0x10] sm:$0xff]
        %v2307 = vld [vmem:[%s2303 + $0x18] sm:$0xff]
        %v2308 = vld [vmem:[%s2303 + $0x20] sm:$0xff]
        %v2309 = vld [vmem:[%s2303 + $0x28] sm:$0xff]
        %v2310 = vld [vmem:[%s2303 + $0x30] sm:$0xff]
        %v2311 = vld [vmem:[%s2303 + $0x38] sm:$0xff]
        %v2312 = vld [vmem:[%s2303 + $0x40] sm:$0xff]
        %v2313 = vld [vmem:[%s2303 + $0x48] sm:$0xff]
        %v2314 = vld [vmem:[%s2303 + $0x50] sm:$0xff]
        %v2315 = vld [vmem:[%s2303 + $0x58] sm:$0xff]
        %v2316 = vld [vmem:[%s2303 + $0x60] sm:$0xff]
        %v2317 = vld [vmem:[%s2303 + $0x68] sm:$0xff]
        %v2318 = vld [vmem:[%s2303 + $0x70] sm:$0xff]
        %v2319 = vld [vmem:[%s2303 + $0x78] sm:$0xff]
        %v2320 = vunpack.c.l.b16 %v2204
        %v2321 = vunpack.c.l.b16 %v2218
        %v2322 = vunpack.c.l.b16 %v2232
        %v2323 = vunpack.c.l.b16 %v2246
        %v2324 = vunpack.c.l.b16 %v2260
        %v2325 = vunpack.c.l.b16 %v2274
        %v2326 = vunpack.c.l.b16 %v2288
        %v2327 = vunpack.c.l.b16 %v2302
        %v2328 = vpack.c.b16 %v2321, %v2320
        %v2329 = vpack.c.b16 %v2323, %v2322
        %v2330 = vpack.c.b16 %v2325, %v2324
        %v2331 = vpack.c.b16 %v2327, %v2326
        %v2352 = vunpack.c.l.b16 %v2304
        %v2353 = vunpack.c.h.b16 %v2304
        %v2354 = vunpack.c.l.b16 %v2305
        %v2355 = vunpack.c.h.b16 %v2305
        %v2356 = vunpack.c.l.b16 %v2306
        %v2357 = vunpack.c.h.b16 %v2306
        %v2358 = vunpack.c.l.b16 %v2307
        %v2359 = vunpack.c.h.b16 %v2307
        %v2360 = vunpack.c.l.b16 %v2308
        %v2361 = vunpack.c.h.b16 %v2308
        %v2362 = vunpack.c.l.b16 %v2309
        %v2363 = vunpack.c.h.b16 %v2309
        %v2364 = vunpack.c.l.b16 %v2310
        %v2365 = vunpack.c.h.b16 %v2310
        %v2366 = vunpack.c.l.b16 %v2311
        %v2367 = vunpack.c.h.b16 %v2311
        %v2368 = vunpack.c.l.b16 %v2312
        %v2369 = vunpack.c.h.b16 %v2312
        %v2370 = vunpack.c.l.b16 %v2313
        %v2371 = vunpack.c.h.b16 %v2313
        %v2372 = vunpack.c.l.b16 %v2314
        %v2373 = vunpack.c.h.b16 %v2314
        %v2374 = vunpack.c.l.b16 %v2315
        %v2375 = vunpack.c.h.b16 %v2315
        %v2376 = vunpack.c.l.b16 %v2316
        %v2377 = vunpack.c.h.b16 %v2316
        %v2378 = vunpack.c.l.b16 %v2317
        %v2379 = vunpack.c.h.b16 %v2317
        %v2380 = vunpack.c.l.b16 %v2318
        %v2381 = vunpack.c.h.b16 %v2318
        %v2382 = vunpack.c.l.b16 %v2319
        %v2383 = vunpack.c.h.b16 %v2319
        %v2384 = vpack.c.b16 %v2354, %v2352
        %v2385 = vpack.c.b16 %v2355, %v2353
        %v2386 = vpack.c.b16 %v2358, %v2356
        %v2387 = vpack.c.b16 %v2359, %v2357
        %v2388 = vpack.c.b16 %v2362, %v2360
        %v2389 = vpack.c.b16 %v2363, %v2361
        %v2390 = vpack.c.b16 %v2366, %v2364
        %v2391 = vpack.c.b16 %v2367, %v2365
        %v2392 = vpack.c.b16 %v2370, %v2368
        %v2393 = vpack.c.b16 %v2371, %v2369
        %v2394 = vpack.c.b16 %v2374, %v2372
        %v2395 = vpack.c.b16 %v2375, %v2373
        %v2396 = vpack.c.b16 %v2378, %v2376
        %v2397 = vpack.c.b16 %v2379, %v2377
        %v2398 = vpack.c.b16 %v2382, %v2380
        %v2399 = vpack.c.b16 %v2383, %v2381
        %2416 = vmatprep.subr.bf16.mxu0 %v2385
        %2417 = vmatpush1.bf16.msra.mxu0 %v2384
        %2418 = vmatprep.subr.bf16.mxu0 %v2387
        %2419 = vmatpush1.bf16.msra.mxu0 %v2386
        %2420 = vmatprep.subr.bf16.mxu0 %v2389
        %2421 = vmatpush1.bf16.msra.mxu0 %v2388
        %2422 = vmatprep.subr.bf16.mxu0 %v2391
        %2423 = vmatpush1.bf16.msra.mxu0 %v2390
        %2424 = vmatprep.subr.bf16.mxu0 %v2393
        %2425 = vmatpush1.bf16.msra.mxu0 %v2392
        %2426 = vmatprep.subr.bf16.mxu0 %v2395
        %2427 = vmatpush1.bf16.msra.mxu0 %v2394
        %2428 = vmatprep.subr.bf16.mxu0 %v2397
        %2429 = vmatpush1.bf16.msra.mxu0 %v2396
        %2430 = vmatprep.subr.bf16.mxu0 %v2399
        %2431 = vmatpush1.bf16.msra.mxu0 %v2398
        %2432 = vmatprep.subr.bf16.mxu0 0
        %2433 = vmatpush1.bf16.msra.mxu0 0
        %2434 = vmatprep.subr.bf16.mxu0 0
        %2435 = vmatpush1.bf16.msra.mxu0 0
        %2436 = vmatprep.subr.bf16.mxu0 0
        %2437 = vmatpush1.bf16.msra.mxu0 0
        %2438 = vmatprep.subr.bf16.mxu0 0
        %2439 = vmatpush1.bf16.msra.mxu0 0
        %2440 = vmatprep.subr.bf16.mxu0 0
        %2441 = vmatpush1.bf16.msra.mxu0 0
        %2442 = vmatprep.subr.bf16.mxu0 0
        %2443 = vmatpush1.bf16.msra.mxu0 0
        %2444 = vmatprep.subr.bf16.mxu0 0
        %2445 = vmatpush1.bf16.msra.mxu0 0
        %2446 = vmatprep.subr.bf16.mxu0 0
        %2447 = vmatpush1.bf16.msra.mxu0 0
        %2448 = vmatprep.mubr.bf16.mxu0 0
        %2449 = vmatmul.mubr.bf16.gmra.mrb[0].mxu0 %v2328
        %v2450 = vpop.f32.mrb[0].mxu0
        %v2451 = vadd.f32 0.0, %v2450
        %v2452 = vpop.f32.mrb[0].mxu0
        %v2453 = vadd.f32 0.0, %v2452
        %v2454 = vpop.f32.mrb[0].mxu0
        %v2455 = vadd.f32 0.0, %v2454
        %v2456 = vpop.f32.mrb[0].mxu0
        %v2457 = vadd.f32 0.0, %v2456
        %2458 = vmatprep.mubr.bf16.mxu0 0
        %2459 = vmatmul.mubr.bf16.gmra.mrb[0].mxu0 %v2329
        %v2460 = vpop.f32.mrb[0].mxu0
        %v2461 = vadd.f32 0.0, %v2460
        %v2462 = vpop.f32.mrb[0].mxu0
        %v2463 = vadd.f32 0.0, %v2462
        %v2464 = vpop.f32.mrb[0].mxu0
        %v2465 = vadd.f32 0.0, %v2464
        %v2466 = vpop.f32.mrb[0].mxu0
        %v2467 = vadd.f32 0.0, %v2466
        %2468 = vmatprep.mubr.bf16.mxu0 0
        %2469 = vmatmul.mubr.bf16.gmra.mrb[0].mxu0 %v2330
        %v2470 = vpop.f32.mrb[0].mxu0
        %v2471 = vadd.f32 0.0, %v2470
        %v2472 = vpop.f32.mrb[0].mxu0
        %v2473 = vadd.f32 0.0, %v2472
        %v2474 = vpop.f32.mrb[0].mxu0
        %v2475 = vadd.f32 0.0, %v2474
        %v2476 = vpop.f32.mrb[0].mxu0
        %v2477 = vadd.f32 0.0, %v2476
        %2478 = vmatprep.mubr.bf16.mxu0 0
        %2479 = vmatmul.mubr.bf16.gmra.mrb[0].mxu0 %v2331
        %v2480 = vpop.f32.mrb[0].mxu0
        %v2481 = vadd.f32 0.0, %v2480
        %v2482 = vpop.f32.mrb[0].mxu0
        %v2483 = vadd.f32 0.0, %v2482
        %v2484 = vpop.f32.mrb[0].mxu0
        %v2485 = vadd.f32 0.0, %v2484
        %v2486 = vpop.f32.mrb[0].mxu0
        %v2487 = vadd.f32 0.0, %v2486
        %2488 = vdwg.mxu0
        %v2489 = vadd.f32 %v2159, %v2451
        %v2490 = vadd.f32 %v2160, %v2453
        %v2491 = vadd.f32 %v2161, %v2455
        %v2492 = vadd.f32 %v2162, %v2457
        %v2493 = vadd.f32 %v2163, %v2461
        %v2494 = vadd.f32 %v2164, %v2463
        %v2495 = vadd.f32 %v2165, %v2465
        %v2496 = vadd.f32 %v2166, %v2467
        %v2497 = vadd.f32 %v2167, %v2471
        %v2498 = vadd.f32 %v2168, %v2473
        %v2499 = vadd.f32 %v2169, %v2475
        %v2500 = vadd.f32 %v2170, %v2477
        %v2501 = vadd.f32 %v2171, %v2481
        %v2502 = vadd.f32 %v2172, %v2483
        %v2503 = vadd.f32 %v2173, %v2485
        %v2504 = vadd.f32 %v2174, %v2487
        %v2505 = vpack.c.bf16 %v2491, %v2489
        %v2506 = vpack.c.bf16 %v2492, %v2490
        %v2507 = vpack.c.bf16 %v2495, %v2493
        %v2508 = vpack.c.bf16 %v2496, %v2494
        %v2509 = vpack.c.bf16 %v2499, %v2497
        %v2510 = vpack.c.bf16 %v2500, %v2498
        %v2511 = vpack.c.bf16 %v2503, %v2501
        %v2512 = vpack.c.bf16 %v2504, %v2502
        %v2521 = vunpack.c.l.b16 %v2505
        %v2522 = vunpack.c.l.b16 %v2506
        %v2523 = vunpack.c.h.b16 %v2505
        %v2524 = vunpack.c.h.b16 %v2506
        %v2525 = vunpack.c.l.b16 %v2507
        %v2526 = vunpack.c.l.b16 %v2508
        %v2527 = vunpack.c.h.b16 %v2507
        %v2528 = vunpack.c.h.b16 %v2508
        %v2529 = vunpack.c.l.b16 %v2509
        %v2530 = vunpack.c.l.b16 %v2510
        %v2531 = vunpack.c.h.b16 %v2509
        %v2532 = vunpack.c.h.b16 %v2510
        %v2533 = vunpack.c.l.b16 %v2511
        %v2534 = vunpack.c.l.b16 %v2512
        %v2535 = vunpack.c.h.b16 %v2511
        %v2536 = vunpack.c.h.b16 %v2512
        %v2537 = vpack.c.b16 %v2522, %v2521
        %v2538 = vpack.c.b16 %v2524, %v2523
        %v2539 = vpack.c.b16 %v2526, %v2525
        %v2540 = vpack.c.b16 %v2528, %v2527
        %v2541 = vpack.c.b16 %v2530, %v2529
        %v2542 = vpack.c.b16 %v2532, %v2531
        %v2543 = vpack.c.b16 %v2534, %v2533
        %v2544 = vpack.c.b16 %v2536, %v2535
        %2553 = vst [vmem:[%s225] sm:$0xff] %v2537
        %2554 = vst [vmem:[%s225 + $0x8] sm:$0xff] %v2538
        %2555 = vst [vmem:[%s225 + $0x10] sm:$0xff] %v2539
        %2556 = vst [vmem:[%s225 + $0x18] sm:$0xff] %v2540
        %2557 = vst [vmem:[%s225 + $0x20] sm:$0xff] %v2541
        %2558 = vst [vmem:[%s225 + $0x28] sm:$0xff] %v2542
        %2559 = vst [vmem:[%s225 + $0x30] sm:$0xff] %v2543
        %2560 = vst [vmem:[%s225 + $0x38] sm:$0xff] %v2544
        %v2561 = vadd.f32 %v2489, %v2491
        %v2562 = vadd.f32 %v2561, %v2493
        %v2563 = vadd.f32 %v2562, %v2495
        %v2564 = vadd.f32 %v2563, %v2497
        %v2565 = vadd.f32 %v2564, %v2499
        %v2566 = vadd.f32 %v2565, %v2501
        %v2567 = vadd.f32 %v2566, %v2503
        %v2568 = vrot.slane %v2567, 4
        %v2569 = vadd.f32 %v2567, %v2568
        %v2570 = vrot.slane %v2569, 2
        %v2571 = vadd.f32 %v2569, %v2570
        %v2572 = vrot.slane %v2571, 1
        %v2573 = vadd.f32 %v2571, %v2572
        %v2574 = vadd.f32 %v2490, %v2492
        %v2575 = vadd.f32 %v2574, %v2494
        %v2576 = vadd.f32 %v2575, %v2496
        %v2577 = vadd.f32 %v2576, %v2498
        %v2578 = vadd.f32 %v2577, %v2500
        %v2579 = vadd.f32 %v2578, %v2502
        %v2580 = vadd.f32 %v2579, %v2504
        %v2581 = vrot.slane %v2580, 4
        %v2582 = vadd.f32 %v2580, %v2581
        %v2583 = vrot.slane %v2582, 2
        %v2584 = vadd.f32 %v2582, %v2583
        %v2585 = vrot.slane %v2584, 1
        %v2586 = vadd.f32 %v2584, %v2585
        %v2589 = vcombine.low %v2573, %v2586
        %v2591 = vunpack.c.l.s4 1966171168
        %v2592 = vunpack.c.0.s8 %v2591
        %v2593 = vlaneseq
        %v2594 = vshrl.u32 %v2593, 7
        %v2595 = vsub.s32 %v2592, %v2594
        %v2596 = vrot.slane %v2589, %v2595
        %v2598 = vunpack.c.l.s4 1966171168
        %v2599 = vunpack.c.0.s8 %v2598
        %v2600 = vlaneseq
        %v2601 = vshrl.u32 %v2600, 7
        %v2602 = vsub.s32 %v2599, %v2601
        %v2603 = vrot.slane %v2596, %v2602
        %v2605 = vlaneseq
        %vm2606 = vcmp.ge.s32.totalorder %v2605, 0
        %vm2607 = vcmp.lt.s32.totalorder %v2605, 256
        %vm2608 = vmand %vm2606, %vm2607
        %2609 = vst.msk [vmem:[%s229] sm:$0x3] %vm2608, %v2603
        %v2610 = vmul.f32 %v2489, %v2489
        %v2611 = vmul.f32 %v2490, %v2490
        %v2612 = vmul.f32 %v2491, %v2491
        %v2613 = vmul.f32 %v2492, %v2492
        %v2614 = vmul.f32 %v2493, %v2493
        %v2615 = vmul.f32 %v2494, %v2494
        %v2616 = vmul.f32 %v2495, %v2495
        %v2617 = vmul.f32 %v2496, %v2496
        %v2618 = vmul.f32 %v2497, %v2497
        %v2619 = vmul.f32 %v2498, %v2498
        %v2620 = vmul.f32 %v2499, %v2499
        %v2621 = vmul.f32 %v2500, %v2500
        %v2622 = vmul.f32 %v2501, %v2501
        %v2623 = vmul.f32 %v2502, %v2502
        %v2624 = vmul.f32 %v2503, %v2503
        %v2625 = vmul.f32 %v2504, %v2504
        %v2626 = vadd.f32 %v2610, %v2612
        %v2627 = vadd.f32 %v2626, %v2614
        %v2628 = vadd.f32 %v2627, %v2616
        %v2629 = vadd.f32 %v2628, %v2618
        %v2630 = vadd.f32 %v2629, %v2620
        %v2631 = vadd.f32 %v2630, %v2622
        %v2632 = vadd.f32 %v2631, %v2624
        %v2633 = vrot.slane %v2632, 4
        %v2634 = vadd.f32 %v2632, %v2633
        %v2635 = vrot.slane %v2634, 2
        %v2636 = vadd.f32 %v2634, %v2635
        %v2637 = vrot.slane %v2636, 1
        %v2638 = vadd.f32 %v2636, %v2637
        %v2639 = vadd.f32 %v2611, %v2613
        %v2640 = vadd.f32 %v2639, %v2615
        %v2641 = vadd.f32 %v2640, %v2617
        %v2642 = vadd.f32 %v2641, %v2619
        %v2643 = vadd.f32 %v2642, %v2621
        %v2644 = vadd.f32 %v2643, %v2623
        %v2645 = vadd.f32 %v2644, %v2625
        %v2646 = vrot.slane %v2645, 4
        %v2647 = vadd.f32 %v2645, %v2646
        %v2648 = vrot.slane %v2647, 2
        %v2649 = vadd.f32 %v2647, %v2648
        %v2650 = vrot.slane %v2649, 1
        %v2651 = vadd.f32 %v2649, %v2650
        %v2654 = vcombine.low %v2638, %v2651
        %v2656 = vunpack.c.l.s4 1966171168
        %v2657 = vunpack.c.0.s8 %v2656
        %v2658 = vlaneseq
        %v2659 = vshrl.u32 %v2658, 7
        %v2660 = vsub.s32 %v2657, %v2659
        %v2661 = vrot.slane %v2654, %v2660
        %v2663 = vunpack.c.l.s4 1966171168
        %v2664 = vunpack.c.0.s8 %v2663
        %v2665 = vlaneseq
        %v2666 = vshrl.u32 %v2665, 7
        %v2667 = vsub.s32 %v2664, %v2666
        %v2668 = vrot.slane %v2661, %v2667
        %2670 = vst.msk [vmem:[%s233] sm:$0x3] %vm2608, %v2668
        %p2671 = scmp.lt.s32.totalorder %s17, 1
        %s2672 = scalar_select %p2671, %s17, 1
        %s2673 = smul.addr %s2672, 16
        %s2674 = smul.addr %s2673, 4
        %s2675 = scalar_lea.vmem %s2, %s2674
        %p2676 = scmp.lt.s32.totalorder %s17, 1
        %s2677 = scalar_select %p2676, %s17, 1
        %s2678 = smul.addr %s2677, 2
        %s2679 = scalar_lea.vmem %s3, %s2678
        %p2680 = scmp.lt.s32.totalorder %s17, 1
        %s2681 = scalar_select %p2680, %s17, 1
        %s2682 = smul.addr %s2681, 2
        %s2683 = scalar_lea.vmem %s4, %s2682
        // Predicated region
        $region33: #{forward.2} parent=27 // pred_check
          %p2684 = pneg %p82
        $region34: #{forward.2} parent=27 // pred_check_branch
          %2686 = sbr.rel (%p2684) target = $region36
        $region35: #{forward.2} parent=27 // pred_region
          _
        $region36: #{forward.2} parent=27 // pred_fallthru
          _
        // Predicated region
        $region37: #{forward.2} parent=27 // pred_check
          %p2687 = pneg %p108
        $region38: #{forward.2} parent=27 // pred_check_branch
          %2689 = sbr.rel (%p2687) target = $region40
        $region39: #{forward.2} parent=27 // pred_region
          _
        $region40: #{forward.2} parent=27 // pred_fallthru
          _
        // Predicated region
        $region41: #{forward.2} parent=27 // pred_check
          %p2690 = pneg %p134
        $region42: #{forward.2} parent=27 // pred_check_branch
          %2692 = sbr.rel (%p2690) target = $region44
        $region43: #{forward.2} parent=27 // pred_region
          _
        $region44: #{forward.2} parent=27 // pred_fallthru
          _
      $region28: #{forward.2} parent=5 // pred_fallthru
        _
      %p2693 = scmp.le.s32.totalorder 2, %s12
      // Predicated region
      $region45: #{forward.2} parent=5 // pred_check
        %p2694 = pneg %p2693
      $region46: #{forward.2} parent=5 // pred_check_branch
        %2696 = sbr.rel (%p2694) target = $region48
      $region47: #{forward.2} parent=5 // pred_region
        %s2697 = ssub.s32 %s12, 2
        // Predicated region
        $region49: #{forward.2} parent=47 // pred_check
          %p2698 = pneg %p88
        $region50: #{forward.2} parent=47 // pred_check_branch
          %2700 = sbr.rel (%p2698) target = $region52
        $region51: #{forward.2} parent=47 // pred_region
          %p2701 = scmp.lt.s32.totalorder %s18, 1
          %s2702 = scalar_select %p2701, %s18, 1
          %s2703 = smul.addr %s2702, 16
          %s2704 = smul.addr %s2703, 4
          %s2705 = scalar_lea.vmem %s2, %s2704
        $region52: #{forward.2} parent=47 // pred_fallthru
          _
        // Predicated region
        $region53: #{forward.2} parent=47 // pred_check
          %p2706 = pneg %p114
        $region54: #{forward.2} parent=47 // pred_check_branch
          %2708 = sbr.rel (%p2706) target = $region56
        $region55: #{forward.2} parent=47 // pred_region
          %p2709 = scmp.lt.s32.totalorder %s18, 1
          %s2710 = scalar_select %p2709, %s18, 1
          %s2711 = smul.addr %s2710, 2
          %s2712 = scalar_lea.vmem %s3, %s2711
        $region56: #{forward.2} parent=47 // pred_fallthru
          _
        // Predicated region
        $region57: #{forward.2} parent=47 // pred_check
          %p2713 = pneg %p140
        $region58: #{forward.2} parent=47 // pred_check_branch
          %2715 = sbr.rel (%p2713) target = $region60
        $region59: #{forward.2} parent=47 // pred_region
          %p2716 = scmp.lt.s32.totalorder %s18, 1
          %s2717 = scalar_select %p2716, %s18, 1
          %s2718 = smul.addr %s2717, 2
          %s2719 = scalar_lea.vmem %s4, %s2718
        $region60: #{forward.2} parent=47 // pred_fallthru
          _
      $region48: #{forward.2} parent=5 // pred_fallthru
        _
    $region6: #{forward.2} parent=1 // loop_footer
      %s16 = sadd.s32 1, %s12
    $region7: #{forward.2} parent=1 // loop_footer_branch
      %11 = sbr.rel target = $region3
    $region8: #{forward.2} parent=1 // loop_exit
      _
    %2720 = vsyncpa [#allocation3], 1
    %s2721 = scalar_lea.sflag [#allocation3], 1
    %2722 = vsyncpa %s2721, 1

// kernel: forward.3
$region0: #{forward.3}
  #allocation0 [shape = 'u32[]', space=smem, size = 0x4, offset = 0x4, fixed_abs, tag = 'smem constant byte address 0x4 - core index']
  #allocation1 [shape = 'u32[144,128]{1,0:T(1,128)}', space=vmem, size = 0x12000, scoped, tag = 'internal scratch']
  #allocation2 [shape = 'bf16[10,10,256]{2,1,0:T(8,128)(2,1)}', space=vmem, size = 0x14000, scoped, tag = 'scratch operand']
  %s0 = inlined_call_operand.vmem [shape: bf16[2,8,8,256], index: 0, kind: input, shape index: {}]
  %s1 = inlined_call_operand.vmem [shape: f32[1,1,256], index: 1, kind: input, shape index: {}]
  %s2 = inlined_call_operand.vmem [shape: f32[1,1,256], index: 2, kind: input, shape index: {}]
  %s3 = inlined_call_operand.vmem [shape: bf16[9,256,256], index: 3, kind: input, shape index: {}]
  %s4 = inlined_call_operand.hbm [shape: f32[2,64,256], index: 4, kind: output, shape index: {}]
  %s5 = sld [smem:[#allocation0]]
  $region49: #{forward.3} parent=0
    _
  %s7 = ssub.s32 1, %s5
  %s8 = scalar_select 0, %s7, %s5
  $region1: #{forward.3} parent=0
    #allocation3 [shape = 'u8[131072]{0}', space=vmem, size = 0x20000, scoped, tag = 'output window, operand 0']
    #allocation4 [shape = 's32[2]{0}', space=sflag, size = 0x8, scoped, tag = 'scoped memory for forward.3']
    %9 = vsyncpa [#allocation4], 0
    %s10 = scalar_lea.sflag [#allocation4], 1
    %11 = vsyncpa %s10, 0
    loop: start=0, step=1, limit=4
    $region2: #{forward.3} parent=1 // loop_pre_header
      _
    $region3: #{forward.3} parent=1 // loop_header
      %s13 = sphi 0, %s17
      %p14 = scmp.ge.s32.totalorder %s13, 4
      %s23 = sphi 0, %s25
      %s26 = sphi 0, %s23
      %s27 = sphi 0, %s26
      %s43 = sphi 0, %s27
      %s47 = sphi 0, %s47
      %s49 = sphi 0, %s47
      %s50 = sphi 0, %s49
      %s64 = sphi 0, %s50
      %s68 = sphi 0, %s68
      %s70 = sphi 0, %s68
      %s71 = sphi 0, %s70
      %s85 = sphi 0, %s71
      %s89 = sphi 0, %s89
      %s91 = sphi 0, %s89
      %s92 = sphi 0, %s91
      %s106 = sphi 0, %s92
      %s112 = sphi 0, %s114
      %s115 = sphi 0, %s112
      %s116 = sphi 0, %s115
      %s132 = sphi 0, %s116
    $region4: #{forward.3} parent=1 // loop_header_branch
      %16 = sbr.rel (%p14) target = $region8
    $region5: #{forward.3} parent=1 // loop_body
      %s18 = ssub.s32 %s13, 1
      %s19 = ssub.s32 %s13, 2
      %s20 = sadd.s32 %s13, 1
      %s21 = ssub.s32 %s13, %s20
      %p22 = scmp.eq.s32.totalorder %s21, 0
      %s24 = sadd.s32 %s23, 1
      %s25 = scalar_select %p22, %s23, %s24
      %p28 = pneg %p22
      %p29 = scmp.eq.s32.totalorder %s13, 1
      %p30 = por %p28, %p29
      %p31 = scmp.ne.s32.totalorder %s23, %s26
      %p32 = scmp.eq.s32.totalorder %s13, 0
      %p33 = por %p31, %p32
      %p34 = scmp.ne.s32.totalorder %s23, %s26
      %p35 = scmp.eq.s32.totalorder %s18, 1
      %p36 = por %p34, %p35
      %p37 = scmp.ne.s32.totalorder %s26, %s27
      %p38 = scmp.eq.s32.totalorder %s18, 0
      %p39 = por %p37, %p38
      %p40 = scmp.ne.s32.totalorder %s26, %s27
      %p41 = scmp.eq.s32.totalorder %s19, 1
      %p42 = por %p40, %p41
      %p44 = scmp.ne.s32.totalorder %s27, %s43
      %p45 = scmp.eq.s32.totalorder %s19, 0
      %p46 = por %p44, %p45
      %s48 = sadd.s32 %s47, 1
      %p51 = scmp.eq.s32.totalorder %s13, 1
      %p52 = scmp.ne.s32.totalorder %s47, %s49
      %p53 = scmp.eq.s32.totalorder %s13, 0
      %p54 = por %p52, %p53
      %p55 = scmp.ne.s32.totalorder %s47, %s49
      %p56 = scmp.eq.s32.totalorder %s18, 1
      %p57 = por %p55, %p56
      %p58 = scmp.ne.s32.totalorder %s49, %s50
      %p59 = scmp.eq.s32.totalorder %s18, 0
      %p60 = por %p58, %p59
      %p61 = scmp.ne.s32.totalorder %s49, %s50
      %p62 = scmp.eq.s32.totalorder %s19, 1
      %p63 = por %p61, %p62
      %p65 = scmp.ne.s32.totalorder %s50, %s64
      %p66 = scmp.eq.s32.totalorder %s19, 0
      %p67 = por %p65, %p66
      %s69 = sadd.s32 %s68, 1
      %p72 = scmp.eq.s32.totalorder %s13, 1
      %p73 = scmp.ne.s32.totalorder %s68, %s70
      %p74 = scmp.eq.s32.totalorder %s13, 0
      %p75 = por %p73, %p74
      %p76 = scmp.ne.s32.totalorder %s68, %s70
      %p77 = scmp.eq.s32.totalorder %s18, 1
      %p78 = por %p76, %p77
      %p79 = scmp.ne.s32.totalorder %s70, %s71
      %p80 = scmp.eq.s32.totalorder %s18, 0
      %p81 = por %p79, %p80
      %p82 = scmp.ne.s32.totalorder %s70, %s71
      %p83 = scmp.eq.s32.totalorder %s19, 1
      %p84 = por %p82, %p83
      %p86 = scmp.ne.s32.totalorder %s71, %s85
      %p87 = scmp.eq.s32.totalorder %s19, 0
      %p88 = por %p86, %p87
      %s90 = sadd.s32 %s89, 1
      %p93 = scmp.eq.s32.totalorder %s13, 1
      %p94 = scmp.ne.s32.totalorder %s89, %s91
      %p95 = scmp.eq.s32.totalorder %s13, 0
      %p96 = por %p94, %p95
      %p97 = scmp.ne.s32.totalorder %s89, %s91
      %p98 = scmp.eq.s32.totalorder %s18, 1
      %p99 = por %p97, %p98
      %p100 = scmp.ne.s32.totalorder %s91, %s92
      %p101 = scmp.eq.s32.totalorder %s18, 0
      %p102 = por %p100, %p101
      %p103 = scmp.ne.s32.totalorder %s91, %s92
      %p104 = scmp.eq.s32.totalorder %s19, 1
      %p105 = por %p103, %p104
      %p107 = scmp.ne.s32.totalorder %s92, %s106
      %p108 = scmp.eq.s32.totalorder %s19, 0
      %p109 = por %p107, %p108
      %s110 = ssub.s32 %s13, %s20
      %p111 = scmp.eq.s32.totalorder %s110, 0
      %s113 = sadd.s32 %s112, 1
      %s114 = scalar_select %p111, %s112, %s113
      %p117 = pneg %p111
      %p118 = scmp.eq.s32.totalorder %s13, 1
      %p119 = por %p117, %p118
      %p120 = scmp.ne.s32.totalorder %s112, %s115
      %p121 = scmp.eq.s32.totalorder %s13, 0
      %p122 = por %p120, %p121
      %p123 = scmp.ne.s32.totalorder %s112, %s115
      %p124 = scmp.eq.s32.totalorder %s18, 1
      %p125 = por %p123, %p124
      %p126 = scmp.ne.s32.totalorder %s115, %s116
      %p127 = scmp.eq.s32.totalorder %s18, 0
      %p128 = por %p126, %p127
      %p129 = scmp.ne.s32.totalorder %s115, %s116
      %p130 = scmp.eq.s32.totalorder %s19, 1
      %p131 = por %p129, %p130
      %p133 = scmp.ne.s32.totalorder %s116, %s132
      %p134 = scmp.eq.s32.totalorder %s19, 0
      %p135 = por %p133, %p134
      %p136 = scmp.le.s32.totalorder 1, %s13
      %p137 = scmp.lt.s32.totalorder %s13, 3
      %p138 = pnand %p136, %p137
      %p139 = pneg %p138
      // Predicated region
      $region9: #{forward.3} parent=5 // pred_check
        _
      $region10: #{forward.3} parent=5 // pred_check_branch
        %141 = sbr.rel (%p138) target = $region12
      $region11: #{forward.3} parent=5 // pred_region
        %s142 = ssub.s32 %s13, 1
        // Predicated region
        $region13: #{forward.3} parent=11 // pred_check
          %p143 = pneg %p60
        $region14: #{forward.3} parent=11 // pred_check_branch
          %145 = sbr.rel (%p143) target = $region16
        $region15: #{forward.3} parent=11 // pred_region
          _
        $region16: #{forward.3} parent=11 // pred_fallthru
          _
        // Predicated region
        $region17: #{forward.3} parent=11 // pred_check
          %p146 = pneg %p81
        $region18: #{forward.3} parent=11 // pred_check_branch
          %148 = sbr.rel (%p146) target = $region20
        $region19: #{forward.3} parent=11 // pred_region
          _
        $region20: #{forward.3} parent=11 // pred_fallthru
          _
        // Predicated region
        $region21: #{forward.3} parent=11 // pred_check
          %p149 = pneg %p102
        $region22: #{forward.3} parent=11 // pred_check_branch
          %151 = sbr.rel (%p149) target = $region24
        $region23: #{forward.3} parent=11 // pred_region
          _
        $region24: #{forward.3} parent=11 // pred_fallthru
          _
      $region12: #{forward.3} parent=5 // pred_fallthru
        _
      %p152 = scmp.lt.s32.totalorder %s13, 2
      // Predicated region
      $region25: #{forward.3} parent=5 // pred_check
        %p153 = pneg %p152
      $region26: #{forward.3} parent=5 // pred_check_branch
        %155 = sbr.rel (%p153) target = $region28
      $region27: #{forward.3} parent=5 // pred_region
        // Predicated region
        $region29: #{forward.3} parent=27 // pred_check
          %p156 = pneg %p33
        $region30: #{forward.3} parent=27 // pred_check_branch
          %158 = sbr.rel (%p156) target = $region32
        $region31: #{forward.3} parent=27 // pred_region
          %p159 = scmp.lt.s32.totalorder %s13, 1
          %s160 = scalar_select %p159, %s13, 1
          %s161 = smul.addr %s160, 16
          %s162 = smul.addr %s161, 4
          %s163 = scalar_lea.vmem %s0, %s162
        $region32: #{forward.3} parent=27 // pred_fallthru
          _
      $region28: #{forward.3} parent=5 // pred_fallthru
        _
      %p164 = scmp.le.s32.totalorder 1, %s13
      %p165 = scmp.lt.s32.totalorder %s13, 3
      %p166 = pnand %p164, %p165
      %p167 = pneg %p166
      // Predicated region
      $region33: #{forward.3} parent=5 // pred_check
        _
      $region34: #{forward.3} parent=5 // pred_check_branch
        %169 = sbr.rel (%p166) target = $region36
      $region35: #{forward.3} parent=5 // pred_region
        %s170 = ssub.s32 %s13, 1
        %p171 = scmp.lt.s32.totalorder %s18, 1
        %s172 = scalar_select %p171, %s18, 1
        %s173 = smul.addr %s172, 16
        %s174 = smul.addr %s173, 4
        %s175 = scalar_lea.vmem %s0, %s174
        %p176 = pneg %p39
        %p177 = pneg %p36
        %p178 = pneg %p60
        %p179 = pneg %p57
        %p180 = pneg %p81
        %p181 = pneg %p78
        %p182 = pneg %p102
        %p183 = pneg %p99
        %p184 = pneg %p128
        %p185 = pneg %p125
        %s186 = sand.u32 %s115, 1
        %s187 = scalar_lea.sflag [#allocation4], %s186
        %s188 = sand.u32 %s115, 1
        %s189 = smul.addr %s188, 128
        %s190 = scalar_lea.vmem [#allocation3], %s189
        %p191 = scmp.lt.s32.totalorder %s18, 1
        %s192 = scalar_select %p191, %s18, 1
        %s193 = smul.addr %s192, 16
        %s194 = smul.addr %s193, 4
        %s195 = scalar_lea.vmem %s0, %s194
        %197 = vst [vmem:[#allocation2] sm:$0xff] 0
        %198 = vst [vmem:[#allocation2 + $0x8] sm:$0x11] 0
        %199 = vst [vmem:[#allocation2 + $0x10] sm:$0xff] 0
        %200 = vst [vmem:[#allocation2 + $0x18] sm:$0x11] 0
        %201 = vst [vmem:[#allocation2 + $0x20] sm:$0xff] 0
        %202 = vst [vmem:[#allocation2 + $0x28] sm:$0x11] 0
        %203 = vst [vmem:[#allocation2 + $0x30] sm:$0xff] 0
        %204 = vst [vmem:[#allocation2 + $0x38] sm:$0x11] 0
        %205 = vst [vmem:[#allocation2 + $0x40] sm:$0xff] 0
        %206 = vst [vmem:[#allocation2 + $0x48] sm:$0x11] 0
        %207 = vst [vmem:[#allocation2 + $0x50] sm:$0xff] 0
        %208 = vst [vmem:[#allocation2 + $0x58] sm:$0x11] 0
        %209 = vst [vmem:[#allocation2 + $0x60] sm:$0xff] 0
        %210 = vst [vmem:[#allocation2 + $0x68] sm:$0x11] 0
        %211 = vst [vmem:[#allocation2 + $0x70] sm:$0xff] 0
        %212 = vst [vmem:[#allocation2 + $0x78] sm:$0x11] 0
        %213 = vst [vmem:[#allocation2 + $0x80] sm:$0xff] 0
        %214 = vst [vmem:[#allocation2 + $0x88] sm:$0x11] 0
        %215 = vst [vmem:[#allocation2 + $0x90] sm:$0xff] 0
        %216 = vst [vmem:[#allocation2 + $0x98] sm:$0x11] 0
        %v217 = vld [vmem:[%s195] sm:$0xff]
        %v218 = vld [vmem:[%s195 + $0x8] sm:$0xff]
        %v219 = vld [vmem:[%s195 + $0x10] sm:$0xff]
        %v220 = vld [vmem:[%s195 + $0x18] sm:$0xff]
        %v221 = vld [vmem:[%s195 + $0x20] sm:$0xff]
        %v222 = vld [vmem:[%s195 + $0x28] sm:$0xff]
        %v223 = vld [vmem:[%s195 + $0x30] sm:$0xff]
        %v224 = vld [vmem:[%s195 + $0x38] sm:$0xff]
        %v225 = vunpack.c.l.bf16 %v217
        %v226 = vunpack.c.h.bf16 %v217
        %v227 = vunpack.c.l.bf16 %v218
        %v228 = vunpack.c.h.bf16 %v218
        %v229 = vunpack.c.l.bf16 %v219
        %v230 = vunpack.c.h.bf16 %v219
        %v231 = vunpack.c.l.bf16 %v220
        %v232 = vunpack.c.h.bf16 %v220
        %v233 = vunpack.c.l.bf16 %v221
        %v234 = vunpack.c.h.bf16 %v221
        %v235 = vunpack.c.l.bf16 %v222
        %v236 = vunpack.c.h.bf16 %v222
        %v237 = vunpack.c.l.bf16 %v223
        %v238 = vunpack.c.h.bf16 %v223
        %v239 = vunpack.c.l.bf16 %v224
        %v240 = vunpack.c.h.bf16 %v224
        %v241 = vld [vmem:[%s1] sm:$0x3]
        %v243 = vlaneseq
        %v244 = vshrl.u32 %v243, 7
        %v245 = vsub.s32 0, %v244
        %v246 = vrot.slane %v241, %v245
        %v247 = vlaneseq
        %v248 = vshrl.u32 %v247, 7
        %v249 = vsub.s32 1, %v248
        %v250 = vrot.slane %v241, %v249
        %v253 = vmul.f32 %v225, %v246
        %v254 = vmul.f32 %v226, %v250
        %v255 = vmul.f32 %v227, %v246
        %v256 = vmul.f32 %v228, %v250
        %v257 = vmul.f32 %v229, %v246
        %v258 = vmul.f32 %v230, %v250
        %v259 = vmul.f32 %v231, %v246
        %v260 = vmul.f32 %v232, %v250
        %v261 = vmul.f32 %v233, %v246
        %v262 = vmul.f32 %v234, %v250
        %v263 = vmul.f32 %v235, %v246
        %v264 = vmul.f32 %v236, %v250
        %v265 = vmul.f32 %v237, %v246
        %v266 = vmul.f32 %v238, %v250
        %v267 = vmul.f32 %v239, %v246
        %v268 = vmul.f32 %v240, %v250
        %v269 = vld [vmem:[%s2] sm:$0x3]
        %v271 = vlaneseq
        %v272 = vshrl.u32 %v271, 7
        %v273 = vsub.s32 0, %v272
        %v274 = vrot.slane %v269, %v273
        %v275 = vlaneseq
        %v276 = vshrl.u32 %v275, 7
        %v277 = vsub.s32 1, %v276
        %v278 = vrot.slane %v269, %v277
        %v281 = vadd.f32 %v253, %v274
        %v282 = vadd.f32 %v254, %v278
        %v283 = vadd.f32 %v255, %v274
        %v284 = vadd.f32 %v256, %v278
        %v285 = vadd.f32 %v257, %v274
        %v286 = vadd.f32 %v258, %v278
        %v287 = vadd.f32 %v259, %v274
        %v288 = vadd.f32 %v260, %v278
        %v289 = vadd.f32 %v261, %v274
        %v290 = vadd.f32 %v262, %v278
        %v291 = vadd.f32 %v263, %v274
        %v292 = vadd.f32 %v264, %v278
        %v293 = vadd.f32 %v265, %v274
        %v294 = vadd.f32 %v266, %v278
        %v295 = vadd.f32 %v267, %v274
        %v296 = vadd.f32 %v268, %v278
        %v297 = vmax.f32 %v281, 0.0
        %v298 = vmax.f32 %v282, 0.0
        %v299 = vmax.f32 %v283, 0.0
        %v300 = vmax.f32 %v284, 0.0
        %v301 = vmax.f32 %v285, 0.0
        %v302 = vmax.f32 %v286, 0.0
        %v303 = vmax.f32 %v287, 0.0
        %v304 = vmax.f32 %v288, 0.0
        %v305 = vmax.f32 %v289, 0.0
        %v306 = vmax.f32 %v290, 0.0
        %v307 = vmax.f32 %v291, 0.0
        %v308 = vmax.f32 %v292, 0.0
        %v309 = vmax.f32 %v293, 0.0
        %v310 = vmax.f32 %v294, 0.0
        %v311 = vmax.f32 %v295, 0.0
        %v312 = vmax.f32 %v296, 0.0
        %v313 = vpack.c.bf16 %v297, %v297
        %v314 = vpack.c.bf16 %v298, %v298
        %v315 = vpack.c.bf16 %v299, %v299
        %v316 = vpack.c.bf16 %v300, %v300
        %v317 = vpack.c.bf16 %v301, %v301
        %v318 = vpack.c.bf16 %v302, %v302
        %v319 = vpack.c.bf16 %v303, %v303
        %v320 = vpack.c.bf16 %v304, %v304
        %v321 = vpack.c.bf16 %v305, %v305
        %v322 = vpack.c.bf16 %v306, %v306
        %v323 = vpack.c.bf16 %v307, %v307
        %v324 = vpack.c.bf16 %v308, %v308
        %v325 = vpack.c.bf16 %v309, %v309
        %v326 = vpack.c.bf16 %v310, %v310
        %v327 = vpack.c.bf16 %v311, %v311
        %v328 = vpack.c.bf16 %v312, %v312
        %v345 = vunpack.c.l.b16 %v313
        %v346 = vunpack.c.l.b16 %v314
        %v347 = vunpack.c.l.b16 %v315
        %v348 = vunpack.c.l.b16 %v316
        %v349 = vunpack.c.l.b16 %v317
        %v350 = vunpack.c.l.b16 %v318
        %v351 = vunpack.c.l.b16 %v319
        %v352 = vunpack.c.l.b16 %v320
        %v353 = vunpack.c.l.b16 %v321
        %v354 = vunpack.c.l.b16 %v322
        %v355 = vunpack.c.l.b16 %v323
        %v356 = vunpack.c.l.b16 %v324
        %v357 = vunpack.c.l.b16 %v325
        %v358 = vunpack.c.l.b16 %v326
        %v359 = vunpack.c.l.b16 %v327
        %v360 = vunpack.c.l.b16 %v328
        %v361 = vpack.c.b16 %v346, %v345
        %v362 = vpack.c.b16 %v348, %v347
        %v363 = vpack.c.b16 %v350, %v349
        %v364 = vpack.c.b16 %v352, %v351
        %v365 = vpack.c.b16 %v354, %v353
        %v366 = vpack.c.b16 %v356, %v355
        %v367 = vpack.c.b16 %v358, %v357
        %v368 = vpack.c.b16 %v360, %v359
        %v370 = vshrl.u32 %v361, 16
        %v372 = vrot.slane %v370, 7
        %v373 = vshll.u32 %v361, 16
        %v375 = vor.u32 %v372, %v373
        %v376 = vrot.slane %v372, 4
        %v378 = vshrl.u32 %v362, 16
        %v380 = vrot.slane %v378, 7
        %v381 = vshll.u32 %v362, 16
        %v383 = vor.u32 %v380, %v381
        %v384 = vrot.slane %v380, 4
        %v386 = vshrl.u32 %v363, 16
        %v388 = vrot.slane %v386, 7
        %v389 = vshll.u32 %v363, 16
        %v391 = vor.u32 %v388, %v389
        %v392 = vrot.slane %v388, 4
        %v394 = vshrl.u32 %v364, 16
        %v396 = vrot.slane %v394, 7
        %v397 = vshll.u32 %v364, 16
        %v399 = vor.u32 %v396, %v397
        %v400 = vrot.slane %v396, 4
        %v402 = vshrl.u32 %v365, 16
        %v404 = vrot.slane %v402, 7
        %v405 = vshll.u32 %v365, 16
        %v407 = vor.u32 %v404, %v405
        %v408 = vrot.slane %v404, 4
        %v410 = vshrl.u32 %v366, 16
        %v412 = vrot.slane %v410, 7
        %v413 = vshll.u32 %v366, 16
        %v415 = vor.u32 %v412, %v413
        %v416 = vrot.slane %v412, 4
        %v418 = vshrl.u32 %v367, 16
        %v420 = vrot.slane %v418, 7
        %v421 = vshll.u32 %v367, 16
        %v423 = vor.u32 %v420, %v421
        %v424 = vrot.slane %v420, 4
        %v426 = vshrl.u32 %v368, 16
        %v428 = vrot.slane %v426, 7
        %v429 = vshll.u32 %v368, 16
        %v431 = vor.u32 %v428, %v429
        %v432 = vrot.slane %v428, 4
        %s449 = scalar_lea.vmem [#allocation2], 16
        %vm450 = vcmask 1043456
        %vm451 = vsmask.f32 7938
        %vm452 = vmand %vm450, %vm451
        %vm453 = vcmask 1047556
        %vm454 = vsmask.f32 7954
        %vm455 = vmand %vm453, %vm454
        %vm456 = vmor %vm455, %vm452
        %v457 = vld [vmem:[%s449] sm:$0xff]
        %v458 = vsel %vm456, %v375, %v457
        %459 = vst [vmem:[%s449] sm:$0xff] %v458
        %vm460 = vcmask 1040384
        %vm461 = vsmask.f32 256
        %vm462 = vmand %vm460, %vm461
        %vm463 = vcmask 1044484
        %vm464 = vsmask.f32 4352
        %vm465 = vmand %vm463, %vm464
        %vm466 = vmor %vm465, %vm462
        %v467 = vld [vmem:[%s449 + $0x8] sm:$0x11]
        %v468 = vsel %vm466, %v376, %v467
        %469 = vst [vmem:[%s449 + $0x8] sm:$0x11] %v468
        %v470 = vld [vmem:[%s449 + $0x10] sm:$0xff]
        %v471 = vsel %vm456, %v383, %v470
        %472 = vst [vmem:[%s449 + $0x10] sm:$0xff] %v471
        %v473 = vld [vmem:[%s449 + $0x18] sm:$0x11]
        %v474 = vsel %vm466, %v384, %v473
        %475 = vst [vmem:[%s449 + $0x18] sm:$0x11] %v474
        %v476 = vld [vmem:[%s449 + $0x20] sm:$0xff]
        %v477 = vsel %vm456, %v391, %v476
        %478 = vst [vmem:[%s449 + $0x20] sm:$0xff] %v477
        %v479 = vld [vmem:[%s449 + $0x28] sm:$0x11]
        %v480 = vsel %vm466, %v392, %v479
        %481 = vst [vmem:[%s449 + $0x28] sm:$0x11] %v480
        %v482 = vld [vmem:[%s449 + $0x30] sm:$0xff]
        %v483 = vsel %vm456, %v399, %v482
        %484 = vst [vmem:[%s449 + $0x30] sm:$0xff] %v483
        %v485 = vld [vmem:[%s449 + $0x38] sm:$0x11]
        %v486 = vsel %vm466, %v400, %v485
        %487 = vst [vmem:[%s449 + $0x38] sm:$0x11] %v486
        %v488 = vld [vmem:[%s449 + $0x40] sm:$0xff]
        %v489 = vsel %vm456, %v407, %v488
        %490 = vst [vmem:[%s449 + $0x40] sm:$0xff] %v489
        %v491 = vld [vmem:[%s449 + $0x48] sm:$0x11]
        %v492 = vsel %vm466, %v408, %v491
        %493 = vst [vmem:[%s449 + $0x48] sm:$0x11] %v492
        %v494 = vld [vmem:[%s449 + $0x50] sm:$0xff]
        %v495 = vsel %vm456, %v415, %v494
        %496 = vst [vmem:[%s449 + $0x50] sm:$0xff] %v495
        %v497 = vld [vmem:[%s449 + $0x58] sm:$0x11]
        %v498 = vsel %vm466, %v416, %v497
        %499 = vst [vmem:[%s449 + $0x58] sm:$0x11] %v498
        %v500 = vld [vmem:[%s449 + $0x60] sm:$0xff]
        %v501 = vsel %vm456, %v423, %v500
        %502 = vst [vmem:[%s449 + $0x60] sm:$0xff] %v501
        %v503 = vld [vmem:[%s449 + $0x68] sm:$0x11]
        %v504 = vsel %vm466, %v424, %v503
        %505 = vst [vmem:[%s449 + $0x68] sm:$0x11] %v504
        %v506 = vld [vmem:[%s449 + $0x70] sm:$0xff]
        %v507 = vsel %vm456, %v431, %v506
        %508 = vst [vmem:[%s449 + $0x70] sm:$0xff] %v507
        %v509 = vld [vmem:[%s449 + $0x78] sm:$0x11]
        %v510 = vsel %vm466, %v432, %v509
        %511 = vst [vmem:[%s449 + $0x78] sm:$0x11] %v510
        %v512 = vld [vmem:[#allocation2] sm:$0xff]
        %v513 = vld [vmem:[#allocation2 + $0x10] sm:$0xff]
        %v514 = vld [vmem:[#allocation2 + $0x20] sm:$0xff]
        %v515 = vld [vmem:[#allocation2 + $0x30] sm:$0xff]
        %v516 = vld [vmem:[#allocation2 + $0x40] sm:$0xff]
        %v517 = vld [vmem:[#allocation2 + $0x50] sm:$0xff]
        %v518 = vld [vmem:[#allocation2 + $0x60] sm:$0xff]
        %v519 = vld [vmem:[#allocation2 + $0x70] sm:$0xff]
        %v520 = vld [vmem:[%s3] sm:$0xff]
        %v521 = vld [vmem:[%s3 + $0x8] sm:$0xff]
        %v522 = vld [vmem:[%s3 + $0x10] sm:$0xff]
        %v523 = vld [vmem:[%s3 + $0x18] sm:$0xff]
        %v524 = vld [vmem:[%s3 + $0x20] sm:$0xff]
        %v525 = vld [vmem:[%s3 + $0x28] sm:$0xff]
        %v526 = vld [vmem:[%s3 + $0x30] sm:$0xff]
        %v527 = vld [vmem:[%s3 + $0x38] sm:$0xff]
        %v528 = vld [vmem:[%s3 + $0x40] sm:$0xff]
        %v529 = vld [vmem:[%s3 + $0x48] sm:$0xff]
        %v530 = vld [vmem:[%s3 + $0x50] sm:$0xff]
        %v531 = vld [vmem:[%s3 + $0x58] sm:$0xff]
        %v532 = vld [vmem:[%s3 + $0x60] sm:$0xff]
        %v533 = vld [vmem:[%s3 + $0x68] sm:$0xff]
        %v534 = vld [vmem:[%s3 + $0x70] sm:$0xff]
        %v535 = vld [vmem:[%s3 + $0x78] sm:$0xff]
        %v536 = vld [vmem:[%s3 + $0x80] sm:$0xff]
        %v537 = vld [vmem:[%s3 + $0x88] sm:$0xff]
        %v538 = vld [vmem:[%s3 + $0x90] sm:$0xff]
        %v539 = vld [vmem:[%s3 + $0x98] sm:$0xff]
        %v540 = vld [vmem:[%s3 + $0xa0] sm:$0xff]
        %v541 = vld [vmem:[%s3 + $0xa8] sm:$0xff]
        %v542 = vld [vmem:[%s3 + $0xb0] sm:$0xff]
        %v543 = vld [vmem:[%s3 + $0xb8] sm:$0xff]
        %v544 = vld [vmem:[%s3 + $0xc0] sm:$0xff]
        %v545 = vld [vmem:[%s3 + $0xc8] sm:$0xff]
        %v546 = vld [vmem:[%s3 + $0xd0] sm:$0xff]
        %v547 = vld [vmem:[%s3 + $0xd8] sm:$0xff]
        %v548 = vld [vmem:[%s3 + $0xe0] sm:$0xff]
        %v549 = vld [vmem:[%s3 + $0xe8] sm:$0xff]
        %v550 = vld [vmem:[%s3 + $0xf0] sm:$0xff]
        %v551 = vld [vmem:[%s3 + $0xf8] sm:$0xff]
        %v552 = vld [vmem:[#allocation2 + $0x8] sm:$0x11]
        %v553 = vld [vmem:[#allocation2 + $0x18] sm:$0x11]
        %v554 = vld [vmem:[#allocation2 + $0x28] sm:$0x11]
        %v555 = vld [vmem:[#allocation2 + $0x38] sm:$0x11]
        %v556 = vld [vmem:[#allocation2 + $0x48] sm:$0x11]
        %v557 = vld [vmem:[#allocation2 + $0x58] sm:$0x11]
        %v558 = vld [vmem:[#allocation2 + $0x68] sm:$0x11]
        %v559 = vld [vmem:[#allocation2 + $0x78] sm:$0x11]
        %vm560 = vsmask.f32 3328
        %vm561 = vsmask.f32 7440
        %vm562 = vmor %vm560, %vm561
        %v564 = vshrl.u32 %v512, 16
        %v566 = vrot.slane %v564, 4
        %v567 = vshll.u32 %v512, 16
        %v569 = vrot.slane %v567, 5
        %v570 = vor.u32 %v566, %v569
        %v571 = vrot.slane %v570, 4
        %v573 = vshll.u32 %v552, 16
        %v575 = vrot.slane %v573, 5
        %v576 = vsel %vm562, %v571, %v575
        %v578 = vshrl.u32 %v513, 16
        %v580 = vrot.slane %v578, 4
        %v581 = vshll.u32 %v513, 16
        %v583 = vrot.slane %v581, 5
        %v584 = vor.u32 %v580, %v583
        %v585 = vrot.slane %v584, 4
        %v587 = vshll.u32 %v553, 16
        %v589 = vrot.slane %v587, 5
        %v590 = vsel %vm562, %v585, %v589
        %v592 = vshrl.u32 %v514, 16
        %v594 = vrot.slane %v592, 4
        %v595 = vshll.u32 %v514, 16
        %v597 = vrot.slane %v595, 5
        %v598 = vor.u32 %v594, %v597
        %v599 = vrot.slane %v598, 4
        %v601 = vshll.u32 %v554, 16
        %v603 = vrot.slane %v601, 5
        %v604 = vsel %vm562, %v599, %v603
        %v606 = vshrl.u32 %v515, 16
        %v608 = vrot.slane %v606, 4
        %v609 = vshll.u32 %v515, 16
        %v611 = vrot.slane %v609, 5
        %v612 = vor.u32 %v608, %v611
        %v613 = vrot.slane %v612, 4
        %v615 = vshll.u32 %v555, 16
        %v617 = vrot.slane %v615, 5
        %v618 = vsel %vm562, %v613, %v617
        %v620 = vshrl.u32 %v516, 16
        %v622 = vrot.slane %v620, 4
        %v623 = vshll.u32 %v516, 16
        %v625 = vrot.slane %v623, 5
        %v626 = vor.u32 %v622, %v625
        %v627 = vrot.slane %v626, 4
        %v629 = vshll.u32 %v556, 16
        %v631 = vrot.slane %v629, 5
        %v632 = vsel %vm562, %v627, %v631
        %v634 = vshrl.u32 %v517, 16
        %v636 = vrot.slane %v634, 4
        %v637 = vshll.u32 %v517, 16
        %v639 = vrot.slane %v637, 5
        %v640 = vor.u32 %v636, %v639
        %v641 = vrot.slane %v640, 4
        %v643 = vshll.u32 %v557, 16
        %v645 = vrot.slane %v643, 5
        %v646 = vsel %vm562, %v641, %v645
        %v648 = vshrl.u32 %v518, 16
        %v650 = vrot.slane %v648, 4
        %v651 = vshll.u32 %v518, 16
        %v653 = vrot.slane %v651, 5
        %v654 = vor.u32 %v650, %v653
        %v655 = vrot.slane %v654, 4
        %v657 = vshll.u32 %v558, 16
        %v659 = vrot.slane %v657, 5
        %v660 = vsel %vm562, %v655, %v659
        %v662 = vshrl.u32 %v519, 16
        %v664 = vrot.slane %v662, 4
        %v665 = vshll.u32 %v519, 16
        %v667 = vrot.slane %v665, 5
        %v668 = vor.u32 %v664, %v667
        %v669 = vrot.slane %v668, 4
        %v671 = vshll.u32 %v559, 16
        %v673 = vrot.slane %v671, 5
        %v674 = vsel %vm562, %v669, %v673
        %s675 = scalar_lea.vmem %s3, 256
        %v676 = vld [vmem:[%s675] sm:$0xff]
        %v677 = vld [vmem:[%s675 + $0x8] sm:$0xff]
        %v678 = vld [vmem:[%s675 + $0x10] sm:$0xff]
        %v679 = vld [vmem:[%s675 + $0x18] sm:$0xff]
        %v680 = vld [vmem:[%s675 + $0x20] sm:$0xff]
        %v681 = vld [vmem:[%s675 + $0x28] sm:$0xff]
        %v682 = vld [vmem:[%s675 + $0x30] sm:$0xff]
        %v683 = vld [vmem:[%s675 + $0x38] sm:$0xff]
        %v684 = vld [vmem:[%s675 + $0x40] sm:$0xff]
        %v685 = vld [vmem:[%s675 + $0x48] sm:$0xff]
        %v686 = vld [vmem:[%s675 + $0x50] sm:$0xff]
        %v687 = vld [vmem:[%s675 + $0x58] sm:$0xff]
        %v688 = vld [vmem:[%s675 + $0x60] sm:$0xff]
        %v689 = vld [vmem:[%s675 + $0x68] sm:$0xff]
        %v690 = vld [vmem:[%s675 + $0x70] sm:$0xff]
        %v691 = vld [vmem:[%s675 + $0x78] sm:$0xff]
        %v692 = vld [vmem:[%s675 + $0x80] sm:$0xff]
        %v693 = vld [vmem:[%s675 + $0x88] sm:$0xff]
        %v694 = vld [vmem:[%s675 + $0x90] sm:$0xff]
        %v695 = vld [vmem:[%s675 + $0x98] sm:$0xff]
        %v696 = vld [vmem:[%s675 + $0xa0] sm:$0xff]
        %v697 = vld [vmem:[%s675 + $0xa8] sm:$0xff]
        %v698 = vld [vmem:[%s675 + $0xb0] sm:$0xff]
        %v699 = vld [vmem:[%s675 + $0xb8] sm:$0xff]
        %v700 = vld [vmem:[%s675 + $0xc0] sm:$0xff]
        %v701 = vld [vmem:[%s675 + $0xc8] sm:$0xff]
        %v702 = vld [vmem:[%s675 + $0xd0] sm:$0xff]
        %v703 = vld [vmem:[%s675 + $0xd8] sm:$0xff]
        %v704 = vld [vmem:[%s675 + $0xe0] sm:$0xff]
        %v705 = vld [vmem:[%s675 + $0xe8] sm:$0xff]
        %v706 = vld [vmem:[%s675 + $0xf0] sm:$0xff]
        %v707 = vld [vmem:[%s675 + $0xf8] sm:$0xff]
        %v708 = vunpack.c.l.b16 %v576
        %v709 = vunpack.c.h.b16 %v576
        %v710 = vunpack.c.l.b16 %v590
        %v711 = vunpack.c.h.b16 %v590
        %v712 = vunpack.c.l.b16 %v604
        %v713 = vunpack.c.h.b16 %v604
        %v714 = vunpack.c.l.b16 %v618
        %v715 = vunpack.c.h.b16 %v618
        %v716 = vunpack.c.l.b16 %v632
        %v717 = vunpack.c.h.b16 %v632
        %v718 = vunpack.c.l.b16 %v646
        %v719 = vunpack.c.h.b16 %v646
        %v720 = vunpack.c.l.b16 %v660
        %v721 = vunpack.c.h.b16 %v660
        %v722 = vunpack.c.l.b16 %v674
        %v723 = vunpack.c.h.b16 %v674
        %v724 = vpack.c.b16 %v710, %v708
        %v725 = vpack.c.b16 %v711, %v709
        %v726 = vpack.c.b16 %v714, %v712
        %v727 = vpack.c.b16 %v715, %v713
        %v728 = vpack.c.b16 %v718, %v716
        %v729 = vpack.c.b16 %v719, %v717
        %v730 = vpack.c.b16 %v722, %v720
        %v731 = vpack.c.b16 %v723, %v721
        %v772 = vunpack.c.l.b16 %v676
        %v773 = vunpack.c.h.b16 %v676
        %v774 = vunpack.c.l.b16 %v677
        %v775 = vunpack.c.h.b16 %v677
        %v776 = vunpack.c.l.b16 %v678
        %v777 = vunpack.c.h.b16 %v678
        %v778 = vunpack.c.l.b16 %v679
        %v779 = vunpack.c.h.b16 %v679
        %v780 = vunpack.c.l.b16 %v680
        %v781 = vunpack.c.h.b16 %v680
        %v782 = vunpack.c.l.b16 %v681
        %v783 = vunpack.c.h.b16 %v681
        %v784 = vunpack.c.l.b16 %v682
        %v785 = vunpack.c.h.b16 %v682
        %v786 = vunpack.c.l.b16 %v683
        %v787 = vunpack.c.h.b16 %v683
        %v788 = vunpack.c.l.b16 %v684
        %v789 = vunpack.c.h.b16 %v684
        %v790 = vunpack.c.l.b16 %v685
        %v791 = vunpack.c.h.b16 %v685
        %v792 = vunpack.c.l.b16 %v686
        %v793 = vunpack.c.h.b16 %v686
        %v794 = vunpack.c.l.b16 %v687
        %v795 = vunpack.c.h.b16 %v687
        %v796 = vunpack.c.l.b16 %v688
        %v797 = vunpack.c.h.b16 %v688
        %v798 = vunpack.c.l.b16 %v689
        %v799 = vunpack.c.h.b16 %v689
        %v800 = vunpack.c.l.b16 %v690
        %v801 = vunpack.c.h.b16 %v690
        %v802 = vunpack.c.l.b16 %v691
        %v803 = vunpack.c.h.b16 %v691
        %v804 = vunpack.c.l.b16 %v692
        %v805 = vunpack.c.h.b16 %v692
        %v806 = vunpack.c.l.b16 %v693
        %v807 = vunpack.c.h.b16 %v693
        %v808 = vunpack.c.l.b16 %v694
        %v809 = vunpack.c.h.b16 %v694
        %v810 = vunpack.c.l.b16 %v695
        %v811 = vunpack.c.h.b16 %v695
        %v812 = vunpack.c.l.b16 %v696
        %v813 = vunpack.c.h.b16 %v696
        %v814 = vunpack.c.l.b16 %v697
        %v815 = vunpack.c.h.b16 %v697
        %v816 = vunpack.c.l.b16 %v698
        %v817 = vunpack.c.h.b16 %v698
        %v818 = vunpack.c.l.b16 %v699
        %v819 = vunpack.c.h.b16 %v699
        %v820 = vunpack.c.l.b16 %v700
        %v821 = vunpack.c.h.b16 %v700
        %v822 = vunpack.c.l.b16 %v701
        %v823 = vunpack.c.h.b16 %v701
        %v824 = vunpack.c.l.b16 %v702
        %v825 = vunpack.c.h.b16 %v702
        %v826 = vunpack.c.l.b16 %v703
        %v827 = vunpack.c.h.b16 %v703
        %v828 = vunpack.c.l.b16 %v704
        %v829 = vunpack.c.h.b16 %v704
        %v830 = vunpack.c.l.b16 %v705
        %v831 = vunpack.c.h.b16 %v705
        %v832 = vunpack.c.l.b16 %v706
        %v833 = vunpack.c.h.b16 %v706
        %v834 = vunpack.c.l.b16 %v707
        %v835 = vunpack.c.h.b16 %v707
        %v836 = vpack.c.b16 %v774, %v772
        %v837 = vpack.c.b16 %v775, %v773
        %v838 = vpack.c.b16 %v778, %v776
        %v839 = vpack.c.b16 %v779, %v777
        %v840 = vpack.c.b16 %v782, %v780
        %v841 = vpack.c.b16 %v783, %v781
        %v842 = vpack.c.b16 %v786, %v784
        %v843 = vpack.c.b16 %v787, %v785
        %v844 = vpack.c.b16 %v790, %v788
        %v845 = vpack.c.b16 %v791, %v789
        %v846 = vpack.c.b16 %v794, %v792
        %v847 = vpack.c.b16 %v795, %v793
        %v848 = vpack.c.b16 %v798, %v796
        %v849 = vpack.c.b16 %v799, %v797
        %v850 = vpack.c.b16 %v802, %v800
        %v851 = vpack.c.b16 %v803, %v801
        %v852 = vpack.c.b16 %v806, %v804
        %v853 = vpack.c.b16 %v807, %v805
        %v854 = vpack.c.b16 %v810, %v808
        %v855 = vpack.c.b16 %v811, %v809
        %v856 = vpack.c.b16 %v814, %v812
        %v857 = vpack.c.b16 %v815, %v813
        %v858 = vpack.c.b16 %v818, %v816
        %v859 = vpack.c.b16 %v819, %v817
        %v860 = vpack.c.b16 %v822, %v820
        %v861 = vpack.c.b16 %v823, %v821
        %v862 = vpack.c.b16 %v826, %v824
        %v863 = vpack.c.b16 %v827, %v825
        %v864 = vpack.c.b16 %v830, %v828
        %v865 = vpack.c.b16 %v831, %v829
        %v866 = vpack.c.b16 %v834, %v832
        %v867 = vpack.c.b16 %v835, %v833
        %900 = vmatprep.subr.bf16.mxu0 %v837
        %901 = vmatpush1.bf16.msra.mxu0 %v836
        %902 = vmatprep.subr.bf16.mxu0 %v839
        %903 = vmatpush1.bf16.msra.mxu0 %v838
        %904 = vmatprep.subr.bf16.mxu0 %v841
        %905 = vmatpush1.bf16.msra.mxu0 %v840
        %906 = vmatprep.subr.bf16.mxu0 %v843
        %907 = vmatpush1.bf16.msra.mxu0 %v842
        %908 = vmatprep.subr.bf16.mxu0 %v845
        %909 = vmatpush1.bf16.msra.mxu0 %v844
        %910 = vmatprep.subr.bf16.mxu0 %v847
        %911 = vmatpush1.bf16.msra.mxu0 %v846
        %912 = vmatprep.subr.bf16.mxu0 %v849
        %913 = vmatpush1.bf16.msra.mxu0 %v848
        %914 = vmatprep.subr.bf16.mxu0 %v851
        %915 = vmatpush1.bf16.msra.mxu0 %v850
        %916 = vmatprep.subr.bf16.mxu0 %v853
        %917 = vmatpush1.bf16.msra.mxu0 %v852
        %918 = vmatprep.subr.bf16.mxu0 %v855
        %919 = vmatpush1.bf16.msra.mxu0 %v854
        %920 = vmatprep.subr.bf16.mxu0 %v857
        %921 = vmatpush1.bf16.msra.mxu0 %v856
        %922 = vmatprep.subr.bf16.mxu0 %v859
        %923 = vmatpush1.bf16.msra.mxu0 %v858
        %924 = vmatprep.subr.bf16.mxu0 %v861
        %925 = vmatpush1.bf16.msra.mxu0 %v860
        %926 = vmatprep.subr.bf16.mxu0 %v863
        %927 = vmatpush1.bf16.msra.mxu0 %v862
        %928 = vmatprep.subr.bf16.mxu0 %v865
        %929 = vmatpush1.bf16.msra.mxu0 %v864
        %930 = vmatprep.subr.bf16.mxu0 %v867
        %931 = vmatpush1.bf16.msra.mxu0 %v866
        %932 = vmatprep.mubr.bf16.mxu0 %v725
        %933 = vmatmul.mubr.bf16.gmra.mrb[0].mxu0 %v724
        %v934 = vpop.f32.mrb[0].mxu0
        %v935 = vadd.f32 0.0, %v934
        %v936 = vpop.f32.mrb[0].mxu0
        %v937 = vadd.f32 0.0, %v936
        %v938 = vpop.f32.mrb[0].mxu0
        %v939 = vadd.f32 0.0, %v938
        %v940 = vpop.f32.mrb[0].mxu0
        %v941 = vadd.f32 0.0, %v940
        %942 = vmatprep.mubr.bf16.mxu0 %v727
        %943 = vmatmul.mubr.bf16.gmra.mrb[0].mxu0 %v726
        %v944 = vpop.f32.mrb[0].mxu0
        %v945 = vadd.f32 0.0, %v944
        %v946 = vpop.f32.mrb[0].mxu0
        %v947 = vadd.f32 0.0, %v946
        %v948 = vpop.f32.mrb[0].mxu0
        %v949 = vadd.f32 0.0, %v948
        %v950 = vpop.f32.mrb[0].mxu0
        %v951 = vadd.f32 0.0, %v950
        %952 = vmatprep.mubr.bf16.mxu0 %v729
        %953 = vmatmul.mubr.bf16.gmra.mrb[0].mxu0 %v728
        %v954 = vpop.f32.mrb[0].mxu0
        %v955 = vadd.f32 0.0, %v954
        %v956 = vpop.f32.mrb[0].mxu0
        %v957 = vadd.f32 0.0, %v956
        %v958 = vpop.f32.mrb[0].mxu0
        %v959 = vadd.f32 0.0, %v958
        %v960 = vpop.f32.mrb[0].mxu0
        %v961 = vadd.f32 0.0, %v960
        %962 = vmatprep.mubr.bf16.mxu0 %v731
        %963 = vmatmul.mubr.bf16.gmra.mrb[0].mxu0 %v730
        %v964 = vpop.f32.mrb[0].mxu0
        %v965 = vadd.f32 0.0, %v964
        %v966 = vpop.f32.mrb[0].mxu0
        %v967 = vadd.f32 0.0, %v966
        %v968 = vpop.f32.mrb[0].mxu0
        %v969 = vadd.f32 0.0, %v968
        %v970 = vpop.f32.mrb[0].mxu0
        %v971 = vadd.f32 0.0, %v970
        %972 = vdwg.mxu0
        %v981 = vunpack.c.l.b16 %v512
        %v982 = vunpack.c.h.b16 %v512
        %v983 = vunpack.c.l.b16 %v513
        %v984 = vunpack.c.h.b16 %v513
        %v985 = vunpack.c.l.b16 %v514
        %v986 = vunpack.c.h.b16 %v514
        %v987 = vunpack.c.l.b16 %v515
        %v988 = vunpack.c.h.b16 %v515
        %v989 = vunpack.c.l.b16 %v516
        %v990 = vunpack.c.h.b16 %v516
        %v991 = vunpack.c.l.b16 %v517
        %v992 = vunpack.c.h.b16 %v517
        %v993 = vunpack.c.l.b16 %v518
        %v994 = vunpack.c.h.b16 %v518
        %v995 = vunpack.c.l.b16 %v519
        %v996 = vunpack.c.h.b16 %v519
        %v997 = vpack.c.b16 %v983, %v981
        %v998 = vpack.c.b16 %v984, %v982
        %v999 = vpack.c.b16 %v987, %v985
        %v1000 = vpack.c.b16 %v988, %v986
        %v1001 = vpack.c.b16 %v991, %v989
        %v1002 = vpack.c.b16 %v992, %v990
        %v1003 = vpack.c.b16 %v995, %v993
        %v1004 = vpack.c.b16 %v996, %v994
        %v1045 = vunpack.c.l.b16 %v520
        %v1046 = vunpack.c.h.b16 %v520
        %v1047 = vunpack.c.l.b16 %v521
        %v1048 = vunpack.c.h.b16 %v521
        %v1049 = vunpack.c.l.b16 %v522
        %v1050 = vunpack.c.h.b16 %v522
        %v1051 = vunpack.c.l.b16 %v523
        %v1052 = vunpack.c.h.b16 %v523
        %v1053 = vunpack.c.l.b16 %v524
        %v1054 = vunpack.c.h.b16 %v524
        %v1055 = vunpack.c.l.b16 %v525
        %v1056 = vunpack.c.h.b16 %v525
        %v1057 = vunpack.c.l.b16 %v526
        %v1058 = vunpack.c.h.b16 %v526
        %v1059 = vunpack.c.l.b16 %v527
        %v1060 = vunpack.c.h.b16 %v527
        %v1061 = vunpack.c.l.b16 %v528
        %v1062 = vunpack.c.h.b16 %v528
        %v1063 = vunpack.c.l.b16 %v529
        %v1064 = vunpack.c.h.b16 %v529
        %v1065 = vunpack.c.l.b16 %v530
        %v1066 = vunpack.c.h.b16 %v530
        %v1067 = vunpack.c.l.b16 %v531
        %v1068 = vunpack.c.h.b16 %v531
        %v1069 = vunpack.c.l.b16 %v532
        %v1070 = vunpack.c.h.b16 %v532
        %v1071 = vunpack.c.l.b16 %v533
        %v1072 = vunpack.c.h.b16 %v533
        %v1073 = vunpack.c.l.b16 %v534
        %v1074 = vunpack.c.h.b16 %v534
        %v1075 = vunpack.c.l.b16 %v535
        %v1076 = vunpack.c.h.b16 %v535
        %v1077 = vunpack.c.l.b16 %v536
        %v1078 = vunpack.c.h.b16 %v536
        %v1079 = vunpack.c.l.b16 %v537
        %v1080 = vunpack.c.h.b16 %v537
        %v1081 = vunpack.c.l.b16 %v538
        %v1082 = vunpack.c.h.b16 %v538
        %v1083 = vunpack.c.l.b16 %v539
        %v1084 = vunpack.c.h.b16 %v539
        %v1085 = vunpack.c.l.b16 %v540
        %v1086 = vunpack.c.h.b16 %v540
        %v1087 = vunpack.c.l.b16 %v541
        %v1088 = vunpack.c.h.b16 %v541
        %v1089 = vunpack.c.l.b16 %v542
        %v1090 = vunpack.c.h.b16 %v542
        %v1091 = vunpack.c.l.b16 %v543
        %v1092 = vunpack.c.h.b16 %v543
        %v1093 = vunpack.c.l.b16 %v544
        %v1094 = vunpack.c.h.b16 %v544
        %v1095 = vunpack.c.l.b16 %v545
        %v1096 = vunpack.c.h.b16 %v545
        %v1097 = vunpack.c.l.b16 %v546
        %v1098 = vunpack.c.h.b16 %v546
        %v1099 = vunpack.c.l.b16 %v547
        %v1100 = vunpack.c.h.b16 %v547
        %v1101 = vunpack.c.l.b16 %v548
        %v1102 = vunpack.c.h.b16 %v548
        %v1103 = vunpack.c.l.b16 %v549
        %v1104 = vunpack.c.h.b16 %v549
        %v1105 = vunpack.c.l.b16 %v550
        %v1106 = vunpack.c.h.b16 %v550
        %v1107 = vunpack.c.l.b16 %v551
        %v1108 = vunpack.c.h.b16 %v551
        %v1109 = vpack.c.b16 %v1047, %v1045
        %v1110 = vpack.c.b16 %v1048, %v1046
        %v1111 = vpack.c.b16 %v1051, %v1049
        %v1112 = vpack.c.b16 %v1052, %v1050
        %v1113 = vpack.c.b16 %v1055, %v1053
        %v1114 = vpack.c.b16 %v1056, %v1054
        %v1115 = vpack.c.b16 %v1059, %v1057
        %v1116 = vpack.c.b16 %v1060, %v1058
        %v1117 = vpack.c.b16 %v1063, %v1061
        %v1118 = vpack.c.b16 %v1064, %v1062
        %v1119 = vpack.c.b16 %v1067, %v1065
        %v1120 = vpack.c.b16 %v1068, %v1066
        %v1121 = vpack.c.b16 %v1071, %v1069
        %v1122 = vpack.c.b16 %v1072, %v1070
        %v1123 = vpack.c.b16 %v1075, %v1073
        %v1124 = vpack.c.b16 %v1076, %v1074
        %v1125 = vpack.c.b16 %v1079, %v1077
        %v1126 = vpack.c.b16 %v1080, %v1078
        %v1127 = vpack.c.b16 %v1083, %v1081
        %v1128 = vpack.c.b16 %v1084, %v1082
        %v1129 = vpack.c.b16 %v1087, %v1085
        %v1130 = vpack.c.b16 %v1088, %v1086
        %v1131 = vpack.c.b16 %v1091, %v1089
        %v1132 = vpack.c.b16 %v1092, %v1090
        %v1133 = vpack.c.b16 %v1095, %v1093
        %v1134 = vpack.c.b16 %v1096, %v1094
        %v1135 = vpack.c.b16 %v1099, %v1097
        %v1136 = vpack.c.b16 %v1100, %v1098
        %v1137 = vpack.c.b16 %v1103, %v1101
        %v1138 = vpack.c.b16 %v1104, %v1102
        %v1139 = vpack.c.b16 %v1107, %v1105
        %v1140 = vpack.c.b16 %v1108, %v1106
        %1173 = vmatprep.subr.bf16.mxu0 %v1110
        %1174 = vmatpush1.bf16.msra.mxu0 %v1109
        %1175 = vmatprep.subr.bf16.mxu0 %v1112
        %1176 = vmatpush1.bf16.msra.mxu0 %v1111
        %1177 = vmatprep.subr.bf16.mxu0 %v1114
        %1178 = vmatpush1.bf16.msra.mxu0 %v1113
        %1179 = vmatprep.subr.bf16.mxu0 %v1116
        %1180 = vmatpush1.bf16.msra.mxu0 %v1115
        %1181 = vmatprep.subr.bf16.mxu0 %v1118
        %1182 = vmatpush1.bf16.msra.mxu0 %v1117
        %1183 = vmatprep.subr.bf16.mxu0 %v1120
        %1184 = vmatpush1.bf16.msra.mxu0 %v1119
        %1185 = vmatprep.subr.bf16.mxu0 %v1122
        %1186 = vmatpush1.bf16.msra.mxu0 %v1121
        %1187 = vmatprep.subr.bf16.mxu0 %v1124
        %1188 = vmatpush1.bf16.msra.mxu0 %v1123
        %1189 = vmatprep.subr.bf16.mxu0 %v1126
        %1190 = vmatpush1.bf16.msra.mxu0 %v1125
        %1191 = vmatprep.subr.bf16.mxu0 %v1128
        %1192 = vmatpush1.bf16.msra.mxu0 %v1127
        %1193 = vmatprep.subr.bf16.mxu0 %v1130
        %1194 = vmatpush1.bf16.msra.mxu0 %v1129
        %1195 = vmatprep.subr.bf16.mxu0 %v1132
        %1196 = vmatpush1.bf16.msra.mxu0 %v1131
        %1197 = vmatprep.subr.bf16.mxu0 %v1134
        %1198 = vmatpush1.bf16.msra.mxu0 %v1133
        %1199 = vmatprep.subr.bf16.mxu0 %v1136
        %1200 = vmatpush1.bf16.msra.mxu0 %v1135
        %1201 = vmatprep.subr.bf16.mxu0 %v1138
        %1202 = vmatpush1.bf16.msra.mxu0 %v1137
        %1203 = vmatprep.subr.bf16.mxu0 %v1140
        %1204 = vmatpush1.bf16.msra.mxu0 %v1139
        %1205 = vmatprep.mubr.bf16.mxu0 %v998
        %1206 = vmatmul.mubr.bf16.gmra.mrb[0].mxu0 %v997
        %v1207 = vpop.f32.mrb[0].mxu0
        %v1208 = vadd.f32 %v935, %v1207
        %v1209 = vpop.f32.mrb[0].mxu0
        %v1210 = vadd.f32 %v937, %v1209
        %v1211 = vpop.f32.mrb[0].mxu0
        %v1212 = vadd.f32 %v939, %v1211
        %v1213 = vpop.f32.mrb[0].mxu0
        %v1214 = vadd.f32 %v941, %v1213
        %1215 = vmatprep.mubr.bf16.mxu0 %v1000
        %1216 = vmatmul.mubr.bf16.gmra.mrb[0].mxu0 %v999
        %v1217 = vpop.f32.mrb[0].mxu0
        %v1218 = vadd.f32 %v945, %v1217
        %v1219 = vpop.f32.mrb[0].mxu0
        %v1220 = vadd.f32 %v947, %v1219
        %v1221 = vpop.f32.mrb[0].mxu0
        %v1222 = vadd.f32 %v949, %v1221
        %v1223 = vpop.f32.mrb[0].mxu0
        %v1224 = vadd.f32 %v951, %v1223
        %1225 = vmatprep.mubr.bf16.mxu0 %v1002
        %1226 = vmatmul.mubr.bf16.gmra.mrb[0].mxu0 %v1001
        %v1227 = vpop.f32.mrb[0].mxu0
        %v1228 = vadd.f32 %v955, %v1227
        %v1229 = vpop.f32.mrb[0].mxu0
        %v1230 = vadd.f32 %v957, %v1229
        %v1231 = vpop.f32.mrb[0].mxu0
        %v1232 = vadd.f32 %v959, %v1231
        %v1233 = vpop.f32.mrb[0].mxu0
        %v1234 = vadd.f32 %v961, %v1233
        %1235 = vmatprep.mubr.bf16.mxu0 %v1004
        %1236 = vmatmul.mubr.bf16.gmra.mrb[0].mxu0 %v1003
        %v1237 = vpop.f32.mrb[0].mxu0
        %v1238 = vadd.f32 %v965, %v1237
        %v1239 = vpop.f32.mrb[0].mxu0
        %v1240 = vadd.f32 %v967, %v1239
        %v1241 = vpop.f32.mrb[0].mxu0
        %v1242 = vadd.f32 %v969, %v1241
        %v1243 = vpop.f32.mrb[0].mxu0
        %v1244 = vadd.f32 %v971, %v1243
        %1245 = vdwg.mxu0
        %v1246 = vld [vmem:[#allocation2] sm:$0xee]
        %v1247 = vld [vmem:[#allocation2 + $0x10] sm:$0xee]
        %v1248 = vld [vmem:[#allocation2 + $0x20] sm:$0xee]
        %v1249 = vld [vmem:[#allocation2 + $0x30] sm:$0xee]
        %v1250 = vld [vmem:[#allocation2 + $0x40] sm:$0xee]
        %v1251 = vld [vmem:[#allocation2 + $0x50] sm:$0xee]
        %v1252 = vld [vmem:[#allocation2 + $0x60] sm:$0xee]
        %v1253 = vld [vmem:[#allocation2 + $0x70] sm:$0xee]
        %vm1270 = vcmask 1042432
        %vm1271 = vcmask 1046532
        %vm1272 = vmor %vm1270, %vm1271
        %v1273 = vrot.slane %v1246, 5
        %v1274 = vrot.slane %v1273, 4
        %v1275 = vrot.slane %v552, 5
        %v1276 = vsel %vm1272, %v1274, %v1275
        %v1277 = vrot.slane %v1247, 5
        %v1278 = vrot.slane %v1277, 4
        %v1279 = vrot.slane %v553, 5
        %v1280 = vsel %vm1272, %v1278, %v1279
        %v1281 = vrot.slane %v1248, 5
        %v1282 = vrot.slane %v1281, 4
        %v1283 = vrot.slane %v554, 5
        %v1284 = vsel %vm1272, %v1282, %v1283
        %v1285 = vrot.slane %v1249, 5
        %v1286 = vrot.slane %v1285, 4
        %v1287 = vrot.slane %v555, 5
        %v1288 = vsel %vm1272, %v1286, %v1287
        %v1289 = vrot.slane %v1250, 5
        %v1290 = vrot.slane %v1289, 4
        %v1291 = vrot.slane %v556, 5
        %v1292 = vsel %vm1272, %v1290, %v1291
        %v1293 = vrot.slane %v1251, 5
        %v1294 = vrot.slane %v1293, 4
        %v1295 = vrot.slane %v557, 5
        %v1296 = vsel %vm1272, %v1294, %v1295
        %v1297 = vrot.slane %v1252, 5
        %v1298 = vrot.slane %v1297, 4
        %v1299 = vrot.slane %v558, 5
        %v1300 = vsel %vm1272, %v1298, %v1299
        %v1301 = vrot.slane %v1253, 5
        %v1302 = vrot.slane %v1301, 4
        %v1303 = vrot.slane %v559, 5
        %v1304 = vsel %vm1272, %v1302, %v1303
        %s1305 = scalar_lea.vmem %s3, 512
        %v1306 = vld [vmem:[%s1305] sm:$0xff]
        %v1307 = vld [vmem:[%s1305 + $0x8] sm:$0xff]
        %v1308 = vld [vmem:[%s1305 + $0x10] sm:$0xff]
        %v1309 = vld [vmem:[%s1305 + $0x18] sm:$0xff]
        %v1310 = vld [vmem:[%s1305 + $0x20] sm:$0xff]
        %v1311 = vld [vmem:[%s1305 + $0x28] sm:$0xff]
        %v1312 = vld [vmem:[%s1305 + $0x30] sm:$0xff]
        %v1313 = vld [vmem:[%s1305 + $0x38] sm:$0xff]
        %v1314 = vld [vmem:[%s1305 + $0x40] sm:$0xff]
        %v1315 = vld [vmem:[%s1305 + $0x48] sm:$0xff]
        %v1316 = vld [vmem:[%s1305 + $0x50] sm:$0xff]
        %v1317 = vld [vmem:[%s1305 + $0x58] sm:$0xff]
        %v1318 = vld [vmem:[%s1305 + $0x60] sm:$0xff]
        %v1319 = vld [vmem:[%s1305 + $0x68] sm:$0xff]
        %v1320 = vld [vmem:[%s1305 + $0x70] sm:$0xff]
        %v1321 = vld [vmem:[%s1305 + $0x78] sm:$0xff]
        %v1322 = vld [vmem:[%s1305 + $0x80] sm:$0xff]
        %v1323 = vld [vmem:[%s1305 + $0x88] sm:$0xff]
        %v1324 = vld [vmem:[%s1305 + $0x90] sm:$0xff]
        %v1325 = vld [vmem:[%s1305 + $0x98] sm:$0xff]
        %v1326 = vld [vmem:[%s1305 + $0xa0] sm:$0xff]
        %v1327 = vld [vmem:[%s1305 + $0xa8] sm:$0xff]
        %v1328 = vld [vmem:[%s1305 + $0xb0] sm:$0xff]
        %v1329 = vld [vmem:[%s1305 + $0xb8] sm:$0xff]
        %v1330 = vld [vmem:[%s1305 + $0xc0] sm:$0xff]
        %v1331 = vld [vmem:[%s1305 + $0xc8] sm:$0xff]
        %v1332 = vld [vmem:[%s1305 + $0xd0] sm:$0xff]
        %v1333 = vld [vmem:[%s1305 + $0xd8] sm:$0xff]
        %v1334 = vld [vmem:[%s1305 + $0xe0] sm:$0xff]
        %v1335 = vld [vmem:[%s1305 + $0xe8] sm:$0xff]
        %v1336 = vld [vmem:[%s1305 + $0xf0] sm:$0xff]
        %v1337 = vld [vmem:[%s1305 + $0xf8] sm:$0xff]
        %v1338 = vunpack.c.l.b16 %v1276
        %v1339 = vunpack.c.h.b16 %v1276
        %v1340 = vunpack.c.l.b16 %v1280
        %v1341 = vunpack.c.h.b16 %v1280
        %v1342 = vunpack.c.l.b16 %v1284
        %v1343 = vunpack.c.h.b16 %v1284
        %v1344 = vunpack.c.l.b16 %v1288
        %v1345 = vunpack.c.h.b16 %v1288
        %v1346 = vunpack.c.l.b16 %v1292
        %v1347 = vunpack.c.h.b16 %v1292
        %v1348 = vunpack.c.l.b16 %v1296
        %v1349 = vunpack.c.h.b16 %v1296
        %v1350 = vunpack.c.l.b16 %v1300
        %v1351 = vunpack.c.h.b16 %v1300
        %v1352 = vunpack.c.l.b16 %v1304
        %v1353 = vunpack.c.h.b16 %v1304
        %v1354 = vpack.c.b16 %v1340, %v1338
        %v1355 = vpack.c.b16 %v1341, %v1339
        %v1356 = vpack.c.b16 %v1344, %v1342
        %v1357 = vpack.c.b16 %v1345, %v1343
        %v1358 = vpack.c.b16 %v1348, %v1346
        %v1359 = vpack.c.b16 %v1349, %v1347
        %v1360 = vpack.c.b16 %v1352, %v1350
        %v1361 = vpack.c.b16 %v1353, %v1351
        %v1402 = vunpack.c.l.b16 %v1306
        %v1403 = vunpack.c.h.b16 %v1306
        %v1404 = vunpack.c.l.b16 %v1307
        %v1405 = vunpack.c.h.b16 %v1307
        %v1406 = vunpack.c.l.b16 %v1308
        %v1407 = vunpack.c.h.b16 %v1308
        %v1408 = vunpack.c.l.b16 %v1309
        %v1409 = vunpack.c.h.b16 %v1309
        %v1410 = vunpack.c.l.b16 %v1310
        %v1411 = vunpack.c.h.b16 %v1310
        %v1412 = vunpack.c.l.b16 %v1311
        %v1413 = vunpack.c.h.b16 %v1311
        %v1414 = vunpack.c.l.b16 %v1312
        %v1415 = vunpack.c.h.b16 %v1312
        %v1416 = vunpack.c.l.b16 %v1313
        %v1417 = vunpack.c.h.b16 %v1313
        %v1418 = vunpack.c.l.b16 %v1314
        %v1419 = vunpack.c.h.b16 %v1314
        %v1420 = vunpack.c.l.b16 %v1315
        %v1421 = vunpack.c.h.b16 %v1315
        %v1422 = vunpack.c.l.b16 %v1316
        %v1423 = vunpack.c.h.b16 %v1316
        %v1424 = vunpack.c.l.b16 %v1317
        %v1425 = vunpack.c.h.b16 %v1317
        %v1426 = vunpack.c.l.b16 %v1318
        %v1427 = vunpack.c.h.b16 %v1318
        %v1428 = vunpack.c.l.b16 %v1319
        %v1429 = vunpack.c.h.b16 %v1319
        %v1430 = vunpack.c.l.b16 %v1320
        %v1431 = vunpack.c.h.b16 %v1320
        %v1432 = vunpack.c.l.b16 %v1321
        %v1433 = vunpack.c.h.b16 %v1321
        %v1434 = vunpack.c.l.b16 %v1322
        %v1435 = vunpack.c.h.b16 %v1322
        %v1436 = vunpack.c.l.b16 %v1323
        %v1437 = vunpack.c.h.b16 %v1323
        %v1438 = vunpack.c.l.b16 %v1324
        %v1439 = vunpack.c.h.b16 %v1324
        %v1440 = vunpack.c.l.b16 %v1325
        %v1441 = vunpack.c.h.b16 %v1325
        %v1442 = vunpack.c.l.b16 %v1326
        %v1443 = vunpack.c.h.b16 %v1326
        %v1444 = vunpack.c.l.b16 %v1327
        %v1445 = vunpack.c.h.b16 %v1327
        %v1446 = vunpack.c.l.b16 %v1328
        %v1447 = vunpack.c.h.b16 %v1328
        %v1448 = vunpack.c.l.b16 %v1329
        %v1449 = vunpack.c.h.b16 %v1329
        %v1450 = vunpack.c.l.b16 %v1330
        %v1451 = vunpack.c.h.b16 %v1330
        %v1452 = vunpack.c.l.b16 %v1331
        %v1453 = vunpack.c.h.b16 %v1331
        %v1454 = vunpack.c.l.b16 %v1332
        %v1455 = vunpack.c.h.b16 %v1332
        %v1456 = vunpack.c.l.b16 %v1333
        %v1457 = vunpack.c.h.b16 %v1333
        %v1458 = vunpack.c.l.b16 %v1334
        %v1459 = vunpack.c.h.b16 %v1334
        %v1460 = vunpack.c.l.b16 %v1335
        %v1461 = vunpack.c.h.b16 %v1335
        %v1462 = vunpack.c.l.b16 %v1336
        %v1463 = vunpack.c.h.b16 %v1336
        %v1464 = vunpack.c.l.b16 %v1337
        %v1465 = vunpack.c.h.b16 %v1337
        %v1466 = vpack.c.b16 %v1404, %v1402
        %v1467 = vpack.c.b16 %v1405, %v1403
        %v1468 = vpack.c.b16 %v1408, %v1406
        %v1469 = vpack.c.b16 %v1409, %v1407
        %v1470 = vpack.c.b16 %v1412, %v1410
        %v1471 = vpack.c.b16 %v1413, %v1411
        %v1472 = vpack.c.b16 %v1416, %v1414
        %v1473 = vpack.c.b16 %v1417, %v1415
        %v1474 = vpack.c.b16 %v1420, %v1418
        %v1475 = vpack.c.b16 %v1421, %v1419
        %v1476 = vpack.c.b16 %v1424, %v1422
        %v1477 = vpack.c.b16 %v1425, %v1423
        %v1478 = vpack.c.b16 %v1428, %v1426
        %v1479 = vpack.c.b16 %v1429, %v1427
        %v1480 = vpack.c.b16 %v1432, %v1430
        %v1481 = vpack.c.b16 %v1433, %v1431
        %v1482 = vpack.c.b16 %v1436, %v1434
        %v1483 = vpack.c.b16 %v1437, %v1435
        %v1484 = vpack.c.b16 %v1440, %v1438
        %v1485 = vpack.c.b16 %v1441, %v1439
        %v1486 = vpack.c.b16 %v1444, %v1442
        %v1487 = vpack.c.b16 %v1445, %v1443
        %v1488 = vpack.c.b16 %v1448, %v1446
        %v1489 = vpack.c.b16 %v1449, %v1447
        %v1490 = vpack.c.b16 %v1452, %v1450
        %v1491 = vpack.c.b16 %v1453, %v1451
        %v1492 = vpack.c.b16 %v1456, %v1454
        %v1493 = vpack.c.b16 %v1457, %v1455
        %v1494 = vpack.c.b16 %v1460, %v1458
        %v1495 = vpack.c.b16 %v1461, %v1459
        %v1496 = vpack.c.b16 %v1464, %v1462
        %v1497 = vpack.c.b16 %v1465, %v1463
        %1530 = vmatprep.subr.bf16.mxu0 %v1467
        %1531 = vmatpush1.bf16.msra.mxu0 %v1466
        %1532 = vmatprep.subr.bf16.mxu0 %v1469
        %1533 = vmatpush1.bf16.msra.mxu0 %v1468
        %1534 = vmatprep.subr.bf16.mxu0 %v1471
        %1535 = vmatpush1.bf16.msra.mxu0 %v1470
        %1536 = vmatprep.subr.bf16.mxu0 %v1473
        %1537 = vmatpush1.bf16.msra.mxu0 %v1472
        %1538 = vmatprep.subr.bf16.mxu0 %v1475
        %1539 = vmatpush1.bf16.msra.mxu0 %v1474
        %1540 = vmatprep.subr.bf16.mxu0 %v1477
        %1541 = vmatpush1.bf16.msra.mxu0 %v1476
        %1542 = vmatprep.subr.bf16.mxu0 %v1479
        %1543 = vmatpush1.bf16.msra.mxu0 %v1478
        %1544 = vmatprep.subr.bf16.mxu0 %v1481
        %1545 = vmatpush1.bf16.msra.mxu0 %v1480
        %1546 = vmatprep.subr.bf16.mxu0 %v1483
        %1547 = vmatpush1.bf16.msra.mxu0 %v1482
        %1548 = vmatprep.subr.bf16.mxu0 %v1485
        %1549 = vmatpush1.bf16.msra.mxu0 %v1484
        %1550 = vmatprep.subr.bf16.mxu0 %v1487
        %1551 = vmatpush1.bf16.msra.mxu0 %v1486
        %1552 = vmatprep.subr.bf16.mxu0 %v1489
        %1553 = vmatpush1.bf16.msra.mxu0 %v1488
        %1554 = vmatprep.subr.bf16.mxu0 %v1491
        %1555 = vmatpush1.bf16.msra.mxu0 %v1490
        %1556 = vmatprep.subr.bf16.mxu0 %v1493
        %1557 = vmatpush1.bf16.msra.mxu0 %v1492
        %1558 = vmatprep.subr.bf16.mxu0 %v1495
        %1559 = vmatpush1.bf16.msra.mxu0 %v1494
        %1560 = vmatprep.subr.bf16.mxu0 %v1497
        %1561 = vmatpush1.bf16.msra.mxu0 %v1496
        %1562 = vmatprep.mubr.bf16.mxu0 %v1355
        %1563 = vmatmul.mubr.bf16.gmra.mrb[0].mxu0 %v1354
        %v1564 = vpop.f32.mrb[0].mxu0
        %v1565 = vadd.f32 0.0, %v1564
        %v1566 = vpop.f32.mrb[0].mxu0
        %v1567 = vadd.f32 0.0, %v1566
        %v1568 = vpop.f32.mrb[0].mxu0
        %v1569 = vadd.f32 0.0, %v1568
        %v1570 = vpop.f32.mrb[0].mxu0
        %v1571 = vadd.f32 0.0, %v1570
        %1572 = vmatprep.mubr.bf16.mxu0 %v1357
        %1573 = vmatmul.mubr.bf16.gmra.mrb[0].mxu0 %v1356
        %v1574 = vpop.f32.mrb[0].mxu0
        %v1575 = vadd.f32 0.0, %v1574
        %v1576 = vpop.f32.mrb[0].mxu0
        %v1577 = vadd.f32 0.0, %v1576
        %v1578 = vpop.f32.mrb[0].mxu0
        %v1579 = vadd.f32 0.0, %v1578
        %v1580 = vpop.f32.mrb[0].mxu0
        %v1581 = vadd.f32 0.0, %v1580
        %1582 = vmatprep.mubr.bf16.mxu0 %v1359
        %1583 = vmatmul.mubr.bf16.gmra.mrb[0].mxu0 %v1358
        %v1584 = vpop.f32.mrb[0].mxu0
        %v1585 = vadd.f32 0.0, %v1584
        %v1586 = vpop.f32.mrb[0].mxu0
        %v1587 = vadd.f32 0.0, %v1586
        %v1588 = vpop.f32.mrb[0].mxu0
        %v1589 = vadd.f32 0.0, %v1588
        %v1590 = vpop.f32.mrb[0].mxu0
        %v1591 = vadd.f32 0.0, %v1590
        %1592 = vmatprep.mubr.bf16.mxu0 %v1361
        %1593 = vmatmul.mubr.bf16.gmra.mrb[0].mxu0 %v1360
        %v1594 = vpop.f32.mrb[0].mxu0
        %v1595 = vadd.f32 0.0, %v1594
        %v1596 = vpop.f32.mrb[0].mxu0
        %v1597 = vadd.f32 0.0, %v1596
        %v1598 = vpop.f32.mrb[0].mxu0
        %v1599 = vadd.f32 0.0, %v1598
        %v1600 = vpop.f32.mrb[0].mxu0
        %v1601 = vadd.f32 0.0, %v1600
        %1602 = vdwg.mxu0
        %v1603 = vadd.f32 %v1208, %v1565
        %v1604 = vadd.f32 %v1210, %v1567
        %v1605 = vadd.f32 %v1212, %v1569
        %v1606 = vadd.f32 %v1214, %v1571
        %v1607 = vadd.f32 %v1218, %v1575
        %v1608 = vadd.f32 %v1220, %v1577
        %v1609 = vadd.f32 %v1222, %v1579
        %v1610 = vadd.f32 %v1224, %v1581
        %v1611 = vadd.f32 %v1228, %v1585
        %v1612 = vadd.f32 %v1230, %v1587
        %v1613 = vadd.f32 %v1232, %v1589
        %v1614 = vadd.f32 %v1234, %v1591
        %v1615 = vadd.f32 %v1238, %v1595
        %v1616 = vadd.f32 %v1240, %v1597
        %v1617 = vadd.f32 %v1242, %v1599
        %v1618 = vadd.f32 %v1244, %v1601
        %v1619 = vld [vmem:[%s449] sm:$0xff]
        %v1620 = vld [vmem:[%s449 + $0x10] sm:$0xff]
        %v1621 = vld [vmem:[%s449 + $0x20] sm:$0xff]
        %v1622 = vld [vmem:[%s449 + $0x30] sm:$0xff]
        %v1623 = vld [vmem:[%s449 + $0x40] sm:$0xff]
        %v1624 = vld [vmem:[%s449 + $0x50] sm:$0xff]
        %v1625 = vld [vmem:[%s449 + $0x60] sm:$0xff]
        %v1626 = vld [vmem:[%s449 + $0x70] sm:$0xff]
        %s1627 = scalar_lea.vmem %s3, 768
        %v1628 = vld [vmem:[%s1627] sm:$0xff]
        %v1629 = vld [vmem:[%s1627 + $0x8] sm:$0xff]
        %v1630 = vld [vmem:[%s1627 + $0x10] sm:$0xff]
        %v1631 = vld [vmem:[%s1627 + $0x18] sm:$0xff]
        %v1632 = vld [vmem:[%s1627 + $0x20] sm:$0xff]
        %v1633 = vld [vmem:[%s1627 + $0x28] sm:$0xff]
        %v1634 = vld [vmem:[%s1627 + $0x30] sm:$0xff]
        %v1635 = vld [vmem:[%s1627 + $0x38] sm:$0xff]
        %v1636 = vld [vmem:[%s1627 + $0x40] sm:$0xff]
        %v1637 = vld [vmem:[%s1627 + $0x48] sm:$0xff]
        %v1638 = vld [vmem:[%s1627 + $0x50] sm:$0xff]
        %v1639 = vld [vmem:[%s1627 + $0x58] sm:$0xff]
        %v1640 = vld [vmem:[%s1627 + $0x60] sm:$0xff]
        %v1641 = vld [vmem:[%s1627 + $0x68] sm:$0xff]
        %v1642 = vld [vmem:[%s1627 + $0x70] sm:$0xff]
        %v1643 = vld [vmem:[%s1627 + $0x78] sm:$0xff]
        %v1644 = vld [vmem:[%s1627 + $0x80] sm:$0xff]
        %v1645 = vld [vmem:[%s1627 + $0x88] sm:$0xff]
        %v1646 = vld [vmem:[%s1627 + $0x90] sm:$0xff]
        %v1647 = vld [vmem:[%s1627 + $0x98] sm:$0xff]
        %v1648 = vld [vmem:[%s1627 + $0xa0] sm:$0xff]
        %v1649 = vld [vmem:[%s1627 + $0xa8] sm:$0xff]
        %v1650 = vld [vmem:[%s1627 + $0xb0] sm:$0xff]
        %v1651 = vld [vmem:[%s1627 + $0xb8] sm:$0xff]
        %v1652 = vld [vmem:[%s1627 + $0xc0] sm:$0xff]
        %v1653 = vld [vmem:[%s1627 + $0xc8] sm:$0xff]
        %v1654 = vld [vmem:[%s1627 + $0xd0] sm:$0xff]
        %v1655 = vld [vmem:[%s1627 + $0xd8] sm:$0xff]
        %v1656 = vld [vmem:[%s1627 + $0xe0] sm:$0xff]
        %v1657 = vld [vmem:[%s1627 + $0xe8] sm:$0xff]
        %v1658 = vld [vmem:[%s1627 + $0xf0] sm:$0xff]
        %v1659 = vld [vmem:[%s1627 + $0xf8] sm:$0xff]
        %v1668 = vunpack.c.l.b16 %v1619
        %v1669 = vunpack.c.h.b16 %v1619
        %v1670 = vunpack.c.l.b16 %v1620
        %v1671 = vunpack.c.h.b16 %v1620
        %v1672 = vunpack.c.l.b16 %v1621
        %v1673 = vunpack.c.h.b16 %v1621
        %v1674 = vunpack.c.l.b16 %v1622
        %v1675 = vunpack.c.h.b16 %v1622
        %v1676 = vunpack.c.l.b16 %v1623
        %v1677 = vunpack.c.h.b16 %v1623
        %v1678 = vunpack.c.l.b16 %v1624
        %v1679 = vunpack.c.h.b16 %v1624
        %v1680 = vunpack.c.l.b16 %v1625
        %v1681 = vunpack.c.h.b16 %v1625
        %v1682 = vunpack.c.l.b16 %v1626
        %v1683 = vunpack.c.h.b16 %v1626
        %v1684 = vpack.c.b16 %v1670, %v1668
        %v1685 = vpack.c.b16 %v1671, %v1669
        %v1686 = vpack.c.b16 %v1674, %v1672
        %v1687 = vpack.c.b16 %v1675, %v1673
        %v1688 = vpack.c.b16 %v1678, %v1676
        %v1689 = vpack.c.b16 %v1679, %v1677
        %v1690 = vpack.c.b16 %v1682, %v1680
        %v1691 = vpack.c.b16 %v1683, %v1681
        %v1732 = vunpack.c.l.b16 %v1628
        %v1733 = vunpack.c.h.b16 %v1628
        %v1734 = vunpack.c.l.b16 %v1629
        %v1735 = vunpack.c.h.b16 %v1629
        %v1736 = vunpack.c.l.b16 %v1630
        %v1737 = vunpack.c.h.b16 %v1630
        %v1738 = vunpack.c.l.b16 %v1631
        %v1739 = vunpack.c.h.b16 %v1631
        %v1740 = vunpack.c.l.b16 %v1632
        %v1741 = vunpack.c.h.b16 %v1632
        %v1742 = vunpack.c.l.b16 %v1633
        %v1743 = vunpack.c.h.b16 %v1633
        %v1744 = vunpack.c.l.b16 %v1634
        %v1745 = vunpack.c.h.b16 %v1634
        %v1746 = vunpack.c.l.b16 %v1635
        %v1747 = vunpack.c.h.b16 %v1635
        %v1748 = vunpack.c.l.b16 %v1636
        %v1749 = vunpack.c.h.b16 %v1636
        %v1750 = vunpack.c.l.b16 %v1637
        %v1751 = vunpack.c.h.b16 %v1637
        %v1752 = vunpack.c.l.b16 %v1638
        %v1753 = vunpack.c.h.b16 %v1638
        %v1754 = vunpack.c.l.b16 %v1639
        %v1755 = vunpack.c.h.b16 %v1639
        %v1756 = vunpack.c.l.b16 %v1640
        %v1757 = vunpack.c.h.b16 %v1640
        %v1758 = vunpack.c.l.b16 %v1641
        %v1759 = vunpack.c.h.b16 %v1641
        %v1760 = vunpack.c.l.b16 %v1642
        %v1761 = vunpack.c.h.b16 %v1642
        %v1762 = vunpack.c.l.b16 %v1643
        %v1763 = vunpack.c.h.b16 %v1643
        %v1764 = vunpack.c.l.b16 %v1644
        %v1765 = vunpack.c.h.b16 %v1644
        %v1766 = vunpack.c.l.b16 %v1645
        %v1767 = vunpack.c.h.b16 %v1645
        %v1768 = vunpack.c.l.b16 %v1646
        %v1769 = vunpack.c.h.b16 %v1646
        %v1770 = vunpack.c.l.b16 %v1647
        %v1771 = vunpack.c.h.b16 %v1647
        %v1772 = vunpack.c.l.b16 %v1648
        %v1773 = vunpack.c.h.b16 %v1648
        %v1774 = vunpack.c.l.b16 %v1649
        %v1775 = vunpack.c.h.b16 %v1649
        %v1776 = vunpack.c.l.b16 %v1650
        %v1777 = vunpack.c.h.b16 %v1650
        %v1778 = vunpack.c.l.b16 %v1651
        %v1779 = vunpack.c.h.b16 %v1651
        %v1780 = vunpack.c.l.b16 %v1652
        %v1781 = vunpack.c.h.b16 %v1652
        %v1782 = vunpack.c.l.b16 %v1653
        %v1783 = vunpack.c.h.b16 %v1653
        %v1784 = vunpack.c.l.b16 %v1654
        %v1785 = vunpack.c.h.b16 %v1654
        %v1786 = vunpack.c.l.b16 %v1655
        %v1787 = vunpack.c.h.b16 %v1655
        %v1788 = vunpack.c.l.b16 %v1656
        %v1789 = vunpack.c.h.b16 %v1656
        %v1790 = vunpack.c.l.b16 %v1657
        %v1791 = vunpack.c.h.b16 %v1657
        %v1792 = vunpack.c.l.b16 %v1658
        %v1793 = vunpack.c.h.b16 %v1658
        %v1794 = vunpack.c.l.b16 %v1659
        %v1795 = vunpack.c.h.b16 %v1659
        %v1796 = vpack.c.b16 %v1734, %v1732
        %v1797 = vpack.c.b16 %v1735, %v1733
        %v1798 = vpack.c.b16 %v1738, %v1736
        %v1799 = vpack.c.b16 %v1739, %v1737
        %v1800 = vpack.c.b16 %v1742, %v1740
        %v1801 = vpack.c.b16 %v1743, %v1741
        %v1802 = vpack.c.b16 %v1746, %v1744
        %v1803 = vpack.c.b16 %v1747, %v1745
        %v1804 = vpack.c.b16 %v1750, %v1748
        %v1805 = vpack.c.b16 %v1751, %v1749
        %v1806 = vpack.c.b16 %v1754, %v1752
        %v1807 = vpack.c.b16 %v1755, %v1753
        %v1808 = vpack.c.b16 %v1758, %v1756
        %v1809 = vpack.c.b16 %v1759, %v1757
        %v1810 = vpack.c.b16 %v1762, %v1760
        %v1811 = vpack.c.b16 %v1763, %v1761
        %v1812 = vpack.c.b16 %v1766, %v1764
        %v1813 = vpack.c.b16 %v1767, %v1765
        %v1814 = vpack.c.b16 %v1770, %v1768
        %v1815 = vpack.c.b16 %v1771, %v1769
        %v1816 = vpack.c.b16 %v1774, %v1772
        %v1817 = vpack.c.b16 %v1775, %v1773
        %v1818 = vpack.c.b16 %v1778, %v1776
        %v1819 = vpack.c.b16 %v1779, %v1777
        %v1820 = vpack.c.b16 %v1782, %v1780
        %v1821 = vpack.c.b16 %v1783, %v1781
        %v1822 = vpack.c.b16 %v1786, %v1784
        %v1823 = vpack.c.b16 %v1787, %v1785
        %v1824 = vpack.c.b16 %v1790, %v1788
        %v1825 = vpack.c.b16 %v1791, %v1789
        %v1826 = vpack.c.b16 %v1794, %v1792
        %v1827 = vpack.c.b16 %v1795, %v1793
        %1860 = vmatprep.subr.bf16.mxu0 %v1797
        %1861 = vmatpush1.bf16.msra.mxu0 %v1796
        %1862 = vmatprep.subr.bf16.mxu0 %v1799
        %1863 = vmatpush1.bf16.msra.mxu0 %v1798
        %1864 = vmatprep.subr.bf16.mxu0 %v1801
        %1865 = vmatpush1.bf16.msra.mxu0 %v1800
        %1866 = vmatprep.subr.bf16.mxu0 %v1803
        %1867 = vmatpush1.bf16.msra.mxu0 %v1802
        %1868 = vmatprep.subr.bf16.mxu0 %v1805
        %1869 = vmatpush1.bf16.msra.mxu0 %v1804
        %1870 = vmatprep.subr.bf16.mxu0 %v1807
        %1871 = vmatpush1.bf16.msra.mxu0 %v1806
        %1872 = vmatprep.subr.bf16.mxu0 %v1809
        %1873 = vmatpush1.bf16.msra.mxu0 %v1808
        %1874 = vmatprep.subr.bf16.mxu0 %v1811
        %1875 = vmatpush1.bf16.msra.mxu0 %v1810
        %1876 = vmatprep.subr.bf16.mxu0 %v1813
        %1877 = vmatpush1.bf16.msra.mxu0 %v1812
        %1878 = vmatprep.subr.bf16.mxu0 %v1815
        %1879 = vmatpush1.bf16.msra.mxu0 %v1814
        %1880 = vmatprep.subr.bf16.mxu0 %v1817
        %1881 = vmatpush1.bf16.msra.mxu0 %v1816
        %1882 = vmatprep.subr.bf16.mxu0 %v1819
        %1883 = vmatpush1.bf16.msra.mxu0 %v1818
        %1884 = vmatprep.subr.bf16.mxu0 %v1821
        %1885 = vmatpush1.bf16.msra.mxu0 %v1820
        %1886 = vmatprep.subr.bf16.mxu0 %v1823
        %1887 = vmatpush1.bf16.msra.mxu0 %v1822
        %1888 = vmatprep.subr.bf16.mxu0 %v1825
        %1889 = vmatpush1.bf16.msra.mxu0 %v1824
        %1890 = vmatprep.subr.bf16.mxu0 %v1827
        %1891 = vmatpush1.bf16.msra.mxu0 %v1826
        %1892 = vmatprep.mubr.bf16.mxu0 %v1685
        %1893 = vmatmul.mubr.bf16.gmra.mrb[0].mxu0 %v1684
        %v1894 = vpop.f32.mrb[0].mxu0
        %v1895 = vadd.f32 0.0, %v1894
        %v1896 = vpop.f32.mrb[0].mxu0
        %v1897 = vadd.f32 0.0, %v1896
        %v1898 = vpop.f32.mrb[0].mxu0
        %v1899 = vadd.f32 0.0, %v1898
        %v1900 = vpop.f32.mrb[0].mxu0
        %v1901 = vadd.f32 0.0, %v1900
        %1902 = vmatprep.mubr.bf16.mxu0 %v1687
        %1903 = vmatmul.mubr.bf16.gmra.mrb[0].mxu0 %v1686
        %v1904 = vpop.f32.mrb[0].mxu0
        %v1905 = vadd.f32 0.0, %v1904
        %v1906 = vpop.f32.mrb[0].mxu0
        %v1907 = vadd.f32 0.0, %v1906
        %v1908 = vpop.f32.mrb[0].mxu0
        %v1909 = vadd.f32 0.0, %v1908
        %v1910 = vpop.f32.mrb[0].mxu0
        %v1911 = vadd.f32 0.0, %v1910
        %1912 = vmatprep.mubr.bf16.mxu0 %v1689
        %1913 = vmatmul.mubr.bf16.gmra.mrb[0].mxu0 %v1688
        %v1914 = vpop.f32.mrb[0].mxu0
        %v1915 = vadd.f32 0.0, %v1914
        %v1916 = vpop.f32.mrb[0].mxu0
        %v1917 = vadd.f32 0.0, %v1916
        %v1918 = vpop.f32.mrb[0].mxu0
        %v1919 = vadd.f32 0.0, %v1918
        %v1920 = vpop.f32.mrb[0].mxu0
        %v1921 = vadd.f32 0.0, %v1920
        %1922 = vmatprep.mubr.bf16.mxu0 %v1691
        %1923 = vmatmul.mubr.bf16.gmra.mrb[0].mxu0 %v1690
        %v1924 = vpop.f32.mrb[0].mxu0
        %v1925 = vadd.f32 0.0, %v1924
        %v1926 = vpop.f32.mrb[0].mxu0
        %v1927 = vadd.f32 0.0, %v1926
        %v1928 = vpop.f32.mrb[0].mxu0
        %v1929 = vadd.f32 0.0, %v1928
        %v1930 = vpop.f32.mrb[0].mxu0
        %v1931 = vadd.f32 0.0, %v1930
        %1932 = vdwg.mxu0
        %v1933 = vadd.f32 %v1603, %v1895
        %v1934 = vadd.f32 %v1604, %v1897
        %v1935 = vadd.f32 %v1605, %v1899
        %v1936 = vadd.f32 %v1606, %v1901
        %v1937 = vadd.f32 %v1607, %v1905
        %v1938 = vadd.f32 %v1608, %v1907
        %v1939 = vadd.f32 %v1609, %v1909
        %v1940 = vadd.f32 %v1610, %v1911
        %v1941 = vadd.f32 %v1611, %v1915
        %v1942 = vadd.f32 %v1612, %v1917
        %v1943 = vadd.f32 %v1613, %v1919
        %v1944 = vadd.f32 %v1614, %v1921
        %v1945 = vadd.f32 %v1615, %v1925
        %v1946 = vadd.f32 %v1616, %v1927
        %v1947 = vadd.f32 %v1617, %v1929
        %v1948 = vadd.f32 %v1618, %v1931
        %v1949 = vld [vmem:[%s449] sm:$0xff]
        %v1950 = vld [vmem:[%s449 + $0x8] sm:$0x11]
        %v1951 = vld [vmem:[%s449 + $0x10] sm:$0xff]
        %v1952 = vld [vmem:[%s449 + $0x18] sm:$0x11]
        %v1953 = vld [vmem:[%s449 + $0x20] sm:$0xff]
        %v1954 = vld [vmem:[%s449 + $0x28] sm:$0x11]
        %v1955 = vld [vmem:[%s449 + $0x30] sm:$0xff]
        %v1956 = vld [vmem:[%s449 + $0x38] sm:$0x11]
        %v1957 = vld [vmem:[%s449 + $0x40] sm:$0xff]
        %v1958 = vld [vmem:[%s449 + $0x48] sm:$0x11]
        %v1959 = vld [vmem:[%s449 + $0x50] sm:$0xff]
        %v1960 = vld [vmem:[%s449 + $0x58] sm:$0x11]
        %v1961 = vld [vmem:[%s449 + $0x60] sm:$0xff]
        %v1962 = vld [vmem:[%s449 + $0x68] sm:$0x11]
        %v1963 = vld [vmem:[%s449 + $0x70] sm:$0xff]
        %v1964 = vld [vmem:[%s449 + $0x78] sm:$0x11]
        %v1966 = vshrl.u32 %v1949, 16
        %v1968 = vrot.slane %v1966, 4
        %v1969 = vshll.u32 %v1949, 16
        %v1971 = vrot.slane %v1969, 5
        %v1972 = vor.u32 %v1968, %v1971
        %v1973 = vrot.slane %v1972, 4
        %v1975 = vshll.u32 %v1950, 16
        %v1977 = vrot.slane %v1975, 5
        %v1978 = vsel %vm562, %v1973, %v1977
        %v1980 = vshrl.u32 %v1951, 16
        %v1982 = vrot.slane %v1980, 4
        %v1983 = vshll.u32 %v1951, 16
        %v1985 = vrot.slane %v1983, 5
        %v1986 = vor.u32 %v1982, %v1985
        %v1987 = vrot.slane %v1986, 4
        %v1989 = vshll.u32 %v1952, 16
        %v1991 = vrot.slane %v1989, 5
        %v1992 = vsel %vm562, %v1987, %v1991
        %v1994 = vshrl.u32 %v1953, 16
        %v1996 = vrot.slane %v1994, 4
        %v1997 = vshll.u32 %v1953, 16
        %v1999 = vrot.slane %v1997, 5
        %v2000 = vor.u32 %v1996, %v1999
        %v2001 = vrot.slane %v2000, 4
        %v2003 = vshll.u32 %v1954, 16
        %v2005 = vrot.slane %v2003, 5
        %v2006 = vsel %vm562, %v2001, %v2005
        %v2008 = vshrl.u32 %v1955, 16
        %v2010 = vrot.slane %v2008, 4
        %v2011 = vshll.u32 %v1955, 16
        %v2013 = vrot.slane %v2011, 5
        %v2014 = vor.u32 %v2010, %v2013
        %v2015 = vrot.slane %v2014, 4
        %v2017 = vshll.u32 %v1956, 16
        %v2019 = vrot.slane %v2017, 5
        %v2020 = vsel %vm562, %v2015, %v2019
        %v2022 = vshrl.u32 %v1957, 16
        %v2024 = vrot.slane %v2022, 4
        %v2025 = vshll.u32 %v1957, 16
        %v2027 = vrot.slane %v2025, 5
        %v2028 = vor.u32 %v2024, %v2027
        %v2029 = vrot.slane %v2028, 4
        %v2031 = vshll.u32 %v1958, 16
        %v2033 = vrot.slane %v2031, 5
        %v2034 = vsel %vm562, %v2029, %v2033
        %v2036 = vshrl.u32 %v1959, 16
        %v2038 = vrot.slane %v2036, 4
        %v2039 = vshll.u32 %v1959, 16
        %v2041 = vrot.slane %v2039, 5
        %v2042 = vor.u32 %v2038, %v2041
        %v2043 = vrot.slane %v2042, 4
        %v2045 = vshll.u32 %v1960, 16
        %v2047 = vrot.slane %v2045, 5
        %v2048 = vsel %vm562, %v2043, %v2047
        %v2050 = vshrl.u32 %v1961, 16
        %v2052 = vrot.slane %v2050, 4
        %v2053 = vshll.u32 %v1961, 16
        %v2055 = vrot.slane %v2053, 5
        %v2056 = vor.u32 %v2052, %v2055
        %v2057 = vrot.slane %v2056, 4
        %v2059 = vshll.u32 %v1962, 16
        %v2061 = vrot.slane %v2059, 5
        %v2062 = vsel %vm562, %v2057, %v2061
        %v2064 = vshrl.u32 %v1963, 16
        %v2066 = vrot.slane %v2064, 4
        %v2067 = vshll.u32 %v1963, 16
        %v2069 = vrot.slane %v2067, 5
        %v2070 = vor.u32 %v2066, %v2069
        %v2071 = vrot.slane %v2070, 4
        %v2073 = vshll.u32 %v1964, 16
        %v2075 = vrot.slane %v2073, 5
        %v2076 = vsel %vm562, %v2071, %v2075
        %s2077 = scalar_lea.vmem %s3, 1024
        %v2078 = vld [vmem:[%s2077] sm:$0xff]
        %v2079 = vld [vmem:[%s2077 + $0x8] sm:$0xff]
        %v2080 = vld [vmem:[%s2077 + $0x10] sm:$0xff]
        %v2081 = vld [vmem:[%s2077 + $0x18] sm:$0xff]
        %v2082 = vld [vmem:[%s2077 + $0x20] sm:$0xff]
        %v2083 = vld [vmem:[%s2077 + $0x28] sm:$0xff]
        %v2084 = vld [vmem:[%s2077 + $0x30] sm:$0xff]
        %v2085 = vld [vmem:[%s2077 + $0x38] sm:$0xff]
        %v2086 = vld [vmem:[%s2077 + $0x40] sm:$0xff]
        %v2087 = vld [vmem:[%s2077 + $0x48] sm:$0xff]
        %v2088 = vld [vmem:[%s2077 + $0x50] sm:$0xff]
        %v2089 = vld [vmem:[%s2077 + $0x58] sm:$0xff]
        %v2090 = vld [vmem:[%s2077 + $0x60] sm:$0xff]
        %v2091 = vld [vmem:[%s2077 + $0x68] sm:$0xff]
        %v2092 = vld [vmem:[%s2077 + $0x70] sm:$0xff]
        %v2093 = vld [vmem:[%s2077 + $0x78] sm:$0xff]
        %v2094 = vld [vmem:[%s2077 + $0x80] sm:$0xff]
        %v2095 = vld [vmem:[%s2077 + $0x88] sm:$0xff]
        %v2096 = vld [vmem:[%s2077 + $0x90] sm:$0xff]
        %v2097 = vld [vmem:[%s2077 + $0x98] sm:$0xff]
        %v2098 = vld [vmem:[%s2077 + $0xa0] sm:$0xff]
        %v2099 = vld [vmem:[%s2077 + $0xa8] sm:$0xff]
        %v2100 = vld [vmem:[%s2077 + $0xb0] sm:$0xff]
        %v2101 = vld [vmem:[%s2077 + $0xb8] sm:$0xff]
        %v2102 = vld [vmem:[%s2077 + $0xc0] sm:$0xff]
        %v2103 = vld [vmem:[%s2077 + $0xc8] sm:$0xff]
        %v2104 = vld [vmem:[%s2077 + $0xd0] sm:$0xff]
        %v2105 = vld [vmem:[%s2077 + $0xd8] sm:$0xff]
        %v2106 = vld [vmem:[%s2077 + $0xe0] sm:$0xff]
        %v2107 = vld [vmem:[%s2077 + $0xe8] sm:$0xff]
        %v2108 = vld [vmem:[%s2077 + $0xf0] sm:$0xff]
        %v2109 = vld [vmem:[%s2077 + $0xf8] sm:$0xff]
        %v2110 = vunpack.c.l.b16 %v1978
        %v2111 = vunpack.c.h.b16 %v1978
        %v2112 = vunpack.c.l.b16 %v1992
        %v2113 = vunpack.c.h.b16 %v1992
        %v2114 = vunpack.c.l.b16 %v2006
        %v2115 = vunpack.c.h.b16 %v2006
        %v2116 = vunpack.c.l.b16 %v2020
        %v2117 = vunpack.c.h.b16 %v2020
        %v2118 = vunpack.c.l.b16 %v2034
        %v2119 = vunpack.c.h.b16 %v2034
        %v2120 = vunpack.c.l.b16 %v2048
        %v2121 = vunpack.c.h.b16 %v2048
        %v2122 = vunpack.c.l.b16 %v2062
        %v2123 = vunpack.c.h.b16 %v2062
        %v2124 = vunpack.c.l.b16 %v2076
        %v2125 = vunpack.c.h.b16 %v2076
        %v2126 = vpack.c.b16 %v2112, %v2110
        %v2127 = vpack.c.b16 %v2113, %v2111
        %v2128 = vpack.c.b16 %v2116, %v2114
        %v2129 = vpack.c.b16 %v2117, %v2115
        %v2130 = vpack.c.b16 %v2120, %v2118
        %v2131 = vpack.c.b16 %v2121, %v2119
        %v2132 = vpack.c.b16 %v2124, %v2122
        %v2133 = vpack.c.b16 %v2125, %v2123
        %v2174 = vunpack.c.l.b16 %v2078
        %v2175 = vunpack.c.h.b16 %v2078
        %v2176 = vunpack.c.l.b16 %v2079
        %v2177 = vunpack.c.h.b16 %v2079
        %v2178 = vunpack.c.l.b16 %v2080
        %v2179 = vunpack.c.h.b16 %v2080
        %v2180 = vunpack.c.l.b16 %v2081
        %v2181 = vunpack.c.h.b16 %v2081
        %v2182 = vunpack.c.l.b16 %v2082
        %v2183 = vunpack.c.h.b16 %v2082
        %v2184 = vunpack.c.l.b16 %v2083
        %v2185 = vunpack.c.h.b16 %v2083
        %v2186 = vunpack.c.l.b16 %v2084
        %v2187 = vunpack.c.h.b16 %v2084
        %v2188 = vunpack.c.l.b16 %v2085
        %v2189 = vunpack.c.h.b16 %v2085
        %v2190 = vunpack.c.l.b16 %v2086
        %v2191 = vunpack.c.h.b16 %v2086
        %v2192 = vunpack.c.l.b16 %v2087
        %v2193 = vunpack.c.h.b16 %v2087
        %v2194 = vunpack.c.l.b16 %v2088
        %v2195 = vunpack.c.h.b16 %v2088
        %v2196 = vunpack.c.l.b16 %v2089
        %v2197 = vunpack.c.h.b16 %v2089
        %v2198 = vunpack.c.l.b16 %v2090
        %v2199 = vunpack.c.h.b16 %v2090
        %v2200 = vunpack.c.l.b16 %v2091
        %v2201 = vunpack.c.h.b16 %v2091
        %v2202 = vunpack.c.l.b16 %v2092
        %v2203 = vunpack.c.h.b16 %v2092
        %v2204 = vunpack.c.l.b16 %v2093
        %v2205 = vunpack.c.h.b16 %v2093
        %v2206 = vunpack.c.l.b16 %v2094
        %v2207 = vunpack.c.h.b16 %v2094
        %v2208 = vunpack.c.l.b16 %v2095
        %v2209 = vunpack.c.h.b16 %v2095
        %v2210 = vunpack.c.l.b16 %v2096
        %v2211 = vunpack.c.h.b16 %v2096
        %v2212 = vunpack.c.l.b16 %v2097
        %v2213 = vunpack.c.h.b16 %v2097
        %v2214 = vunpack.c.l.b16 %v2098
        %v2215 = vunpack.c.h.b16 %v2098
        %v2216 = vunpack.c.l.b16 %v2099
        %v2217 = vunpack.c.h.b16 %v2099
        %v2218 = vunpack.c.l.b16 %v2100
        %v2219 = vunpack.c.h.b16 %v2100
        %v2220 = vunpack.c.l.b16 %v2101
        %v2221 = vunpack.c.h.b16 %v2101
        %v2222 = vunpack.c.l.b16 %v2102
        %v2223 = vunpack.c.h.b16 %v2102
        %v2224 = vunpack.c.l.b16 %v2103
        %v2225 = vunpack.c.h.b16 %v2103
        %v2226 = vunpack.c.l.b16 %v2104
        %v2227 = vunpack.c.h.b16 %v2104
        %v2228 = vunpack.c.l.b16 %v2105
        %v2229 = vunpack.c.h.b16 %v2105
        %v2230 = vunpack.c.l.b16 %v2106
        %v2231 = vunpack.c.h.b16 %v2106
        %v2232 = vunpack.c.l.b16 %v2107
        %v2233 = vunpack.c.h.b16 %v2107
        %v2234 = vunpack.c.l.b16 %v2108
        %v2235 = vunpack.c.h.b16 %v2108
        %v2236 = vunpack.c.l.b16 %v2109
        %v2237 = vunpack.c.h.b16 %v2109
        %v2238 = vpack.c.b16 %v2176, %v2174
        %v2239 = vpack.c.b16 %v2177, %v2175
        %v2240 = vpack.c.b16 %v2180, %v2178
        %v2241 = vpack.c.b16 %v2181, %v2179
        %v2242 = vpack.c.b16 %v2184, %v2182
        %v2243 = vpack.c.b16 %v2185, %v2183
        %v2244 = vpack.c.b16 %v2188, %v2186
        %v2245 = vpack.c.b16 %v2189, %v2187
        %v2246 = vpack.c.b16 %v2192, %v2190
        %v2247 = vpack.c.b16 %v2193, %v2191
        %v2248 = vpack.c.b16 %v2196, %v2194
        %v2249 = vpack.c.b16 %v2197, %v2195
        %v2250 = vpack.c.b16 %v2200, %v2198
        %v2251 = vpack.c.b16 %v2201, %v2199
        %v2252 = vpack.c.b16 %v2204, %v2202
        %v2253 = vpack.c.b16 %v2205, %v2203
        %v2254 = vpack.c.b16 %v2208, %v2206
        %v2255 = vpack.c.b16 %v2209, %v2207
        %v2256 = vpack.c.b16 %v2212, %v2210
        %v2257 = vpack.c.b16 %v2213, %v2211
        %v2258 = vpack.c.b16 %v2216, %v2214
        %v2259 = vpack.c.b16 %v2217, %v2215
        %v2260 = vpack.c.b16 %v2220, %v2218
        %v2261 = vpack.c.b16 %v2221, %v2219
        %v2262 = vpack.c.b16 %v2224, %v2222
        %v2263 = vpack.c.b16 %v2225, %v2223
        %v2264 = vpack.c.b16 %v2228, %v2226
        %v2265 = vpack.c.b16 %v2229, %v2227
        %v2266 = vpack.c.b16 %v2232, %v2230
        %v2267 = vpack.c.b16 %v2233, %v2231
        %v2268 = vpack.c.b16 %v2236, %v2234
        %v2269 = vpack.c.b16 %v2237, %v2235
        %2302 = vmatprep.subr.bf16.mxu0 %v2239
        %2303 = vmatpush1.bf16.msra.mxu0 %v2238
        %2304 = vmatprep.subr.bf16.mxu0 %v2241
        %2305 = vmatpush1.bf16.msra.mxu0 %v2240
        %2306 = vmatprep.subr.bf16.mxu0 %v2243
        %2307 = vmatpush1.bf16.msra.mxu0 %v2242
        %2308 = vmatprep.subr.bf16.mxu0 %v2245
        %2309 = vmatpush1.bf16.msra.mxu0 %v2244
        %2310 = vmatprep.subr.bf16.mxu0 %v2247
        %2311 = vmatpush1.bf16.msra.mxu0 %v2246
        %2312 = vmatprep.subr.bf16.mxu0 %v2249
        %2313 = vmatpush1.bf16.msra.mxu0 %v2248
        %2314 = vmatprep.subr.bf16.mxu0 %v2251
        %2315 = vmatpush1.bf16.msra.mxu0 %v2250
        %2316 = vmatprep.subr.bf16.mxu0 %v2253
        %2317 = vmatpush1.bf16.msra.mxu0 %v2252
        %2318 = vmatprep.subr.bf16.mxu0 %v2255
        %2319 = vmatpush1.bf16.msra.mxu0 %v2254
        %2320 = vmatprep.subr.bf16.mxu0 %v2257
        %2321 = vmatpush1.bf16.msra.mxu0 %v2256
        %2322 = vmatprep.subr.bf16.mxu0 %v2259
        %2323 = vmatpush1.bf16.msra.mxu0 %v2258
        %2324 = vmatprep.subr.bf16.mxu0 %v2261
        %2325 = vmatpush1.bf16.msra.mxu0 %v2260
        %2326 = vmatprep.subr.bf16.mxu0 %v2263
        %2327 = vmatpush1.bf16.msra.mxu0 %v2262
        %2328 = vmatprep.subr.bf16.mxu0 %v2265
        %2329 = vmatpush1.bf16.msra.mxu0 %v2264
        %2330 = vmatprep.subr.bf16.mxu0 %v2267
        %2331 = vmatpush1.bf16.msra.mxu0 %v2266
        %2332 = vmatprep.subr.bf16.mxu0 %v2269
        %2333 = vmatpush1.bf16.msra.mxu0 %v2268
        %2334 = vmatprep.mubr.bf16.mxu0 %v2127
        %2335 = vmatmul.mubr.bf16.gmra.mrb[0].mxu0 %v2126
        %v2336 = vpop.f32.mrb[0].mxu0
        %v2337 = vadd.f32 0.0, %v2336
        %v2338 = vpop.f32.mrb[0].mxu0
        %v2339 = vadd.f32 0.0, %v2338
        %v2340 = vpop.f32.mrb[0].mxu0
        %v2341 = vadd.f32 0.0, %v2340
        %v2342 = vpop.f32.mrb[0].mxu0
        %v2343 = vadd.f32 0.0, %v2342
        %2344 = vmatprep.mubr.bf16.mxu0 %v2129
        %2345 = vmatmul.mubr.bf16.gmra.mrb[0].mxu0 %v2128
        %v2346 = vpop.f32.mrb[0].mxu0
        %v2347 = vadd.f32 0.0, %v2346
        %v2348 = vpop.f32.mrb[0].mxu0
        %v2349 = vadd.f32 0.0, %v2348
        %v2350 = vpop.f32.mrb[0].mxu0
        %v2351 = vadd.f32 0.0, %v2350
        %v2352 = vpop.f32.mrb[0].mxu0
        %v2353 = vadd.f32 0.0, %v2352
        %2354 = vmatprep.mubr.bf16.mxu0 %v2131
        %2355 = vmatmul.mubr.bf16.gmra.mrb[0].mxu0 %v2130
        %v2356 = vpop.f32.mrb[0].mxu0
        %v2357 = vadd.f32 0.0, %v2356
        %v2358 = vpop.f32.mrb[0].mxu0
        %v2359 = vadd.f32 0.0, %v2358
        %v2360 = vpop.f32.mrb[0].mxu0
        %v2361 = vadd.f32 0.0, %v2360
        %v2362 = vpop.f32.mrb[0].mxu0
        %v2363 = vadd.f32 0.0, %v2362
        %2364 = vmatprep.mubr.bf16.mxu0 %v2133
        %2365 = vmatmul.mubr.bf16.gmra.mrb[0].mxu0 %v2132
        %v2366 = vpop.f32.mrb[0].mxu0
        %v2367 = vadd.f32 0.0, %v2366
        %v2368 = vpop.f32.mrb[0].mxu0
        %v2369 = vadd.f32 0.0, %v2368
        %v2370 = vpop.f32.mrb[0].mxu0
        %v2371 = vadd.f32 0.0, %v2370
        %v2372 = vpop.f32.mrb[0].mxu0
        %v2373 = vadd.f32 0.0, %v2372
        %2374 = vdwg.mxu0
        %v2375 = vadd.f32 %v1933, %v2337
        %v2376 = vadd.f32 %v1934, %v2339
        %v2377 = vadd.f32 %v1935, %v2341
        %v2378 = vadd.f32 %v1936, %v2343
        %v2379 = vadd.f32 %v1937, %v2347
        %v2380 = vadd.f32 %v1938, %v2349
        %v2381 = vadd.f32 %v1939, %v2351
        %v2382 = vadd.f32 %v1940, %v2353
        %v2383 = vadd.f32 %v1941, %v2357
        %v2384 = vadd.f32 %v1942, %v2359
        %v2385 = vadd.f32 %v1943, %v2361
        %v2386 = vadd.f32 %v1944, %v2363
        %v2387 = vadd.f32 %v1945, %v2367
        %v2388 = vadd.f32 %v1946, %v2369
        %v2389 = vadd.f32 %v1947, %v2371
        %v2390 = vadd.f32 %v1948, %v2373
        %v2391 = vld [vmem:[%s449] sm:$0xee]
        %v2392 = vld [vmem:[%s449 + $0x10] sm:$0xee]
        %v2393 = vld [vmem:[%s449 + $0x20] sm:$0xee]
        %v2394 = vld [vmem:[%s449 + $0x30] sm:$0xee]
        %v2395 = vld [vmem:[%s449 + $0x40] sm:$0xee]
        %v2396 = vld [vmem:[%s449 + $0x50] sm:$0xee]
        %v2397 = vld [vmem:[%s449 + $0x60] sm:$0xee]
        %v2398 = vld [vmem:[%s449 + $0x70] sm:$0xee]
        %v2415 = vrot.slane %v2391, 5
        %v2416 = vrot.slane %v2415, 4
        %v2417 = vrot.slane %v1950, 5
        %v2418 = vsel %vm1272, %v2416, %v2417
        %v2419 = vrot.slane %v2392, 5
        %v2420 = vrot.slane %v2419, 4
        %v2421 = vrot.slane %v1952, 5
        %v2422 = vsel %vm1272, %v2420, %v2421
        %v2423 = vrot.slane %v2393, 5
        %v2424 = vrot.slane %v2423, 4
        %v2425 = vrot.slane %v1954, 5
        %v2426 = vsel %vm1272, %v2424, %v2425
        %v2427 = vrot.slane %v2394, 5
        %v2428 = vrot.slane %v2427, 4
        %v2429 = vrot.slane %v1956, 5
        %v2430 = vsel %vm1272, %v2428, %v2429
        %v2431 = vrot.slane %v2395, 5
        %v2432 = vrot.slane %v2431, 4
        %v2433 = vrot.slane %v1958, 5
        %v2434 = vsel %vm1272, %v2432, %v2433
        %v2435 = vrot.slane %v2396, 5
        %v2436 = vrot.slane %v2435, 4
        %v2437 = vrot.slane %v1960, 5
        %v2438 = vsel %vm1272, %v2436, %v2437
        %v2439 = vrot.slane %v2397, 5
        %v2440 = vrot.slane %v2439, 4
        %v2441 = vrot.slane %v1962, 5
        %v2442 = vsel %vm1272, %v2440, %v2441
        %v2443 = vrot.slane %v2398, 5
        %v2444 = vrot.slane %v2443, 4
        %v2445 = vrot.slane %v1964, 5
        %v2446 = vsel %vm1272, %v2444, %v2445
        %s2447 = scalar_lea.vmem %s3, 1280
        %v2448 = vld [vmem:[%s2447] sm:$0xff]
        %v2449 = vld [vmem:[%s2447 + $0x8] sm:$0xff]
        %v2450 = vld [vmem:[%s2447 + $0x10] sm:$0xff]
        %v2451 = vld [vmem:[%s2447 + $0x18] sm:$0xff]
        %v2452 = vld [vmem:[%s2447 + $0x20] sm:$0xff]
        %v2453 = vld [vmem:[%s2447 + $0x28] sm:$0xff]
        %v2454 = vld [vmem:[%s2447 + $0x30] sm:$0xff]
        %v2455 = vld [vmem:[%s2447 + $0x38] sm:$0xff]
        %v2456 = vld [vmem:[%s2447 + $0x40] sm:$0xff]
        %v2457 = vld [vmem:[%s2447 + $0x48] sm:$0xff]
        %v2458 = vld [vmem:[%s2447 + $0x50] sm:$0xff]
        %v2459 = vld [vmem:[%s2447 + $0x58] sm:$0xff]
        %v2460 = vld [vmem:[%s2447 + $0x60] sm:$0xff]
        %v2461 = vld [vmem:[%s2447 + $0x68] sm:$0xff]
        %v2462 = vld [vmem:[%s2447 + $0x70] sm:$0xff]
        %v2463 = vld [vmem:[%s2447 + $0x78] sm:$0xff]
        %v2464 = vld [vmem:[%s2447 + $0x80] sm:$0xff]
        %v2465 = vld [vmem:[%s2447 + $0x88] sm:$0xff]
        %v2466 = vld [vmem:[%s2447 + $0x90] sm:$0xff]
        %v2467 = vld [vmem:[%s2447 + $0x98] sm:$0xff]
        %v2468 = vld [vmem:[%s2447 + $0xa0] sm:$0xff]
        %v2469 = vld [vmem:[%s2447 + $0xa8] sm:$0xff]
        %v2470 = vld [vmem:[%s2447 + $0xb0] sm:$0xff]
        %v2471 = vld [vmem:[%s2447 + $0xb8] sm:$0xff]
        %v2472 = vld [vmem:[%s2447 + $0xc0] sm:$0xff]
        %v2473 = vld [vmem:[%s2447 + $0xc8] sm:$0xff]
        %v2474 = vld [vmem:[%s2447 + $0xd0] sm:$0xff]
        %v2475 = vld [vmem:[%s2447 + $0xd8] sm:$0xff]
        %v2476 = vld [vmem:[%s2447 + $0xe0] sm:$0xff]
        %v2477 = vld [vmem:[%s2447 + $0xe8] sm:$0xff]
        %v2478 = vld [vmem:[%s2447 + $0xf0] sm:$0xff]
        %v2479 = vld [vmem:[%s2447 + $0xf8] sm:$0xff]
        %v2480 = vunpack.c.l.b16 %v2418
        %v2481 = vunpack.c.h.b16 %v2418
        %v2482 = vunpack.c.l.b16 %v2422
        %v2483 = vunpack.c.h.b16 %v2422
        %v2484 = vunpack.c.l.b16 %v2426
        %v2485 = vunpack.c.h.b16 %v2426
        %v2486 = vunpack.c.l.b16 %v2430
        %v2487 = vunpack.c.h.b16 %v2430
        %v2488 = vunpack.c.l.b16 %v2434
        %v2489 = vunpack.c.h.b16 %v2434
        %v2490 = vunpack.c.l.b16 %v2438
        %v2491 = vunpack.c.h.b16 %v2438
        %v2492 = vunpack.c.l.b16 %v2442
        %v2493 = vunpack.c.h.b16 %v2442
        %v2494 = vunpack.c.l.b16 %v2446
        %v2495 = vunpack.c.h.b16 %v2446
        %v2496 = vpack.c.b16 %v2482, %v2480
        %v2497 = vpack.c.b16 %v2483, %v2481
        %v2498 = vpack.c.b16 %v2486, %v2484
        %v2499 = vpack.c.b16 %v2487, %v2485
        %v2500 = vpack.c.b16 %v2490, %v2488
        %v2501 = vpack.c.b16 %v2491, %v2489
        %v2502 = vpack.c.b16 %v2494, %v2492
        %v2503 = vpack.c.b16 %v2495, %v2493
        %v2544 = vunpack.c.l.b16 %v2448
        %v2545 = vunpack.c.h.b16 %v2448
        %v2546 = vunpack.c.l.b16 %v2449
        %v2547 = vunpack.c.h.b16 %v2449
        %v2548 = vunpack.c.l.b16 %v2450
        %v2549 = vunpack.c.h.b16 %v2450
        %v2550 = vunpack.c.l.b16 %v2451
        %v2551 = vunpack.c.h.b16 %v2451
        %v2552 = vunpack.c.l.b16 %v2452
        %v2553 = vunpack.c.h.b16 %v2452
        %v2554 = vunpack.c.l.b16 %v2453
        %v2555 = vunpack.c.h.b16 %v2453
        %v2556 = vunpack.c.l.b16 %v2454
        %v2557 = vunpack.c.h.b16 %v2454
        %v2558 = vunpack.c.l.b16 %v2455
        %v2559 = vunpack.c.h.b16 %v2455
        %v2560 = vunpack.c.l.b16 %v2456
        %v2561 = vunpack.c.h.b16 %v2456
        %v2562 = vunpack.c.l.b16 %v2457
        %v2563 = vunpack.c.h.b16 %v2457
        %v2564 = vunpack.c.l.b16 %v2458
        %v2565 = vunpack.c.h.b16 %v2458
        %v2566 = vunpack.c.l.b16 %v2459
        %v2567 = vunpack.c.h.b16 %v2459
        %v2568 = vunpack.c.l.b16 %v2460
        %v2569 = vunpack.c.h.b16 %v2460
        %v2570 = vunpack.c.l.b16 %v2461
        %v2571 = vunpack.c.h.b16 %v2461
        %v2572 = vunpack.c.l.b16 %v2462
        %v2573 = vunpack.c.h.b16 %v2462
        %v2574 = vunpack.c.l.b16 %v2463
        %v2575 = vunpack.c.h.b16 %v2463
        %v2576 = vunpack.c.l.b16 %v2464
        %v2577 = vunpack.c.h.b16 %v2464
        %v2578 = vunpack.c.l.b16 %v2465
        %v2579 = vunpack.c.h.b16 %v2465
        %v2580 = vunpack.c.l.b16 %v2466
        %v2581 = vunpack.c.h.b16 %v2466
        %v2582 = vunpack.c.l.b16 %v2467
        %v2583 = vunpack.c.h.b16 %v2467
        %v2584 = vunpack.c.l.b16 %v2468
        %v2585 = vunpack.c.h.b16 %v2468
        %v2586 = vunpack.c.l.b16 %v2469
        %v2587 = vunpack.c.h.b16 %v2469
        %v2588 = vunpack.c.l.b16 %v2470
        %v2589 = vunpack.c.h.b16 %v2470
        %v2590 = vunpack.c.l.b16 %v2471
        %v2591 = vunpack.c.h.b16 %v2471
        %v2592 = vunpack.c.l.b16 %v2472
        %v2593 = vunpack.c.h.b16 %v2472
        %v2594 = vunpack.c.l.b16 %v2473
        %v2595 = vunpack.c.h.b16 %v2473
        %v2596 = vunpack.c.l.b16 %v2474
        %v2597 = vunpack.c.h.b16 %v2474
        %v2598 = vunpack.c.l.b16 %v2475
        %v2599 = vunpack.c.h.b16 %v2475
        %v2600 = vunpack.c.l.b16 %v2476
        %v2601 = vunpack.c.h.b16 %v2476
        %v2602 = vunpack.c.l.b16 %v2477
        %v2603 = vunpack.c.h.b16 %v2477
        %v2604 = vunpack.c.l.b16 %v2478
        %v2605 = vunpack.c.h.b16 %v2478
        %v2606 = vunpack.c.l.b16 %v2479
        %v2607 = vunpack.c.h.b16 %v2479
        %v2608 = vpack.c.b16 %v2546, %v2544
        %v2609 = vpack.c.b16 %v2547, %v2545
        %v2610 = vpack.c.b16 %v2550, %v2548
        %v2611 = vpack.c.b16 %v2551, %v2549
        %v2612 = vpack.c.b16 %v2554, %v2552
        %v2613 = vpack.c.b16 %v2555, %v2553
        %v2614 = vpack.c.b16 %v2558, %v2556
        %v2615 = vpack.c.b16 %v2559, %v2557
        %v2616 = vpack.c.b16 %v2562, %v2560
        %v2617 = vpack.c.b16 %v2563, %v2561
        %v2618 = vpack.c.b16 %v2566, %v2564
        %v2619 = vpack.c.b16 %v2567, %v2565
        %v2620 = vpack.c.b16 %v2570, %v2568
        %v2621 = vpack.c.b16 %v2571, %v2569
        %v2622 = vpack.c.b16 %v2574, %v2572
        %v2623 = vpack.c.b16 %v2575, %v2573
        %v2624 = vpack.c.b16 %v2578, %v2576
        %v2625 = vpack.c.b16 %v2579, %v2577
        %v2626 = vpack.c.b16 %v2582, %v2580
        %v2627 = vpack.c.b16 %v2583, %v2581
        %v2628 = vpack.c.b16 %v2586, %v2584
        %v2629 = vpack.c.b16 %v2587, %v2585
        %v2630 = vpack.c.b16 %v2590, %v2588
        %v2631 = vpack.c.b16 %v2591, %v2589
        %v2632 = vpack.c.b16 %v2594, %v2592
        %v2633 = vpack.c.b16 %v2595, %v2593
        %v2634 = vpack.c.b16 %v2598, %v2596
        %v2635 = vpack.c.b16 %v2599, %v2597
        %v2636 = vpack.c.b16 %v2602, %v2600
        %v2637 = vpack.c.b16 %v2603, %v2601
        %v2638 = vpack.c.b16 %v2606, %v2604
        %v2639 = vpack.c.b16 %v2607, %v2605
        %2672 = vmatprep.subr.bf16.mxu0 %v2609
        %2673 = vmatpush1.bf16.msra.mxu0 %v2608
        %2674 = vmatprep.subr.bf16.mxu0 %v2611
        %2675 = vmatpush1.bf16.msra.mxu0 %v2610
        %2676 = vmatprep.subr.bf16.mxu0 %v2613
        %2677 = vmatpush1.bf16.msra.mxu0 %v2612
        %2678 = vmatprep.subr.bf16.mxu0 %v2615
        %2679 = vmatpush1.bf16.msra.mxu0 %v2614
        %2680 = vmatprep.subr.bf16.mxu0 %v2617
        %2681 = vmatpush1.bf16.msra.mxu0 %v2616
        %2682 = vmatprep.subr.bf16.mxu0 %v2619
        %2683 = vmatpush1.bf16.msra.mxu0 %v2618
        %2684 = vmatprep.subr.bf16.mxu0 %v2621
        %2685 = vmatpush1.bf16.msra.mxu0 %v2620
        %2686 = vmatprep.subr.bf16.mxu0 %v2623
        %2687 = vmatpush1.bf16.msra.mxu0 %v2622
        %2688 = vmatprep.subr.bf16.mxu0 %v2625
        %2689 = vmatpush1.bf16.msra.mxu0 %v2624
        %2690 = vmatprep.subr.bf16.mxu0 %v2627
        %2691 = vmatpush1.bf16.msra.mxu0 %v2626
        %2692 = vmatprep.subr.bf16.mxu0 %v2629
        %2693 = vmatpush1.bf16.msra.mxu0 %v2628
        %2694 = vmatprep.subr.bf16.mxu0 %v2631
        %2695 = vmatpush1.bf16.msra.mxu0 %v2630
        %2696 = vmatprep.subr.bf16.mxu0 %v2633
        %2697 = vmatpush1.bf16.msra.mxu0 %v2632
        %2698 = vmatprep.subr.bf16.mxu0 %v2635
        %2699 = vmatpush1.bf16.msra.mxu0 %v2634
        %2700 = vmatprep.subr.bf16.mxu0 %v2637
        %2701 = vmatpush1.bf16.msra.mxu0 %v2636
        %2702 = vmatprep.subr.bf16.mxu0 %v2639
        %2703 = vmatpush1.bf16.msra.mxu0 %v2638
        %2704 = vmatprep.mubr.bf16.mxu0 %v2497
        %2705 = vmatmul.mubr.bf16.gmra.mrb[0].mxu0 %v2496
        %v2706 = vpop.f32.mrb[0].mxu0
        %v2707 = vadd.f32 0.0, %v2706
        %v2708 = vpop.f32.mrb[0].mxu0
        %v2709 = vadd.f32 0.0, %v2708
        %v2710 = vpop.f32.mrb[0].mxu0
        %v2711 = vadd.f32 0.0, %v2710
        %v2712 = vpop.f32.mrb[0].mxu0
        %v2713 = vadd.f32 0.0, %v2712
        %2714 = vmatprep.mubr.bf16.mxu0 %v2499
        %2715 = vmatmul.mubr.bf16.gmra.mrb[0].mxu0 %v2498
        %v2716 = vpop.f32.mrb[0].mxu0
        %v2717 = vadd.f32 0.0, %v2716
        %v2718 = vpop.f32.mrb[0].mxu0
        %v2719 = vadd.f32 0.0, %v2718
        %v2720 = vpop.f32.mrb[0].mxu0
        %v2721 = vadd.f32 0.0, %v2720
        %v2722 = vpop.f32.mrb[0].mxu0
        %v2723 = vadd.f32 0.0, %v2722
        %2724 = vmatprep.mubr.bf16.mxu0 %v2501
        %2725 = vmatmul.mubr.bf16.gmra.mrb[0].mxu0 %v2500
        %v2726 = vpop.f32.mrb[0].mxu0
        %v2727 = vadd.f32 0.0, %v2726
        %v2728 = vpop.f32.mrb[0].mxu0
        %v2729 = vadd.f32 0.0, %v2728
        %v2730 = vpop.f32.mrb[0].mxu0
        %v2731 = vadd.f32 0.0, %v2730
        %v2732 = vpop.f32.mrb[0].mxu0
        %v2733 = vadd.f32 0.0, %v2732
        %2734 = vmatprep.mubr.bf16.mxu0 %v2503
        %2735 = vmatmul.mubr.bf16.gmra.mrb[0].mxu0 %v2502
        %v2736 = vpop.f32.mrb[0].mxu0
        %v2737 = vadd.f32 0.0, %v2736
        %v2738 = vpop.f32.mrb[0].mxu0
        %v2739 = vadd.f32 0.0, %v2738
        %v2740 = vpop.f32.mrb[0].mxu0
        %v2741 = vadd.f32 0.0, %v2740
        %v2742 = vpop.f32.mrb[0].mxu0
        %v2743 = vadd.f32 0.0, %v2742
        %2744 = vdwg.mxu0
        %v2745 = vadd.f32 %v2375, %v2707
        %v2746 = vadd.f32 %v2376, %v2709
        %v2747 = vadd.f32 %v2377, %v2711
        %v2748 = vadd.f32 %v2378, %v2713
        %v2749 = vadd.f32 %v2379, %v2717
        %v2750 = vadd.f32 %v2380, %v2719
        %v2751 = vadd.f32 %v2381, %v2721
        %v2752 = vadd.f32 %v2382, %v2723
        %v2753 = vadd.f32 %v2383, %v2727
        %v2754 = vadd.f32 %v2384, %v2729
        %v2755 = vadd.f32 %v2385, %v2731
        %v2756 = vadd.f32 %v2386, %v2733
        %v2757 = vadd.f32 %v2387, %v2737
        %v2758 = vadd.f32 %v2388, %v2739
        %v2759 = vadd.f32 %v2389, %v2741
        %v2760 = vadd.f32 %v2390, %v2743
        %s2761 = scalar_lea.vmem [#allocation2], 32
        %v2762 = vld [vmem:[%s2761] sm:$0xff]
        %v2763 = vld [vmem:[%s2761 + $0x10] sm:$0xff]
        %v2764 = vld [vmem:[%s2761 + $0x20] sm:$0xff]
        %v2765 = vld [vmem:[%s2761 + $0x30] sm:$0xff]
        %v2766 = vld [vmem:[%s2761 + $0x40] sm:$0xff]
        %v2767 = vld [vmem:[%s2761 + $0x50] sm:$0xff]
        %v2768 = vld [vmem:[%s2761 + $0x60] sm:$0xff]
        %v2769 = vld [vmem:[%s2761 + $0x70] sm:$0xff]
        %s2770 = scalar_lea.vmem %s3, 1536
        %v2771 = vld [vmem:[%s2770] sm:$0xff]
        %v2772 = vld [vmem:[%s2770 + $0x8] sm:$0xff]
        %v2773 = vld [vmem:[%s2770 + $0x10] sm:$0xff]
        %v2774 = vld [vmem:[%s2770 + $0x18] sm:$0xff]
        %v2775 = vld [vmem:[%s2770 + $0x20] sm:$0xff]
        %v2776 = vld [vmem:[%s2770 + $0x28] sm:$0xff]
        %v2777 = vld [vmem:[%s2770 + $0x30] sm:$0xff]
        %v2778 = vld [vmem:[%s2770 + $0x38] sm:$0xff]
        %v2779 = vld [vmem:[%s2770 + $0x40] sm:$0xff]
        %v2780 = vld [vmem:[%s2770 + $0x48] sm:$0xff]
        %v2781 = vld [vmem:[%s2770 + $0x50] sm:$0xff]
        %v2782 = vld [vmem:[%s2770 + $0x58] sm:$0xff]
        %v2783 = vld [vmem:[%s2770 + $0x60] sm:$0xff]
        %v2784 = vld [vmem:[%s2770 + $0x68] sm:$0xff]
        %v2785 = vld [vmem:[%s2770 + $0x70] sm:$0xff]
        %v2786 = vld [vmem:[%s2770 + $0x78] sm:$0xff]
        %v2787 = vld [vmem:[%s2770 + $0x80] sm:$0xff]
        %v2788 = vld [vmem:[%s2770 + $0x88] sm:$0xff]
        %v2789 = vld [vmem:[%s2770 + $0x90] sm:$0xff]
        %v2790 = vld [vmem:[%s2770 + $0x98] sm:$0xff]
        %v2791 = vld [vmem:[%s2770 + $0xa0] sm:$0xff]
        %v2792 = vld [vmem:[%s2770 + $0xa8] sm:$0xff]
        %v2793 = vld [vmem:[%s2770 + $0xb0] sm:$0xff]
        %v2794 = vld [vmem:[%s2770 + $0xb8] sm:$0xff]
        %v2795 = vld [vmem:[%s2770 + $0xc0] sm:$0xff]
        %v2796 = vld [vmem:[%s2770 + $0xc8] sm:$0xff]
        %v2797 = vld [vmem:[%s2770 + $0xd0] sm:$0xff]
        %v2798 = vld [vmem:[%s2770 + $0xd8] sm:$0xff]
        %v2799 = vld [vmem:[%s2770 + $0xe0] sm:$0xff]
        %v2800 = vld [vmem:[%s2770 + $0xe8] sm:$0xff]
        %v2801 = vld [vmem:[%s2770 + $0xf0] sm:$0xff]
        %v2802 = vld [vmem:[%s2770 + $0xf8] sm:$0xff]
        %v2811 = vunpack.c.l.b16 %v2762
        %v2812 = vunpack.c.h.b16 %v2762
        %v2813 = vunpack.c.l.b16 %v2763
        %v2814 = vunpack.c.h.b16 %v2763
        %v2815 = vunpack.c.l.b16 %v2764
        %v2816 = vunpack.c.h.b16 %v2764
        %v2817 = vunpack.c.l.b16 %v2765
        %v2818 = vunpack.c.h.b16 %v2765
        %v2819 = vunpack.c.l.b16 %v2766
        %v2820 = vunpack.c.h.b16 %v2766
        %v2821 = vunpack.c.l.b16 %v2767
        %v2822 = vunpack.c.h.b16 %v2767
        %v2823 = vunpack.c.l.b16 %v2768
        %v2824 = vunpack.c.h.b16 %v2768
        %v2825 = vunpack.c.l.b16 %v2769
        %v2826 = vunpack.c.h.b16 %v2769
        %v2827 = vpack.c.b16 %v2813, %v2811
        %v2828 = vpack.c.b16 %v2814, %v2812
        %v2829 = vpack.c.b16 %v2817, %v2815
        %v2830 = vpack.c.b16 %v2818, %v2816
        %v2831 = vpack.c.b16 %v2821, %v2819
        %v2832 = vpack.c.b16 %v2822, %v2820
        %v2833 = vpack.c.b16 %v2825, %v2823
        %v2834 = vpack.c.b16 %v2826, %v2824
        %v2875 = vunpack.c.l.b16 %v2771
        %v2876 = vunpack.c.h.b16 %v2771
        %v2877 = vunpack.c.l.b16 %v2772
        %v2878 = vunpack.c.h.b16 %v2772
        %v2879 = vunpack.c.l.b16 %v2773
        %v2880 = vunpack.c.h.b16 %v2773
        %v2881 = vunpack.c.l.b16 %v2774
        %v2882 = vunpack.c.h.b16 %v2774
        %v2883 = vunpack.c.l.b16 %v2775
        %v2884 = vunpack.c.h.b16 %v2775
        %v2885 = vunpack.c.l.b16 %v2776
        %v2886 = vunpack.c.h.b16 %v2776
        %v2887 = vunpack.c.l.b16 %v2777
        %v2888 = vunpack.c.h.b16 %v2777
        %v2889 = vunpack.c.l.b16 %v2778
        %v2890 = vunpack.c.h.b16 %v2778
        %v2891 = vunpack.c.l.b16 %v2779
        %v2892 = vunpack.c.h.b16 %v2779
        %v2893 = vunpack.c.l.b16 %v2780
        %v2894 = vunpack.c.h.b16 %v2780
        %v2895 = vunpack.c.l.b16 %v2781
        %v2896 = vunpack.c.h.b16 %v2781
        %v2897 = vunpack.c.l.b16 %v2782
        %v2898 = vunpack.c.h.b16 %v2782
        %v2899 = vunpack.c.l.b16 %v2783
        %v2900 = vunpack.c.h.b16 %v2783
        %v2901 = vunpack.c.l.b16 %v2784
        %v2902 = vunpack.c.h.b16 %v2784
        %v2903 = vunpack.c.l.b16 %v2785
        %v2904 = vunpack.c.h.b16 %v2785
        %v2905 = vunpack.c.l.b16 %v2786
        %v2906 = vunpack.c.h.b16 %v2786
        %v2907 = vunpack.c.l.b16 %v2787
        %v2908 = vunpack.c.h.b16 %v2787
        %v2909 = vunpack.c.l.b16 %v2788
        %v2910 = vunpack.c.h.b16 %v2788
        %v2911 = vunpack.c.l.b16 %v2789
        %v2912 = vunpack.c.h.b16 %v2789
        %v2913 = vunpack.c.l.b16 %v2790
        %v2914 = vunpack.c.h.b16 %v2790
        %v2915 = vunpack.c.l.b16 %v2791
        %v2916 = vunpack.c.h.b16 %v2791
        %v2917 = vunpack.c.l.b16 %v2792
        %v2918 = vunpack.c.h.b16 %v2792
        %v2919 = vunpack.c.l.b16 %v2793
        %v2920 = vunpack.c.h.b16 %v2793
        %v2921 = vunpack.c.l.b16 %v2794
        %v2922 = vunpack.c.h.b16 %v2794
        %v2923 = vunpack.c.l.b16 %v2795
        %v2924 = vunpack.c.h.b16 %v2795
        %v2925 = vunpack.c.l.b16 %v2796
        %v2926 = vunpack.c.h.b16 %v2796
        %v2927 = vunpack.c.l.b16 %v2797
        %v2928 = vunpack.c.h.b16 %v2797
        %v2929 = vunpack.c.l.b16 %v2798
        %v2930 = vunpack.c.h.b16 %v2798
        %v2931 = vunpack.c.l.b16 %v2799
        %v2932 = vunpack.c.h.b16 %v2799
        %v2933 = vunpack.c.l.b16 %v2800
        %v2934 = vunpack.c.h.b16 %v2800
        %v2935 = vunpack.c.l.b16 %v2801
        %v2936 = vunpack.c.h.b16 %v2801
        %v2937 = vunpack.c.l.b16 %v2802
        %v2938 = vunpack.c.h.b16 %v2802
        %v2939 = vpack.c.b16 %v2877, %v2875
        %v2940 = vpack.c.b16 %v2878, %v2876
        %v2941 = vpack.c.b16 %v2881, %v2879
        %v2942 = vpack.c.b16 %v2882, %v2880
        %v2943 = vpack.c.b16 %v2885, %v2883
        %v2944 = vpack.c.b16 %v2886, %v2884
        %v2945 = vpack.c.b16 %v2889, %v2887
        %v2946 = vpack.c.b16 %v2890, %v2888
        %v2947 = vpack.c.b16 %v2893, %v2891
        %v2948 = vpack.c.b16 %v2894, %v2892
        %v2949 = vpack.c.b16 %v2897, %v2895
        %v2950 = vpack.c.b16 %v2898, %v2896
        %v2951 = vpack.c.b16 %v2901, %v2899
        %v2952 = vpack.c.b16 %v2902, %v2900
        %v2953 = vpack.c.b16 %v2905, %v2903
        %v2954 = vpack.c.b16 %v2906, %v2904
        %v2955 = vpack.c.b16 %v2909, %v2907
        %v2956 = vpack.c.b16 %v2910, %v2908
        %v2957 = vpack.c.b16 %v2913, %v2911
        %v2958 = vpack.c.b16 %v2914, %v2912
        %v2959 = vpack.c.b16 %v2917, %v2915
        %v2960 = vpack.c.b16 %v2918, %v2916
        %v2961 = vpack.c.b16 %v2921, %v2919
        %v2962 = vpack.c.b16 %v2922, %v2920
        %v2963 = vpack.c.b16 %v2925, %v2923
        %v2964 = vpack.c.b16 %v2926, %v2924
        %v2965 = vpack.c.b16 %v2929, %v2927
        %v2966 = vpack.c.b16 %v2930, %v2928
        %v2967 = vpack.c.b16 %v2933, %v2931
        %v2968 = vpack.c.b16 %v2934, %v2932
        %v2969 = vpack.c.b16 %v2937, %v2935
        %v2970 = vpack.c.b16 %v2938, %v2936
        %3003 = vmatprep.subr.bf16.mxu0 %v2940
        %3004 = vmatpush1.bf16.msra.mxu0 %v2939
        %3005 = vmatprep.subr.bf16.mxu0 %v2942
        %3006 = vmatpush1.bf16.msra.mxu0 %v2941
        %3007 = vmatprep.subr.bf16.mxu0 %v2944
        %3008 = vmatpush1.bf16.msra.mxu0 %v2943
        %3009 = vmatprep.subr.bf16.mxu0 %v2946
        %3010 = vmatpush1.bf16.msra.mxu0 %v2945
        %3011 = vmatprep.subr.bf16.mxu0 %v2948
        %3012 = vmatpush1.bf16.msra.mxu0 %v2947
        %3013 = vmatprep.subr.bf16.mxu0 %v2950
        %3014 = vmatpush1.bf16.msra.mxu0 %v2949
        %3015 = vmatprep.subr.bf16.mxu0 %v2952
        %3016 = vmatpush1.bf16.msra.mxu0 %v2951
        %3017 = vmatprep.subr.bf16.mxu0 %v2954
        %3018 = vmatpush1.bf16.msra.mxu0 %v2953
        %3019 = vmatprep.subr.bf16.mxu0 %v2956
        %3020 = vmatpush1.bf16.msra.mxu0 %v2955
        %3021 = vmatprep.subr.bf16.mxu0 %v2958
        %3022 = vmatpush1.bf16.msra.mxu0 %v2957
        %3023 = vmatprep.subr.bf16.mxu0 %v2960
        %3024 = vmatpush1.bf16.msra.mxu0 %v2959
        %3025 = vmatprep.subr.bf16.mxu0 %v2962
        %3026 = vmatpush1.bf16.msra.mxu0 %v2961
        %3027 = vmatprep.subr.bf16.mxu0 %v2964
        %3028 = vmatpush1.bf16.msra.mxu0 %v2963
        %3029 = vmatprep.subr.bf16.mxu0 %v2966
        %3030 = vmatpush1.bf16.msra.mxu0 %v2965
        %3031 = vmatprep.subr.bf16.mxu0 %v2968
        %3032 = vmatpush1.bf16.msra.mxu0 %v2967
        %3033 = vmatprep.subr.bf16.mxu0 %v2970
        %3034 = vmatpush1.bf16.msra.mxu0 %v2969
        %3035 = vmatprep.mubr.bf16.mxu0 %v2828
        %3036 = vmatmul.mubr.bf16.gmra.mrb[0].mxu0 %v2827
        %v3037 = vpop.f32.mrb[0].mxu0
        %v3038 = vadd.f32 0.0, %v3037
        %v3039 = vpop.f32.mrb[0].mxu0
        %v3040 = vadd.f32 0.0, %v3039
        %v3041 = vpop.f32.mrb[0].mxu0
        %v3042 = vadd.f32 0.0, %v3041
        %v3043 = vpop.f32.mrb[0].mxu0
        %v3044 = vadd.f32 0.0, %v3043
        %3045 = vmatprep.mubr.bf16.mxu0 %v2830
        %3046 = vmatmul.mubr.bf16.gmra.mrb[0].mxu0 %v2829
        %v3047 = vpop.f32.mrb[0].mxu0
        %v3048 = vadd.f32 0.0, %v3047
        %v3049 = vpop.f32.mrb[0].mxu0
        %v3050 = vadd.f32 0.0, %v3049
        %v3051 = vpop.f32.mrb[0].mxu0
        %v3052 = vadd.f32 0.0, %v3051
        %v3053 = vpop.f32.mrb[0].mxu0
        %v3054 = vadd.f32 0.0, %v3053
        %3055 = vmatprep.mubr.bf16.mxu0 %v2832
        %3056 = vmatmul.mubr.bf16.gmra.mrb[0].mxu0 %v2831
        %v3057 = vpop.f32.mrb[0].mxu0
        %v3058 = vadd.f32 0.0, %v3057
        %v3059 = vpop.f32.mrb[0].mxu0
        %v3060 = vadd.f32 0.0, %v3059
        %v3061 = vpop.f32.mrb[0].mxu0
        %v3062 = vadd.f32 0.0, %v3061
        %v3063 = vpop.f32.mrb[0].mxu0
        %v3064 = vadd.f32 0.0, %v3063
        %3065 = vmatprep.mubr.bf16.mxu0 %v2834
        %3066 = vmatmul.mubr.bf16.gmra.mrb[0].mxu0 %v2833
        %v3067 = vpop.f32.mrb[0].mxu0
        %v3068 = vadd.f32 0.0, %v3067
        %v3069 = vpop.f32.mrb[0].mxu0
        %v3070 = vadd.f32 0.0, %v3069
        %v3071 = vpop.f32.mrb[0].mxu0
        %v3072 = vadd.f32 0.0, %v3071
        %v3073 = vpop.f32.mrb[0].mxu0
        %v3074 = vadd.f32 0.0, %v3073
        %3075 = vdwg.mxu0
        %v3076 = vadd.f32 %v2745, %v3038
        %v3077 = vadd.f32 %v2746, %v3040
        %v3078 = vadd.f32 %v2747, %v3042
        %v3079 = vadd.f32 %v2748, %v3044
        %v3080 = vadd.f32 %v2749, %v3048
        %v3081 = vadd.f32 %v2750, %v3050
        %v3082 = vadd.f32 %v2751, %v3052
        %v3083 = vadd.f32 %v2752, %v3054
        %v3084 = vadd.f32 %v2753, %v3058
        %v3085 = vadd.f32 %v2754, %v3060
        %v3086 = vadd.f32 %v2755, %v3062
        %v3087 = vadd.f32 %v2756, %v3064
        %v3088 = vadd.f32 %v2757, %v3068
        %v3089 = vadd.f32 %v2758, %v3070
        %v3090 = vadd.f32 %v2759, %v3072
        %v3091 = vadd.f32 %v2760, %v3074
        %v3092 = vld [vmem:[%s2761] sm:$0xff]
        %v3093 = vld [vmem:[%s2761 + $0x8] sm:$0x11]
        %v3094 = vld [vmem:[%s2761 + $0x10] sm:$0xff]
        %v3095 = vld [vmem:[%s2761 + $0x18] sm:$0x11]
        %v3096 = vld [vmem:[%s2761 + $0x20] sm:$0xff]
        %v3097 = vld [vmem:[%s2761 + $0x28] sm:$0x11]
        %v3098 = vld [vmem:[%s2761 + $0x30] sm:$0xff]
        %v3099 = vld [vmem:[%s2761 + $0x38] sm:$0x11]
        %v3100 = vld [vmem:[%s2761 + $0x40] sm:$0xff]
        %v3101 = vld [vmem:[%s2761 + $0x48] sm:$0x11]
        %v3102 = vld [vmem:[%s2761 + $0x50] sm:$0xff]
        %v3103 = vld [vmem:[%s2761 + $0x58] sm:$0x11]
        %v3104 = vld [vmem:[%s2761 + $0x60] sm:$0xff]
        %v3105 = vld [vmem:[%s2761 + $0x68] sm:$0x11]
        %v3106 = vld [vmem:[%s2761 + $0x70] sm:$0xff]
        %v3107 = vld [vmem:[%s2761 + $0x78] sm:$0x11]
        %v3109 = vshrl.u32 %v3092, 16
        %v3111 = vrot.slane %v3109, 4
        %v3112 = vshll.u32 %v3092, 16
        %v3114 = vrot.slane %v3112, 5
        %v3115 = vor.u32 %v3111, %v3114
        %v3116 = vrot.slane %v3115, 4
        %v3118 = vshll.u32 %v3093, 16
        %v3120 = vrot.slane %v3118, 5
        %v3121 = vsel %vm562, %v3116, %v3120
        %v3123 = vshrl.u32 %v3094, 16
        %v3125 = vrot.slane %v3123, 4
        %v3126 = vshll.u32 %v3094, 16
        %v3128 = vrot.slane %v3126, 5
        %v3129 = vor.u32 %v3125, %v3128
        %v3130 = vrot.slane %v3129, 4
        %v3132 = vshll.u32 %v3095, 16
        %v3134 = vrot.slane %v3132, 5
        %v3135 = vsel %vm562, %v3130, %v3134
        %v3137 = vshrl.u32 %v3096, 16
        %v3139 = vrot.slane %v3137, 4
        %v3140 = vshll.u32 %v3096, 16
        %v3142 = vrot.slane %v3140, 5
        %v3143 = vor.u32 %v3139, %v3142
        %v3144 = vrot.slane %v3143, 4
        %v3146 = vshll.u32 %v3097, 16
        %v3148 = vrot.slane %v3146, 5
        %v3149 = vsel %vm562, %v3144, %v3148
        %v3151 = vshrl.u32 %v3098, 16
        %v3153 = vrot.slane %v3151, 4
        %v3154 = vshll.u32 %v3098, 16
        %v3156 = vrot.slane %v3154, 5
        %v3157 = vor.u32 %v3153, %v3156
        %v3158 = vrot.slane %v3157, 4
        %v3160 = vshll.u32 %v3099, 16
        %v3162 = vrot.slane %v3160, 5
        %v3163 = vsel %vm562, %v3158, %v3162
        %v3165 = vshrl.u32 %v3100, 16
        %v3167 = vrot.slane %v3165, 4
        %v3168 = vshll.u32 %v3100, 16
        %v3170 = vrot.slane %v3168, 5
        %v3171 = vor.u32 %v3167, %v3170
        %v3172 = vrot.slane %v3171, 4
        %v3174 = vshll.u32 %v3101, 16
        %v3176 = vrot.slane %v3174, 5
        %v3177 = vsel %vm562, %v3172, %v3176
        %v3179 = vshrl.u32 %v3102, 16
        %v3181 = vrot.slane %v3179, 4
        %v3182 = vshll.u32 %v3102, 16
        %v3184 = vrot.slane %v3182, 5
        %v3185 = vor.u32 %v3181, %v3184
        %v3186 = vrot.slane %v3185, 4
        %v3188 = vshll.u32 %v3103, 16
        %v3190 = vrot.slane %v3188, 5
        %v3191 = vsel %vm562, %v3186, %v3190
        %v3193 = vshrl.u32 %v3104, 16
        %v3195 = vrot.slane %v3193, 4
        %v3196 = vshll.u32 %v3104, 16
        %v3198 = vrot.slane %v3196, 5
        %v3199 = vor.u32 %v3195, %v3198
        %v3200 = vrot.slane %v3199, 4
        %v3202 = vshll.u32 %v3105, 16
        %v3204 = vrot.slane %v3202, 5
        %v3205 = vsel %vm562, %v3200, %v3204
        %v3207 = vshrl.u32 %v3106, 16
        %v3209 = vrot.slane %v3207, 4
        %v3210 = vshll.u32 %v3106, 16
        %v3212 = vrot.slane %v3210, 5
        %v3213 = vor.u32 %v3209, %v3212
        %v3214 = vrot.slane %v3213, 4
        %v3216 = vshll.u32 %v3107, 16
        %v3218 = vrot.slane %v3216, 5
        %v3219 = vsel %vm562, %v3214, %v3218
        %s3220 = scalar_lea.vmem %s3, 1792
        %v3221 = vld [vmem:[%s3220] sm:$0xff]
        %v3222 = vld [vmem:[%s3220 + $0x8] sm:$0xff]
        %v3223 = vld [vmem:[%s3220 + $0x10] sm:$0xff]
        %v3224 = vld [vmem:[%s3220 + $0x18] sm:$0xff]
        %v3225 = vld [vmem:[%s3220 + $0x20] sm:$0xff]
        %v3226 = vld [vmem:[%s3220 + $0x28] sm:$0xff]
        %v3227 = vld [vmem:[%s3220 + $0x30] sm:$0xff]
        %v3228 = vld [vmem:[%s3220 + $0x38] sm:$0xff]
        %v3229 = vld [vmem:[%s3220 + $0x40] sm:$0xff]
        %v3230 = vld [vmem:[%s3220 + $0x48] sm:$0xff]
        %v3231 = vld [vmem:[%s3220 + $0x50] sm:$0xff]
        %v3232 = vld [vmem:[%s3220 + $0x58] sm:$0xff]
        %v3233 = vld [vmem:[%s3220 + $0x60] sm:$0xff]
        %v3234 = vld [vmem:[%s3220 + $0x68] sm:$0xff]
        %v3235 = vld [vmem:[%s3220 + $0x70] sm:$0xff]
        %v3236 = vld [vmem:[%s3220 + $0x78] sm:$0xff]
        %v3237 = vld [vmem:[%s3220 + $0x80] sm:$0xff]
        %v3238 = vld [vmem:[%s3220 + $0x88] sm:$0xff]
        %v3239 = vld [vmem:[%s3220 + $0x90] sm:$0xff]
        %v3240 = vld [vmem:[%s3220 + $0x98] sm:$0xff]
        %v3241 = vld [vmem:[%s3220 + $0xa0] sm:$0xff]
        %v3242 = vld [vmem:[%s3220 + $0xa8] sm:$0xff]
        %v3243 = vld [vmem:[%s3220 + $0xb0] sm:$0xff]
        %v3244 = vld [vmem:[%s3220 + $0xb8] sm:$0xff]
        %v3245 = vld [vmem:[%s3220 + $0xc0] sm:$0xff]
        %v3246 = vld [vmem:[%s3220 + $0xc8] sm:$0xff]
        %v3247 = vld [vmem:[%s3220 + $0xd0] sm:$0xff]
        %v3248 = vld [vmem:[%s3220 + $0xd8] sm:$0xff]
        %v3249 = vld [vmem:[%s3220 + $0xe0] sm:$0xff]
        %v3250 = vld [vmem:[%s3220 + $0xe8] sm:$0xff]
        %v3251 = vld [vmem:[%s3220 + $0xf0] sm:$0xff]
        %v3252 = vld [vmem:[%s3220 + $0xf8] sm:$0xff]
        %v3253 = vunpack.c.l.b16 %v3121
        %v3254 = vunpack.c.h.b16 %v3121
        %v3255 = vunpack.c.l.b16 %v3135
        %v3256 = vunpack.c.h.b16 %v3135
        %v3257 = vunpack.c.l.b16 %v3149
        %v3258 = vunpack.c.h.b16 %v3149
        %v3259 = vunpack.c.l.b16 %v3163
        %v3260 = vunpack.c.h.b16 %v3163
        %v3261 = vunpack.c.l.b16 %v3177
        %v3262 = vunpack.c.h.b16 %v3177
        %v3263 = vunpack.c.l.b16 %v3191
        %v3264 = vunpack.c.h.b16 %v3191
        %v3265 = vunpack.c.l.b16 %v3205
        %v3266 = vunpack.c.h.b16 %v3205
        %v3267 = vunpack.c.l.b16 %v3219
        %v3268 = vunpack.c.h.b16 %v3219
        %v3269 = vpack.c.b16 %v3255, %v3253
        %v3270 = vpack.c.b16 %v3256, %v3254
        %v3271 = vpack.c.b16 %v3259, %v3257
        %v3272 = vpack.c.b16 %v3260, %v3258
        %v3273 = vpack.c.b16 %v3263, %v3261
        %v3274 = vpack.c.b16 %v3264, %v3262
        %v3275 = vpack.c.b16 %v3267, %v3265
        %v3276 = vpack.c.b16 %v3268, %v3266
        %v3317 = vunpack.c.l.b16 %v3221
        %v3318 = vunpack.c.h.b16 %v3221
        %v3319 = vunpack.c.l.b16 %v3222
        %v3320 = vunpack.c.h.b16 %v3222
        %v3321 = vunpack.c.l.b16 %v3223
        %v3322 = vunpack.c.h.b16 %v3223
        %v3323 = vunpack.c.l.b16 %v3224
        %v3324 = vunpack.c.h.b16 %v3224
        %v3325 = vunpack.c.l.b16 %v3225
        %v3326 = vunpack.c.h.b16 %v3225
        %v3327 = vunpack.c.l.b16 %v3226
        %v3328 = vunpack.c.h.b16 %v3226
        %v3329 = vunpack.c.l.b16 %v3227
        %v3330 = vunpack.c.h.b16 %v3227
        %v3331 = vunpack.c.l.b16 %v3228
        %v3332 = vunpack.c.h.b16 %v3228
        %v3333 = vunpack.c.l.b16 %v3229
        %v3334 = vunpack.c.h.b16 %v3229
        %v3335 = vunpack.c.l.b16 %v3230
        %v3336 = vunpack.c.h.b16 %v3230
        %v3337 = vunpack.c.l.b16 %v3231
        %v3338 = vunpack.c.h.b16 %v3231
        %v3339 = vunpack.c.l.b16 %v3232
        %v3340 = vunpack.c.h.b16 %v3232
        %v3341 = vunpack.c.l.b16 %v3233
        %v3342 = vunpack.c.h.b16 %v3233
        %v3343 = vunpack.c.l.b16 %v3234
        %v3344 = vunpack.c.h.b16 %v3234
        %v3345 = vunpack.c.l.b16 %v3235
        %v3346 = vunpack.c.h.b16 %v3235
        %v3347 = vunpack.c.l.b16 %v3236
        %v3348 = vunpack.c.h.b16 %v3236
        %v3349 = vunpack.c.l.b16 %v3237
        %v3350 = vunpack.c.h.b16 %v3237
        %v3351 = vunpack.c.l.b16 %v3238
        %v3352 = vunpack.c.h.b16 %v3238
        %v3353 = vunpack.c.l.b16 %v3239
        %v3354 = vunpack.c.h.b16 %v3239
        %v3355 = vunpack.c.l.b16 %v3240
        %v3356 = vunpack.c.h.b16 %v3240
        %v3357 = vunpack.c.l.b16 %v3241
        %v3358 = vunpack.c.h.b16 %v3241
        %v3359 = vunpack.c.l.b16 %v3242
        %v3360 = vunpack.c.h.b16 %v3242
        %v3361 = vunpack.c.l.b16 %v3243
        %v3362 = vunpack.c.h.b16 %v3243
        %v3363 = vunpack.c.l.b16 %v3244
        %v3364 = vunpack.c.h.b16 %v3244
        %v3365 = vunpack.c.l.b16 %v3245
        %v3366 = vunpack.c.h.b16 %v3245
        %v3367 = vunpack.c.l.b16 %v3246
        %v3368 = vunpack.c.h.b16 %v3246
        %v3369 = vunpack.c.l.b16 %v3247
        %v3370 = vunpack.c.h.b16 %v3247
        %v3371 = vunpack.c.l.b16 %v3248
        %v3372 = vunpack.c.h.b16 %v3248
        %v3373 = vunpack.c.l.b16 %v3249
        %v3374 = vunpack.c.h.b16 %v3249
        %v3375 = vunpack.c.l.b16 %v3250
        %v3376 = vunpack.c.h.b16 %v3250
        %v3377 = vunpack.c.l.b16 %v3251
        %v3378 = vunpack.c.h.b16 %v3251
        %v3379 = vunpack.c.l.b16 %v3252
        %v3380 = vunpack.c.h.b16 %v3252
        %v3381 = vpack.c.b16 %v3319, %v3317
        %v3382 = vpack.c.b16 %v3320, %v3318
        %v3383 = vpack.c.b16 %v3323, %v3321
        %v3384 = vpack.c.b16 %v3324, %v3322
        %v3385 = vpack.c.b16 %v3327, %v3325
        %v3386 = vpack.c.b16 %v3328, %v3326
        %v3387 = vpack.c.b16 %v3331, %v3329
        %v3388 = vpack.c.b16 %v3332, %v3330
        %v3389 = vpack.c.b16 %v3335, %v3333
        %v3390 = vpack.c.b16 %v3336, %v3334
        %v3391 = vpack.c.b16 %v3339, %v3337
        %v3392 = vpack.c.b16 %v3340, %v3338
        %v3393 = vpack.c.b16 %v3343, %v3341
        %v3394 = vpack.c.b16 %v3344, %v3342
        %v3395 = vpack.c.b16 %v3347, %v3345
        %v3396 = vpack.c.b16 %v3348, %v3346
        %v3397 = vpack.c.b16 %v3351, %v3349
        %v3398 = vpack.c.b16 %v3352, %v3350
        %v3399 = vpack.c.b16 %v3355, %v3353
        %v3400 = vpack.c.b16 %v3356, %v3354
        %v3401 = vpack.c.b16 %v3359, %v3357
        %v3402 = vpack.c.b16 %v3360, %v3358
        %v3403 = vpack.c.b16 %v3363, %v3361
        %v3404 = vpack.c.b16 %v3364, %v3362
        %v3405 = vpack.c.b16 %v3367, %v3365
        %v3406 = vpack.c.b16 %v3368, %v3366
        %v3407 = vpack.c.b16 %v3371, %v3369
        %v3408 = vpack.c.b16 %v3372, %v3370
        %v3409 = vpack.c.b16 %v3375, %v3373
        %v3410 = vpack.c.b16 %v3376, %v3374
        %v3411 = vpack.c.b16 %v3379, %v3377
        %v3412 = vpack.c.b16 %v3380, %v3378
        %3445 = vmatprep.subr.bf16.mxu0 %v3382
        %3446 = vmatpush1.bf16.msra.mxu0 %v3381
        %3447 = vmatprep.subr.bf16.mxu0 %v3384
        %3448 = vmatpush1.bf16.msra.mxu0 %v3383
        %3449 = vmatprep.subr.bf16.mxu0 %v3386
        %3450 = vmatpush1.bf16.msra.mxu0 %v3385
        %3451 = vmatprep.subr.bf16.mxu0 %v3388
        %3452 = vmatpush1.bf16.msra.mxu0 %v3387
        %3453 = vmatprep.subr.bf16.mxu0 %v3390
        %3454 = vmatpush1.bf16.msra.mxu0 %v3389
        %3455 = vmatprep.subr.bf16.mxu0 %v3392
        %3456 = vmatpush1.bf16.msra.mxu0 %v3391
        %3457 = vmatprep.subr.bf16.mxu0 %v3394
        %3458 = vmatpush1.bf16.msra.mxu0 %v3393
        %3459 = vmatprep.subr.bf16.mxu0 %v3396
        %3460 = vmatpush1.bf16.msra.mxu0 %v3395
        %3461 = vmatprep.subr.bf16.mxu0 %v3398
        %3462 = vmatpush1.bf16.msra.mxu0 %v3397
        %3463 = vmatprep.subr.bf16.mxu0 %v3400
        %3464 = vmatpush1.bf16.msra.mxu0 %v3399
        %3465 = vmatprep.subr.bf16.mxu0 %v3402
        %3466 = vmatpush1.bf16.msra.mxu0 %v3401
        %3467 = vmatprep.subr.bf16.mxu0 %v3404
        %3468 = vmatpush1.bf16.msra.mxu0 %v3403
        %3469 = vmatprep.subr.bf16.mxu0 %v3406
        %3470 = vmatpush1.bf16.msra.mxu0 %v3405
        %3471 = vmatprep.subr.bf16.mxu0 %v3408
        %3472 = vmatpush1.bf16.msra.mxu0 %v3407
        %3473 = vmatprep.subr.bf16.mxu0 %v3410
        %3474 = vmatpush1.bf16.msra.mxu0 %v3409
        %3475 = vmatprep.subr.bf16.mxu0 %v3412
        %3476 = vmatpush1.bf16.msra.mxu0 %v3411
        %3477 = vmatprep.mubr.bf16.mxu0 %v3270
        %3478 = vmatmul.mubr.bf16.gmra.mrb[0].mxu0 %v3269
        %v3479 = vpop.f32.mrb[0].mxu0
        %v3480 = vadd.f32 0.0, %v3479
        %v3481 = vpop.f32.mrb[0].mxu0
        %v3482 = vadd.f32 0.0, %v3481
        %v3483 = vpop.f32.mrb[0].mxu0
        %v3484 = vadd.f32 0.0, %v3483
        %v3485 = vpop.f32.mrb[0].mxu0
        %v3486 = vadd.f32 0.0, %v3485
        %3487 = vmatprep.mubr.bf16.mxu0 %v3272
        %3488 = vmatmul.mubr.bf16.gmra.mrb[0].mxu0 %v3271
        %v3489 = vpop.f32.mrb[0].mxu0
        %v3490 = vadd.f32 0.0, %v3489
        %v3491 = vpop.f32.mrb[0].mxu0
        %v3492 = vadd.f32 0.0, %v3491
        %v3493 = vpop.f32.mrb[0].mxu0
        %v3494 = vadd.f32 0.0, %v3493
        %v3495 = vpop.f32.mrb[0].mxu0
        %v3496 = vadd.f32 0.0, %v3495
        %3497 = vmatprep.mubr.bf16.mxu0 %v3274
        %3498 = vmatmul.mubr.bf16.gmra.mrb[0].mxu0 %v3273
        %v3499 = vpop.f32.mrb[0].mxu0
        %v3500 = vadd.f32 0.0, %v3499
        %v3501 = vpop.f32.mrb[0].mxu0
        %v3502 = vadd.f32 0.0, %v3501
        %v3503 = vpop.f32.mrb[0].mxu0
        %v3504 = vadd.f32 0.0, %v3503
        %v3505 = vpop.f32.mrb[0].mxu0
        %v3506 = vadd.f32 0.0, %v3505
        %3507 = vmatprep.mubr.bf16.mxu0 %v3276
        %3508 = vmatmul.mubr.bf16.gmra.mrb[0].mxu0 %v3275
        %v3509 = vpop.f32.mrb[0].mxu0
        %v3510 = vadd.f32 0.0, %v3509
        %v3511 = vpop.f32.mrb[0].mxu0
        %v3512 = vadd.f32 0.0, %v3511
        %v3513 = vpop.f32.mrb[0].mxu0
        %v3514 = vadd.f32 0.0, %v3513
        %v3515 = vpop.f32.mrb[0].mxu0
        %v3516 = vadd.f32 0.0, %v3515
        %3517 = vdwg.mxu0
        %v3518 = vadd.f32 %v3076, %v3480
        %v3519 = vadd.f32 %v3077, %v3482
        %v3520 = vadd.f32 %v3078, %v3484
        %v3521 = vadd.f32 %v3079, %v3486
        %v3522 = vadd.f32 %v3080, %v3490
        %v3523 = vadd.f32 %v3081, %v3492
        %v3524 = vadd.f32 %v3082, %v3494
        %v3525 = vadd.f32 %v3083, %v3496
        %v3526 = vadd.f32 %v3084, %v3500
        %v3527 = vadd.f32 %v3085, %v3502
        %v3528 = vadd.f32 %v3086, %v3504
        %v3529 = vadd.f32 %v3087, %v3506
        %v3530 = vadd.f32 %v3088, %v3510
        %v3531 = vadd.f32 %v3089, %v3512
        %v3532 = vadd.f32 %v3090, %v3514
        %v3533 = vadd.f32 %v3091, %v3516
        %v3534 = vld [vmem:[%s2761] sm:$0xee]
        %v3535 = vld [vmem:[%s2761 + $0x10] sm:$0xee]
        %v3536 = vld [vmem:[%s2761 + $0x20] sm:$0xee]
        %v3537 = vld [vmem:[%s2761 + $0x30] sm:$0xee]
        %v3538 = vld [vmem:[%s2761 + $0x40] sm:$0xee]
        %v3539 = vld [vmem:[%s2761 + $0x50] sm:$0xee]
        %v3540 = vld [vmem:[%s2761 + $0x60] sm:$0xee]
        %v3541 = vld [vmem:[%s2761 + $0x70] sm:$0xee]
        %v3558 = vrot.slane %v3534, 5
        %v3559 = vrot.slane %v3558, 4
        %v3560 = vrot.slane %v3093, 5
        %v3561 = vsel %vm1272, %v3559, %v3560
        %v3562 = vrot.slane %v3535, 5
        %v3563 = vrot.slane %v3562, 4
        %v3564 = vrot.slane %v3095, 5
        %v3565 = vsel %vm1272, %v3563, %v3564
        %v3566 = vrot.slane %v3536, 5
        %v3567 = vrot.slane %v3566, 4
        %v3568 = vrot.slane %v3097, 5
        %v3569 = vsel %vm1272, %v3567, %v3568
        %v3570 = vrot.slane %v3537, 5
        %v3571 = vrot.slane %v3570, 4
        %v3572 = vrot.slane %v3099, 5
        %v3573 = vsel %vm1272, %v3571, %v3572
        %v3574 = vrot.slane %v3538, 5
        %v3575 = vrot.slane %v3574, 4
        %v3576 = vrot.slane %v3101, 5
        %v3577 = vsel %vm1272, %v3575, %v3576
        %v3578 = vrot.slane %v3539, 5
        %v3579 = vrot.slane %v3578, 4
        %v3580 = vrot.slane %v3103, 5
        %v3581 = vsel %vm1272, %v3579, %v3580
        %v3582 = vrot.slane %v3540, 5
        %v3583 = vrot.slane %v3582, 4
        %v3584 = vrot.slane %v3105, 5
        %v3585 = vsel %vm1272, %v3583, %v3584
        %v3586 = vrot.slane %v3541, 5
        %v3587 = vrot.slane %v3586, 4
        %v3588 = vrot.slane %v3107, 5
        %v3589 = vsel %vm1272, %v3587, %v3588
        %s3590 = scalar_lea.vmem %s3, 2048
        %v3591 = vld [vmem:[%s3590] sm:$0xff]
        %v3592 = vld [vmem:[%s3590 + $0x8] sm:$0xff]
        %v3593 = vld [vmem:[%s3590 + $0x10] sm:$0xff]
        %v3594 = vld [vmem:[%s3590 + $0x18] sm:$0xff]
        %v3595 = vld [vmem:[%s3590 + $0x20] sm:$0xff]
        %v3596 = vld [vmem:[%s3590 + $0x28] sm:$0xff]
        %v3597 = vld [vmem:[%s3590 + $0x30] sm:$0xff]
        %v3598 = vld [vmem:[%s3590 + $0x38] sm:$0xff]
        %v3599 = vld [vmem:[%s3590 + $0x40] sm:$0xff]
        %v3600 = vld [vmem:[%s3590 + $0x48] sm:$0xff]
        %v3601 = vld [vmem:[%s3590 + $0x50] sm:$0xff]
        %v3602 = vld [vmem:[%s3590 + $0x58] sm:$0xff]
        %v3603 = vld [vmem:[%s3590 + $0x60] sm:$0xff]
        %v3604 = vld [vmem:[%s3590 + $0x68] sm:$0xff]
        %v3605 = vld [vmem:[%s3590 + $0x70] sm:$0xff]
        %v3606 = vld [vmem:[%s3590 + $0x78] sm:$0xff]
        %v3607 = vld [vmem:[%s3590 + $0x80] sm:$0xff]
        %v3608 = vld [vmem:[%s3590 + $0x88] sm:$0xff]
        %v3609 = vld [vmem:[%s3590 + $0x90] sm:$0xff]
        %v3610 = vld [vmem:[%s3590 + $0x98] sm:$0xff]
        %v3611 = vld [vmem:[%s3590 + $0xa0] sm:$0xff]
        %v3612 = vld [vmem:[%s3590 + $0xa8] sm:$0xff]
        %v3613 = vld [vmem:[%s3590 + $0xb0] sm:$0xff]
        %v3614 = vld [vmem:[%s3590 + $0xb8] sm:$0xff]
        %v3615 = vld [vmem:[%s3590 + $0xc0] sm:$0xff]
        %v3616 = vld [vmem:[%s3590 + $0xc8] sm:$0xff]
        %v3617 = vld [vmem:[%s3590 + $0xd0] sm:$0xff]
        %v3618 = vld [vmem:[%s3590 + $0xd8] sm:$0xff]
        %v3619 = vld [vmem:[%s3590 + $0xe0] sm:$0xff]
        %v3620 = vld [vmem:[%s3590 + $0xe8] sm:$0xff]
        %v3621 = vld [vmem:[%s3590 + $0xf0] sm:$0xff]
        %v3622 = vld [vmem:[%s3590 + $0xf8] sm:$0xff]
        %v3623 = vunpack.c.l.b16 %v3561
        %v3624 = vunpack.c.h.b16 %v3561
        %v3625 = vunpack.c.l.b16 %v3565
        %v3626 = vunpack.c.h.b16 %v3565
        %v3627 = vunpack.c.l.b16 %v3569
        %v3628 = vunpack.c.h.b16 %v3569
        %v3629 = vunpack.c.l.b16 %v3573
        %v3630 = vunpack.c.h.b16 %v3573
        %v3631 = vunpack.c.l.b16 %v3577
        %v3632 = vunpack.c.h.b16 %v3577
        %v3633 = vunpack.c.l.b16 %v3581
        %v3634 = vunpack.c.h.b16 %v3581
        %v3635 = vunpack.c.l.b16 %v3585
        %v3636 = vunpack.c.h.b16 %v3585
        %v3637 = vunpack.c.l.b16 %v3589
        %v3638 = vunpack.c.h.b16 %v3589
        %v3639 = vpack.c.b16 %v3625, %v3623
        %v3640 = vpack.c.b16 %v3626, %v3624
        %v3641 = vpack.c.b16 %v3629, %v3627
        %v3642 = vpack.c.b16 %v3630, %v3628
        %v3643 = vpack.c.b16 %v3633, %v3631
        %v3644 = vpack.c.b16 %v3634, %v3632
        %v3645 = vpack.c.b16 %v3637, %v3635
        %v3646 = vpack.c.b16 %v3638, %v3636
        %v3687 = vunpack.c.l.b16 %v3591
        %v3688 = vunpack.c.h.b16 %v3591
        %v3689 = vunpack.c.l.b16 %v3592
        %v3690 = vunpack.c.h.b16 %v3592
        %v3691 = vunpack.c.l.b16 %v3593
        %v3692 = vunpack.c.h.b16 %v3593
        %v3693 = vunpack.c.l.b16 %v3594
        %v3694 = vunpack.c.h.b16 %v3594
        %v3695 = vunpack.c.l.b16 %v3595
        %v3696 = vunpack.c.h.b16 %v3595
        %v3697 = vunpack.c.l.b16 %v3596
        %v3698 = vunpack.c.h.b16 %v3596
        %v3699 = vunpack.c.l.b16 %v3597
        %v3700 = vunpack.c.h.b16 %v3597
        %v3701 = vunpack.c.l.b16 %v3598
        %v3702 = vunpack.c.h.b16 %v3598
        %v3703 = vunpack.c.l.b16 %v3599
        %v3704 = vunpack.c.h.b16 %v3599
        %v3705 = vunpack.c.l.b16 %v3600
        %v3706 = vunpack.c.h.b16 %v3600
        %v3707 = vunpack.c.l.b16 %v3601
        %v3708 = vunpack.c.h.b16 %v3601
        %v3709 = vunpack.c.l.b16 %v3602
        %v3710 = vunpack.c.h.b16 %v3602
        %v3711 = vunpack.c.l.b16 %v3603
        %v3712 = vunpack.c.h.b16 %v3603
        %v3713 = vunpack.c.l.b16 %v3604
        %v3714 = vunpack.c.h.b16 %v3604
        %v3715 = vunpack.c.l.b16 %v3605
        %v3716 = vunpack.c.h.b16 %v3605
        %v3717 = vunpack.c.l.b16 %v3606
        %v3718 = vunpack.c.h.b16 %v3606
        %v3719 = vunpack.c.l.b16 %v3607
        %v3720 = vunpack.c.h.b16 %v3607
        %v3721 = vunpack.c.l.b16 %v3608
        %v3722 = vunpack.c.h.b16 %v3608
        %v3723 = vunpack.c.l.b16 %v3609
        %v3724 = vunpack.c.h.b16 %v3609
        %v3725 = vunpack.c.l.b16 %v3610
        %v3726 = vunpack.c.h.b16 %v3610
        %v3727 = vunpack.c.l.b16 %v3611
        %v3728 = vunpack.c.h.b16 %v3611
        %v3729 = vunpack.c.l.b16 %v3612
        %v3730 = vunpack.c.h.b16 %v3612
        %v3731 = vunpack.c.l.b16 %v3613
        %v3732 = vunpack.c.h.b16 %v3613
        %v3733 = vunpack.c.l.b16 %v3614
        %v3734 = vunpack.c.h.b16 %v3614
        %v3735 = vunpack.c.l.b16 %v3615
        %v3736 = vunpack.c.h.b16 %v3615
        %v3737 = vunpack.c.l.b16 %v3616
        %v3738 = vunpack.c.h.b16 %v3616
        %v3739 = vunpack.c.l.b16 %v3617
        %v3740 = vunpack.c.h.b16 %v3617
        %v3741 = vunpack.c.l.b16 %v3618
        %v3742 = vunpack.c.h.b16 %v3618
        %v3743 = vunpack.c.l.b16 %v3619
        %v3744 = vunpack.c.h.b16 %v3619
        %v3745 = vunpack.c.l.b16 %v3620
        %v3746 = vunpack.c.h.b16 %v3620
        %v3747 = vunpack.c.l.b16 %v3621
        %v3748 = vunpack.c.h.b16 %v3621
        %v3749 = vunpack.c.l.b16 %v3622
        %v3750 = vunpack.c.h.b16 %v3622
        %v3751 = vpack.c.b16 %v3689, %v3687
        %v3752 = vpack.c.b16 %v3690, %v3688
        %v3753 = vpack.c.b16 %v3693, %v3691
        %v3754 = vpack.c.b16 %v3694, %v3692
        %v3755 = vpack.c.b16 %v3697, %v3695
        %v3756 = vpack.c.b16 %v3698, %v3696
        %v3757 = vpack.c.b16 %v3701, %v3699
        %v3758 = vpack.c.b16 %v3702, %v3700
        %v3759 = vpack.c.b16 %v3705, %v3703
        %v3760 = vpack.c.b16 %v3706, %v3704
        %v3761 = vpack.c.b16 %v3709, %v3707
        %v3762 = vpack.c.b16 %v3710, %v3708
        %v3763 = vpack.c.b16 %v3713, %v3711
        %v3764 = vpack.c.b16 %v3714, %v3712
        %v3765 = vpack.c.b16 %v3717, %v3715
        %v3766 = vpack.c.b16 %v3718, %v3716
        %v3767 = vpack.c.b16 %v3721, %v3719
        %v3768 = vpack.c.b16 %v3722, %v3720
        %v3769 = vpack.c.b16 %v3725, %v3723
        %v3770 = vpack.c.b16 %v3726, %v3724
        %v3771 = vpack.c.b16 %v3729, %v3727
        %v3772 = vpack.c.b16 %v3730, %v3728
        %v3773 = vpack.c.b16 %v3733, %v3731
        %v3774 = vpack.c.b16 %v3734, %v3732
        %v3775 = vpack.c.b16 %v3737, %v3735
        %v3776 = vpack.c.b16 %v3738, %v3736
        %v3777 = vpack.c.b16 %v3741, %v3739
        %v3778 = vpack.c.b16 %v3742, %v3740
        %v3779 = vpack.c.b16 %v3745, %v3743
        %v3780 = vpack.c.b16 %v3746, %v3744
        %v3781 = vpack.c.b16 %v3749, %v3747
        %v3782 = vpack.c.b16 %v3750, %v3748
        %3815 = vmatprep.subr.bf16.mxu0 %v3752
        %3816 = vmatpush1.bf16.msra.mxu0 %v3751
        %3817 = vmatprep.subr.bf16.mxu0 %v3754
        %3818 = vmatpush1.bf16.msra.mxu0 %v3753
        %3819 = vmatprep.subr.bf16.mxu0 %v3756
        %3820 = vmatpush1.bf16.msra.mxu0 %v3755
        %3821 = vmatprep.subr.bf16.mxu0 %v3758
        %3822 = vmatpush1.bf16.msra.mxu0 %v3757
        %3823 = vmatprep.subr.bf16.mxu0 %v3760
        %3824 = vmatpush1.bf16.msra.mxu0 %v3759
        %3825 = vmatprep.subr.bf16.mxu0 %v3762
        %3826 = vmatpush1.bf16.msra.mxu0 %v3761
        %3827 = vmatprep.subr.bf16.mxu0 %v3764
        %3828 = vmatpush1.bf16.msra.mxu0 %v3763
        %3829 = vmatprep.subr.bf16.mxu0 %v3766
        %3830 = vmatpush1.bf16.msra.mxu0 %v3765
        %3831 = vmatprep.subr.bf16.mxu0 %v3768
        %3832 = vmatpush1.bf16.msra.mxu0 %v3767
        %3833 = vmatprep.subr.bf16.mxu0 %v3770
        %3834 = vmatpush1.bf16.msra.mxu0 %v3769
        %3835 = vmatprep.subr.bf16.mxu0 %v3772
        %3836 = vmatpush1.bf16.msra.mxu0 %v3771
        %3837 = vmatprep.subr.bf16.mxu0 %v3774
        %3838 = vmatpush1.bf16.msra.mxu0 %v3773
        %3839 = vmatprep.subr.bf16.mxu0 %v3776
        %3840 = vmatpush1.bf16.msra.mxu0 %v3775
        %3841 = vmatprep.subr.bf16.mxu0 %v3778
        %3842 = vmatpush1.bf16.msra.mxu0 %v3777
        %3843 = vmatprep.subr.bf16.mxu0 %v3780
        %3844 = vmatpush1.bf16.msra.mxu0 %v3779
        %3845 = vmatprep.subr.bf16.mxu0 %v3782
        %3846 = vmatpush1.bf16.msra.mxu0 %v3781
        %3847 = vmatprep.mubr.bf16.mxu0 %v3640
        %3848 = vmatmul.mubr.bf16.gmra.mrb[0].mxu0 %v3639
        %v3849 = vpop.f32.mrb[0].mxu0
        %v3850 = vadd.f32 0.0, %v3849
        %v3851 = vpop.f32.mrb[0].mxu0
        %v3852 = vadd.f32 0.0, %v3851
        %v3853 = vpop.f32.mrb[0].mxu0
        %v3854 = vadd.f32 0.0, %v3853
        %v3855 = vpop.f32.mrb[0].mxu0
        %v3856 = vadd.f32 0.0, %v3855
        %3857 = vmatprep.mubr.bf16.mxu0 %v3642
        %3858 = vmatmul.mubr.bf16.gmra.mrb[0].mxu0 %v3641
        %v3859 = vpop.f32.mrb[0].mxu0
        %v3860 = vadd.f32 0.0, %v3859
        %v3861 = vpop.f32.mrb[0].mxu0
        %v3862 = vadd.f32 0.0, %v3861
        %v3863 = vpop.f32.mrb[0].mxu0
        %v3864 = vadd.f32 0.0, %v3863
        %v3865 = vpop.f32.mrb[0].mxu0
        %v3866 = vadd.f32 0.0, %v3865
        %3867 = vmatprep.mubr.bf16.mxu0 %v3644
        %3868 = vmatmul.mubr.bf16.gmra.mrb[0].mxu0 %v3643
        %v3869 = vpop.f32.mrb[0].mxu0
        %v3870 = vadd.f32 0.0, %v3869
        %v3871 = vpop.f32.mrb[0].mxu0
        %v3872 = vadd.f32 0.0, %v3871
        %v3873 = vpop.f32.mrb[0].mxu0
        %v3874 = vadd.f32 0.0, %v3873
        %v3875 = vpop.f32.mrb[0].mxu0
        %v3876 = vadd.f32 0.0, %v3875
        %3877 = vmatprep.mubr.bf16.mxu0 %v3646
        %3878 = vmatmul.mubr.bf16.gmra.mrb[0].mxu0 %v3645
        %v3879 = vpop.f32.mrb[0].mxu0
        %v3880 = vadd.f32 0.0, %v3879
        %v3881 = vpop.f32.mrb[0].mxu0
        %v3882 = vadd.f32 0.0, %v3881
        %v3883 = vpop.f32.mrb[0].mxu0
        %v3884 = vadd.f32 0.0, %v3883
        %v3885 = vpop.f32.mrb[0].mxu0
        %v3886 = vadd.f32 0.0, %v3885
        %3887 = vdwg.mxu0
        %v3888 = vadd.f32 %v3518, %v3850
        %v3889 = vadd.f32 %v3519, %v3852
        %v3890 = vadd.f32 %v3520, %v3854
        %v3891 = vadd.f32 %v3521, %v3856
        %v3892 = vadd.f32 %v3522, %v3860
        %v3893 = vadd.f32 %v3523, %v3862
        %v3894 = vadd.f32 %v3524, %v3864
        %v3895 = vadd.f32 %v3525, %v3866
        %v3896 = vadd.f32 %v3526, %v3870
        %v3897 = vadd.f32 %v3527, %v3872
        %v3898 = vadd.f32 %v3528, %v3874
        %v3899 = vadd.f32 %v3529, %v3876
        %v3900 = vadd.f32 %v3530, %v3880
        %v3901 = vadd.f32 %v3531, %v3882
        %v3902 = vadd.f32 %v3532, %v3884
        %v3903 = vadd.f32 %v3533, %v3886
        %3904 = vst [vmem:[%s190] sm:$0xff] %v3888
        %3905 = vst [vmem:[%s190 + $0x8] sm:$0xff] %v3889
        %3906 = vst [vmem:[%s190 + $0x10] sm:$0xff] %v3890
        %3907 = vst [vmem:[%s190 + $0x18] sm:$0xff] %v3891
        %3908 = vst [vmem:[%s190 + $0x20] sm:$0xff] %v3892
        %3909 = vst [vmem:[%s190 + $0x28] sm:$0xff] %v3893
        %3910 = vst [vmem:[%s190 + $0x30] sm:$0xff] %v3894
        %3911 = vst [vmem:[%s190 + $0x38] sm:$0xff] %v3895
        %3912 = vst [vmem:[%s190 + $0x40] sm:$0xff] %v3896
        %3913 = vst [vmem:[%s190 + $0x48] sm:$0xff] %v3897
        %3914 = vst [vmem:[%s190 + $0x50] sm:$0xff] %v3898
        %3915 = vst [vmem:[%s190 + $0x58] sm:$0xff] %v3899
        %3916 = vst [vmem:[%s190 + $0x60] sm:$0xff] %v3900
        %3917 = vst [vmem:[%s190 + $0x68] sm:$0xff] %v3901
        %3918 = vst [vmem:[%s190 + $0x70] sm:$0xff] %v3902
        %3919 = vst [vmem:[%s190 + $0x78] sm:$0xff] %v3903
        %s3920 = sand.u32 %s115, 1
        %s3921 = scalar_lea.sflag [#allocation4], %s3920
        %s3922 = sand.u32 %s115, 1
        %s3923 = smul.addr %s3922, 128
        %s3924 = scalar_lea.vmem [#allocation3], %s3923
        // Predicated region
        $region37: #{forward.3} parent=35 // pred_check
          %p3925 = pneg %p125
        $region38: #{forward.3} parent=35 // pred_check_branch
          %3927 = sbr.rel (%p3925) target = $region40
        $region39: #{forward.3} parent=35 // pred_region
          %s3929 = ssub.s32 2048, 2048
          %3930 = vsyncadd %s3921, %s3929
          %s3931 = smul.addr %s18, 16
          %s3932 = smul.addr %s3931, 128
          %s3933 = scalar_lea.hbm %s4, %s3932
          %s3934 = sshll.u32 %s3924, 4
          %s3935 = int_to_ptr.vmem [resolvable:$true] %s3934
          %3940 = dma.vmem_to_hbm [thread:$0]  %s3935, 2048, %s3933, %s3921, 256, 256, 16
        $region40: #{forward.3} parent=35 // pred_fallthru
          _
      $region36: #{forward.3} parent=5 // pred_fallthru
        _
      %p3941 = scmp.le.s32.totalorder 2, %s13
      // Predicated region
      $region41: #{forward.3} parent=5 // pred_check
        %p3942 = pneg %p3941
      $region42: #{forward.3} parent=5 // pred_check_branch
        %3944 = sbr.rel (%p3942) target = $region44
      $region43: #{forward.3} parent=5 // pred_region
        %s3945 = ssub.s32 %s13, 2
        // Predicated region
        $region45: #{forward.3} parent=43 // pred_check
          %p3946 = pneg %p131
        $region46: #{forward.3} parent=43 // pred_check_branch
          %3948 = sbr.rel (%p3946) target = $region48
        $region47: #{forward.3} parent=43 // pred_region
          %s3949 = sand.u32 %s116, 1
          %s3950 = scalar_lea.sflag [#allocation4], %s3949
          %s3951 = sand.u32 %s116, 1
          %s3952 = smul.addr %s3951, 128
          %s3953 = scalar_lea.vmem [#allocation3], %s3952
          %3954 = dma.done %s3950, 2048
        $region48: #{forward.3} parent=43 // pred_fallthru
          _
      $region44: #{forward.3} parent=5 // pred_fallthru
        _
    $region6: #{forward.3} parent=1 // loop_footer
      %s17 = sadd.s32 1, %s13
    $region7: #{forward.3} parent=1 // loop_footer_branch
      %12 = sbr.rel target = $region3
    $region8: #{forward.3} parent=1 // loop_exit
      _
    %3955 = vsyncpa [#allocation4], 1
    %s3956 = scalar_lea.sflag [#allocation4], 1
    %3957 = vsyncpa %s3956, 1

</llo_original>
